<compile_context>
chip_gen: v6e
topology: v6e:2x2x1
jax: 0.10.0
libtpu: 0.0.40
codegen_flags: <defaults>
</compile_context>

<pallas_src>
import functools

import jax
import jax.numpy as jnp
from jax.experimental import pallas as pl


# --------------------------------------------------------------------------
# Fused Pallas kernel: multi-layer LSTM (layer-major) + final Linear, in VMEM
# --------------------------------------------------------------------------
def _fused_forward_kernel(x_ref, *refs, num_layers, hidden):
    """refs layout (inputs, then outputs):
         [w_ih_t_0, w_hh_t_0, b_0, ..., w_ih_t_{L-1}, w_hh_t_{L-1}, b_{L-1},
          fc_w_t, fc_b,                       # (H, O), (1, O)
          h0, c0,                             # (L, B, H) each
          out, hN, cN]                        # (B*T, O), (L, B, H) x2
       Per-layer weights are pre-transposed: w_ih_t_l is (D_l, 4H),
       w_hh_t_l is (H, 4H), b_l = (b_ih + b_hh) as (1, 4H).
       Gate order along the 4H axis follows PyTorch: i, f, g, o.
    """
    L, H = num_layers, hidden
    B, T, _ = x_ref.shape

    w_ih_refs = [refs[3 * l] for l in range(L)]
    w_hh_refs = [refs[3 * l + 1] for l in range(L)]
    b_refs = [refs[3 * l + 2] for l in range(L)]
    fc_w_ref = refs[3 * L]
    fc_b_ref = refs[3 * L + 1]
    h0_ref = refs[3 * L + 2]
    c0_ref = refs[3 * L + 3]
    out_ref = refs[3 * L + 4]
    hN_ref = refs[3 * L + 5]
    cN_ref = refs[3 * L + 6]

    # Lane mask selecting the g-gate block (tanh) vs i/f/o (sigmoid) on the
    # packed (B, 4H) gate vreg.  Built once, reused by every (t, l) step.
    lane = jax.lax.broadcasted_iota(jnp.int32, (B, 4 * H), 1)
    g_mask = (lane >= 2 * H) & (lane < 3 * H)

    def gate_act(gates):
        # sigmoid(x) = 0.5 * (tanh(x / 2) + 1): one EUP tanh pass over the
        # whole packed gate vreg instead of tanh + sigmoid.
        pre = jnp.where(g_mask, gates, 0.5 * gates)
        t_all = jnp.tanh(pre)
        return jnp.where(g_mask, t_all, 0.5 * (t_all + 1.0))

    seq = x_ref[...]                                  # (B, T, D_0) batch_first
    h_fin = []
    c_fin = []
    for l in range(L):                                # static layer loop (layer-major)
        d_l = seq.shape[-1]
        # Batched non-recurrent input projection with both biases folded in:
        # one well-shaped (B*T, D_l) @ (D_l, 4H) MXU push per layer.
        proj = (jnp.dot(seq.reshape(B * T, d_l), w_ih_refs[l][...],
                        preferred_element_type=jnp.float32)
                + b_refs[l][...]).reshape(B, T, 4 * H)

        w_hh = w_hh_refs[l][...]                      # (H, 4H), reused T times
        h = h0_ref[l]                                 # (B, H) carries in vregs
        c = c0_ref[l]
        outs = []
        for t in range(T):                            # serial recurrent loop
            gates = proj[:, t, :] + jnp.dot(h, w_hh,
                                            preferred_element_type=jnp.float32)
            act = gate_act(gates)
            i_g = act[:, 0 * H:1 * H]
            f_g = act[:, 1 * H:2 * H]
            g_g = act[:, 2 * H:3 * H]
            o_g = act[:, 3 * H:4 * H]
            c = f_g * c + i_g * g_g
            h = o_g * jnp.tanh(c)
            outs.append(h)

        seq = jnp.stack(outs, axis=1)                 # (B, T, H): next layer / FC input
        h_fin.append(h)
        c_fin.append(c)

    # Final FC: one (B*T, H) @ (H, O) matmul over the batch-major slab
    # (row b*T + t matches PyTorch's lstmOutput.reshape(B*T, -1)) and a
    # single output store.
    out_ref[...] = (jnp.dot(seq.reshape(B * T, H), fc_w_ref[...],
                            preferred_element_type=jnp.float32)
                    + fc_b_ref[...])

    for l in range(L):
        hN_ref[l] = h_fin[l]
        cN_ref[l] = c_fin[l]


# --------------------------------------------------------------------------
# Pallas wrapper
# --------------------------------------------------------------------------
def fused_forward_pallas(x, lstm_w_ih_t, lstm_w_hh_t, lstm_b, fc_w_t, fc_b, h0, c0):
    """x: (B, T, D) batch_first.  Returns (out (B*T, O), h_N (L,B,H), c_N (L,B,H))."""
    B, T, _ = x.shape
    L = len(lstm_w_ih_t)
    H = h0.shape[-1]
    O = fc_w_t.shape[-1]

    kernel = functools.partial(_fused_forward_kernel, num_layers=L, hidden=H)

    operands = [x]
    in_specs = [pl.BlockSpec(x.shape, lambda: (0, 0, 0))]
    for w_ih_t, w_hh_t, b in zip(lstm_w_ih_t, lstm_w_hh_t, lstm_b):
        operands += [w_ih_t, w_hh_t, b]
        in_specs += [pl.BlockSpec(w_ih_t.shape, lambda: (0, 0)),
                     pl.BlockSpec(w_hh_t.shape, lambda: (0, 0)),
                     pl.BlockSpec(b.shape, lambda: (0, 0))]
    operands += [fc_w_t, fc_b, h0, c0]
    in_specs += [pl.BlockSpec(fc_w_t.shape, lambda: (0, 0)),
                 pl.BlockSpec(fc_b.shape, lambda: (0, 0)),
                 pl.BlockSpec(h0.shape, lambda: (0, 0, 0)),
                 pl.BlockSpec(c0.shape, lambda: (0, 0, 0))]

    out, hN, cN = pl.pallas_call(
        kernel,
        out_shape=(jax.ShapeDtypeStruct((B * T, O), jnp.float32),
                   jax.ShapeDtypeStruct((L, B, H), jnp.float32),
                   jax.ShapeDtypeStruct((L, B, H), jnp.float32)),
        in_specs=in_specs,
        out_specs=(pl.BlockSpec((B * T, O), lambda: (0, 0)),
                   pl.BlockSpec((L, B, H), lambda: (0, 0, 0)),
                   pl.BlockSpec((L, B, H), lambda: (0, 0, 0))),
    )(*operands)
    return out, hN, cN


# --------------------------------------------------------------------------
# Model (parameter init mirrors nn.LSTM / nn.Linear shapes)
# --------------------------------------------------------------------------
class LatentMotionModelPallas:
    def __init__(self, dimensionArgs, motionModelLSTMSize, key):
        self.input_dim = dimensionArgs[3]
        self.out_dim = dimensionArgs[4]
        self.num_layers = motionModelLSTMSize[0]
        self.hidden = motionModelLSTMSize[1]

        H = self.hidden
        bound = 1.0 / jnp.sqrt(jnp.float32(H))
        keys = jax.random.split(key, 4 * self.num_layers + 2)

        self.lstm_params = []     # raw PyTorch-shaped params (for reference fn)
        self.lstm_w_ih_t = []     # W_ih^T            -> (D_l, 4H)
        self.lstm_w_hh_t = []     # W_hh^T            -> (H, 4H)
        self.lstm_b = []          # b_ih + b_hh       -> (1, 4H)
        for layer in range(self.num_layers):
            in_l = self.input_dim if layer == 0 else H
            k0, k1, k2, k3 = keys[4 * layer:4 * layer + 4]
            w_ih = jax.random.uniform(k0, (4 * H, in_l), jnp.float32, -bound, bound)
            w_hh = jax.random.uniform(k1, (4 * H, H), jnp.float32, -bound, bound)
            b_ih = jax.random.uniform(k2, (4 * H,), jnp.float32, -bound, bound)
            b_hh = jax.random.uniform(k3, (4 * H,), jnp.float32, -bound, bound)
            self.lstm_params.append((w_ih, w_hh, b_ih, b_hh))
            self.lstm_w_ih_t.append(w_ih.T)
            self.lstm_w_hh_t.append(w_hh.T)
            self.lstm_b.append((b_ih + b_hh).reshape(1, 4 * H))

        kfw, kfb = keys[-2], keys[-1]
        self.fc_w = jax.random.uniform(kfw, (self.out_dim, H), jnp.float32, -bound, bound)
        self.fc_b = jax.random.uniform(kfb, (self.out_dim,), jnp.float32, -bound, bound)
        self.fc_w_t = self.fc_w.T                 # (H, O)
        self.fc_b2 = self.fc_b.reshape(1, -1)     # (1, O)

    def __call__(self, latentData, sequenceLength, batchSize, prevLSTMStates=None):
        B, T, H, L = batchSize, sequenceLength, self.hidden, self.num_layers
        x = latentData.reshape(B, T, -1).astype(jnp.float32)   # batch_first, kept as-is
        if prevLSTMStates is None:
            h0 = jnp.zeros((L, B, H), jnp.float32)
            c0 = jnp.zeros((L, B, H), jnp.float32)
        else:
            h0 = jnp.asarray(prevLSTMStates[0], jnp.float32)
            c0 = jnp.asarray(prevLSTMStates[1], jnp.float32)

        out, hN, cN = fused_forward_pallas(
            x, self.lstm_w_ih_t, self.lstm_w_hh_t, self.lstm_b,
            self.fc_w_t, self.fc_b2, h0, c0)
        # TODO(synk): only shard a batch grid axis across v7x's two TensorCores
        # if B grows to >= ~16; at B=2 the per-step + sync overhead exceeds the work.
        return out, (hN, cN)


# --------------------------------------------------------------------------
# Pure-JAX reference (for correctness check)
# --------------------------------------------------------------------------
def reference_forward(model, latentData, T, B, prevLSTMStates=None):
    H = model.hidden
    x = latentData.reshape(B, T, -1).astype(jnp.float32)
    h_finals, c_finals = [], []
    for layer, (w_ih, w_hh, b_ih, b_hh) in enumerate(model.lstm_params):
        if prevLSTMStates is None:
            h = jnp.zeros((B, H), jnp.float32)
            c = jnp.zeros((B, H), jnp.float32)
        else:
            h = prevLSTMStates[0][layer]
            c = prevLSTMStates[1][layer]
        outs = []
        for t in range(T):
            gates = x[:, t, :] @ w_ih.T + h @ w_hh.T + b_ih + b_hh
            i = jax.nn.sigmoid(gates[:, 0 * H:1 * H])
            f = jax.nn.sigmoid(gates[:, 1 * H:2 * H])
            g = jnp.tanh(gates[:, 2 * H:3 * H])
            o = jax.nn.sigmoid(gates[:, 3 * H:4 * H])
            c = f * c + i * g
            h = o * jnp.tanh(c)
            outs.append(h)
        x = jnp.stack(outs, axis=1)          # (B, T, H)
        h_finals.append(h)
        c_finals.append(c)
    out = x.reshape(B * T, H) @ model.fc_w.T + model.fc_b
    return out, (jnp.stack(h_finals), jnp.stack(c_finals))


# --------------------------------------------------------------------------
if __name__ == "__main__":
    key = jax.random.PRNGKey(0)
    k_param, k_data = jax.random.split(key)

    # dimensionArgs[3] = inputLatentDim, dimensionArgs[4] = outStateDim
    dimensionArgs = [0, 0, 0, 16, 8]
    motionModelLSTMSize = [2, 32]          # (num_layers, hidden_size)
    batchSize, sequenceLength = 2, 8

    model = LatentMotionModelPallas(dimensionArgs, motionModelLSTMSize, k_param)

    latentData = jax.random.normal(
        k_data, (batchSize, sequenceLength, dimensionArgs[3]), jnp.float32)

    output, (h_n, c_n) = model(latentData, sequenceLength, batchSize)
    output = jax.block_until_ready(output)
    h_n = jax.block_until_ready(h_n)
    c_n = jax.block_until_ready(c_n)

    # correctness check against pure-JAX reference (single-tanh sigmoid rewrite
    # changes numerics at ~1e-6; keep the 1e-4 tolerance)
    ref_out, (ref_h, ref_c) = reference_forward(
        model, latentData, sequenceLength, batchSize)
    assert output.shape == (batchSize * sequenceLength, dimensionArgs[4])
    assert h_n.shape == (motionModelLSTMSize[0], batchSize, motionModelLSTMSize[1])
    assert jnp.allclose(output, ref_out, atol=1e-4, rtol=1e-4)
    assert jnp.allclose(h_n, ref_h, atol=1e-4, rtol=1e-4)
    assert jnp.allclose(c_n, ref_c, atol=1e-4, rtol=1e-4)

    # also exercise the prevLSTMStates path once (same semantics as PyTorch)
    out2, states2 = model(latentData, sequenceLength, batchSize,
                          prevLSTMStates=(h_n, c_n))
    out2 = jax.block_until_ready(out2)
    ref_out2, ref_states2 = reference_forward(
        model, latentData, sequenceLength, batchSize, prevLSTMStates=(ref_h, ref_c))
    assert jnp.allclose(out2, ref_out2, atol=1e-4, rtol=1e-4)
    assert jnp.allclose(states2[0], ref_states2[0], atol=1e-4, rtol=1e-4)
    assert jnp.allclose(states2[1], ref_states2[1], atol=1e-4, rtol=1e-4)

    print("KERNEL_OK")
</pallas_src>

<mosaic_0001>
module attributes {stable_mosaic.version = 11 : i64} {
  func.func @_fused_forward_kernel(%arg0: memref<2x8x16xf32, #tpu.memory_space<vmem>>, %arg1: memref<16x128xf32, #tpu.memory_space<vmem>>, %arg2: memref<32x128xf32, #tpu.memory_space<vmem>>, %arg3: memref<1x128xf32, #tpu.memory_space<vmem>>, %arg4: memref<32x128xf32, #tpu.memory_space<vmem>>, %arg5: memref<32x128xf32, #tpu.memory_space<vmem>>, %arg6: memref<1x128xf32, #tpu.memory_space<vmem>>, %arg7: memref<32x8xf32, #tpu.memory_space<vmem>>, %arg8: memref<1x8xf32, #tpu.memory_space<vmem>>, %arg9: memref<2x2x32xf32, #tpu.memory_space<vmem>>, %arg10: memref<2x2x32xf32, #tpu.memory_space<vmem>>, %arg11: memref<16x8xf32, #tpu.memory_space<vmem>>, %arg12: memref<2x2x32xf32, #tpu.memory_space<vmem>>, %arg13: memref<2x2x32xf32, #tpu.memory_space<vmem>>) attributes {dimension_semantics = [], scalar_prefetch = 0 : i64, scratch_operands = 0 : i64, tpu.core_type = #tpu.core_type<tc>} {
    %0 = tpu.iota {dimensions = array<i32: 1>} : vector<2x128xi32>
    %c64_i32 = arith.constant 64 : i32
    %1 = vector.broadcast %c64_i32 : i32 to vector<2x128xi32>
    %2 = arith.cmpi sge, %0, %1 : vector<2x128xi32>
    %c96_i32 = arith.constant 96 : i32
    %3 = vector.broadcast %c96_i32 : i32 to vector<2x128xi32>
    %4 = arith.cmpi slt, %0, %3 : vector<2x128xi32>
    %5 = arith.andi %2, %4 : vector<2x128xi1>
    %c0 = arith.constant 0 : index
    %c0_0 = arith.constant 0 : index
    %c0_1 = arith.constant 0 : index
    %6 = vector.load %arg0[%c0, %c0_0, %c0_1] : memref<2x8x16xf32, #tpu.memory_space<vmem>>, vector<2x8x16xf32>
    %7 = vector.shape_cast %6 : vector<2x8x16xf32> to vector<16x16xf32>
    %c0_2 = arith.constant 0 : index
    %c0_3 = arith.constant 0 : index
    %8 = vector.load %arg1[%c0_2, %c0_3] : memref<16x128xf32, #tpu.memory_space<vmem>>, vector<16x128xf32>
    %cst = arith.constant dense<0.000000e+00> : vector<16x128xf32>
    %9 = tpu.matmul %7, %8, %cst {dimension_numbers = #tpu.dot_dimension_numbers<[1], [0], [0], [1], [0, 0, 1, 1], [], []>} : vector<16x16xf32>, vector<16x128xf32>, vector<16x128xf32> -> vector<16x128xf32>
    %c0_4 = arith.constant 0 : index
    %c0_5 = arith.constant 0 : index
    %10 = vector.load %arg3[%c0_4, %c0_5] : memref<1x128xf32, #tpu.memory_space<vmem>>, vector<1x128xf32>
    %11 = vector.broadcast %10 : vector<1x128xf32> to vector<16x128xf32>
    %12 = arith.addf %9, %11 : vector<16x128xf32>
    %13 = vector.shape_cast %12 : vector<16x128xf32> to vector<2x8x128xf32>
    %c0_6 = arith.constant 0 : index
    %c0_7 = arith.constant 0 : index
    %14 = vector.load %arg2[%c0_6, %c0_7] : memref<32x128xf32, #tpu.memory_space<vmem>>, vector<32x128xf32>
    %c0_8 = arith.constant 0 : index
    %c0_9 = arith.constant 0 : index
    %c0_10 = arith.constant 0 : index
    %15 = vector.load %arg9[%c0_8, %c0_9, %c0_10] : memref<2x2x32xf32, #tpu.memory_space<vmem>>, vector<1x2x32xf32>
    %16 = vector.shape_cast %15 : vector<1x2x32xf32> to vector<2x32xf32>
    %c0_11 = arith.constant 0 : index
    %c0_12 = arith.constant 0 : index
    %c0_13 = arith.constant 0 : index
    %17 = vector.load %arg10[%c0_11, %c0_12, %c0_13] : memref<2x2x32xf32, #tpu.memory_space<vmem>>, vector<1x2x32xf32>
    %18 = vector.shape_cast %17 : vector<1x2x32xf32> to vector<2x32xf32>
    %19 = vector.extract_strided_slice %13 {offsets = [0, 0, 0], sizes = [2, 1, 128], strides = [1, 1, 1]} : vector<2x8x128xf32> to vector<2x1x128xf32>
    %20 = vector.shape_cast %19 : vector<2x1x128xf32> to vector<2x128xf32>
    %cst_14 = arith.constant dense<0.000000e+00> : vector<2x128xf32>
    %21 = tpu.matmul %16, %14, %cst_14 {dimension_numbers = #tpu.dot_dimension_numbers<[1], [0], [0], [1], [0, 0, 1, 1], [], []>} : vector<2x32xf32>, vector<32x128xf32>, vector<2x128xf32> -> vector<2x128xf32>
    %22 = arith.addf %20, %21 : vector<2x128xf32>
    %cst_15 = arith.constant 5.000000e-01 : f32
    %23 = vector.broadcast %cst_15 : f32 to vector<2x128xf32>
    %24 = arith.mulf %23, %22 : vector<2x128xf32>
    %25 = arith.select %5, %22, %24 : vector<2x128xi1>, vector<2x128xf32>
    %26 = math.tanh %25 : vector<2x128xf32>
    %cst_16 = arith.constant 1.000000e+00 : f32
    %27 = vector.broadcast %cst_16 : f32 to vector<2x128xf32>
    %28 = arith.addf %26, %27 : vector<2x128xf32>
    %cst_17 = arith.constant 5.000000e-01 : f32
    %29 = vector.broadcast %cst_17 : f32 to vector<2x128xf32>
    %30 = arith.mulf %29, %28 : vector<2x128xf32>
    %31 = arith.select %5, %26, %30 : vector<2x128xi1>, vector<2x128xf32>
    %32 = vector.extract_strided_slice %31 {offsets = [0, 0], sizes = [2, 32], strides = [1, 1]} : vector<2x128xf32> to vector<2x32xf32>
    %33 = vector.extract_strided_slice %31 {offsets = [0, 32], sizes = [2, 32], strides = [1, 1]} : vector<2x128xf32> to vector<2x32xf32>
    %34 = vector.extract_strided_slice %31 {offsets = [0, 64], sizes = [2, 32], strides = [1, 1]} : vector<2x128xf32> to vector<2x32xf32>
    %35 = vector.extract_strided_slice %31 {offsets = [0, 96], sizes = [2, 32], strides = [1, 1]} : vector<2x128xf32> to vector<2x32xf32>
    %36 = arith.mulf %33, %18 : vector<2x32xf32>
    %37 = arith.mulf %32, %34 : vector<2x32xf32>
    %38 = arith.addf %36, %37 : vector<2x32xf32>
    %39 = math.tanh %38 : vector<2x32xf32>
    %40 = arith.mulf %35, %39 : vector<2x32xf32>
    %41 = vector.extract_strided_slice %13 {offsets = [0, 1, 0], sizes = [2, 1, 128], strides = [1, 1, 1]} : vector<2x8x128xf32> to vector<2x1x128xf32>
    %42 = vector.shape_cast %41 : vector<2x1x128xf32> to vector<2x128xf32>
    %cst_18 = arith.constant dense<0.000000e+00> : vector<2x128xf32>
    %43 = tpu.matmul %40, %14, %cst_18 {dimension_numbers = #tpu.dot_dimension_numbers<[1], [0], [0], [1], [0, 0, 1, 1], [], []>} : vector<2x32xf32>, vector<32x128xf32>, vector<2x128xf32> -> vector<2x128xf32>
    %44 = arith.addf %42, %43 : vector<2x128xf32>
    %cst_19 = arith.constant 5.000000e-01 : f32
    %45 = vector.broadcast %cst_19 : f32 to vector<2x128xf32>
    %46 = arith.mulf %45, %44 : vector<2x128xf32>
    %47 = arith.select %5, %44, %46 : vector<2x128xi1>, vector<2x128xf32>
    %48 = math.tanh %47 : vector<2x128xf32>
    %cst_20 = arith.constant 1.000000e+00 : f32
    %49 = vector.broadcast %cst_20 : f32 to vector<2x128xf32>
    %50 = arith.addf %48, %49 : vector<2x128xf32>
    %cst_21 = arith.constant 5.000000e-01 : f32
    %51 = vector.broadcast %cst_21 : f32 to vector<2x128xf32>
    %52 = arith.mulf %51, %50 : vector<2x128xf32>
    %53 = arith.select %5, %48, %52 : vector<2x128xi1>, vector<2x128xf32>
    %54 = vector.extract_strided_slice %53 {offsets = [0, 0], sizes = [2, 32], strides = [1, 1]} : vector<2x128xf32> to vector<2x32xf32>
    %55 = vector.extract_strided_slice %53 {offsets = [0, 32], sizes = [2, 32], strides = [1, 1]} : vector<2x128xf32> to vector<2x32xf32>
    %56 = vector.extract_strided_slice %53 {offsets = [0, 64], sizes = [2, 32], strides = [1, 1]} : vector<2x128xf32> to vector<2x32xf32>
    %57 = vector.extract_strided_slice %53 {offsets = [0, 96], sizes = [2, 32], strides = [1, 1]} : vector<2x128xf32> to vector<2x32xf32>
    %58 = arith.mulf %55, %38 : vector<2x32xf32>
    %59 = arith.mulf %54, %56 : vector<2x32xf32>
    %60 = arith.addf %58, %59 : vector<2x32xf32>
    %61 = math.tanh %60 : vector<2x32xf32>
    %62 = arith.mulf %57, %61 : vector<2x32xf32>
    %63 = vector.extract_strided_slice %13 {offsets = [0, 2, 0], sizes = [2, 1, 128], strides = [1, 1, 1]} : vector<2x8x128xf32> to vector<2x1x128xf32>
    %64 = vector.shape_cast %63 : vector<2x1x128xf32> to vector<2x128xf32>
    %cst_22 = arith.constant dense<0.000000e+00> : vector<2x128xf32>
    %65 = tpu.matmul %62, %14, %cst_22 {dimension_numbers = #tpu.dot_dimension_numbers<[1], [0], [0], [1], [0, 0, 1, 1], [], []>} : vector<2x32xf32>, vector<32x128xf32>, vector<2x128xf32> -> vector<2x128xf32>
    %66 = arith.addf %64, %65 : vector<2x128xf32>
    %cst_23 = arith.constant 5.000000e-01 : f32
    %67 = vector.broadcast %cst_23 : f32 to vector<2x128xf32>
    %68 = arith.mulf %67, %66 : vector<2x128xf32>
    %69 = arith.select %5, %66, %68 : vector<2x128xi1>, vector<2x128xf32>
    %70 = math.tanh %69 : vector<2x128xf32>
    %cst_24 = arith.constant 1.000000e+00 : f32
    %71 = vector.broadcast %cst_24 : f32 to vector<2x128xf32>
    %72 = arith.addf %70, %71 : vector<2x128xf32>
    %cst_25 = arith.constant 5.000000e-01 : f32
    %73 = vector.broadcast %cst_25 : f32 to vector<2x128xf32>
    %74 = arith.mulf %73, %72 : vector<2x128xf32>
    %75 = arith.select %5, %70, %74 : vector<2x128xi1>, vector<2x128xf32>
    %76 = vector.extract_strided_slice %75 {offsets = [0, 0], sizes = [2, 32], strides = [1, 1]} : vector<2x128xf32> to vector<2x32xf32>
    %77 = vector.extract_strided_slice %75 {offsets = [0, 32], sizes = [2, 32], strides = [1, 1]} : vector<2x128xf32> to vector<2x32xf32>
    %78 = vector.extract_strided_slice %75 {offsets = [0, 64], sizes = [2, 32], strides = [1, 1]} : vector<2x128xf32> to vector<2x32xf32>
    %79 = vector.extract_strided_slice %75 {offsets = [0, 96], sizes = [2, 32], strides = [1, 1]} : vector<2x128xf32> to vector<2x32xf32>
    %80 = arith.mulf %77, %60 : vector<2x32xf32>
    %81 = arith.mulf %76, %78 : vector<2x32xf32>
    %82 = arith.addf %80, %81 : vector<2x32xf32>
    %83 = math.tanh %82 : vector<2x32xf32>
    %84 = arith.mulf %79, %83 : vector<2x32xf32>
    %85 = vector.extract_strided_slice %13 {offsets = [0, 3, 0], sizes = [2, 1, 128], strides = [1, 1, 1]} : vector<2x8x128xf32> to vector<2x1x128xf32>
    %86 = vector.shape_cast %85 : vector<2x1x128xf32> to vector<2x128xf32>
    %cst_26 = arith.constant dense<0.000000e+00> : vector<2x128xf32>
    %87 = tpu.matmul %84, %14, %cst_26 {dimension_numbers = #tpu.dot_dimension_numbers<[1], [0], [0], [1], [0, 0, 1, 1], [], []>} : vector<2x32xf32>, vector<32x128xf32>, vector<2x128xf32> -> vector<2x128xf32>
    %88 = arith.addf %86, %87 : vector<2x128xf32>
    %cst_27 = arith.constant 5.000000e-01 : f32
    %89 = vector.broadcast %cst_27 : f32 to vector<2x128xf32>
    %90 = arith.mulf %89, %88 : vector<2x128xf32>
    %91 = arith.select %5, %88, %90 : vector<2x128xi1>, vector<2x128xf32>
    %92 = math.tanh %91 : vector<2x128xf32>
    %cst_28 = arith.constant 1.000000e+00 : f32
    %93 = vector.broadcast %cst_28 : f32 to vector<2x128xf32>
    %94 = arith.addf %92, %93 : vector<2x128xf32>
    %cst_29 = arith.constant 5.000000e-01 : f32
    %95 = vector.broadcast %cst_29 : f32 to vector<2x128xf32>
    %96 = arith.mulf %95, %94 : vector<2x128xf32>
    %97 = arith.select %5, %92, %96 : vector<2x128xi1>, vector<2x128xf32>
    %98 = vector.extract_strided_slice %97 {offsets = [0, 0], sizes = [2, 32], strides = [1, 1]} : vector<2x128xf32> to vector<2x32xf32>
    %99 = vector.extract_strided_slice %97 {offsets = [0, 32], sizes = [2, 32], strides = [1, 1]} : vector<2x128xf32> to vector<2x32xf32>
    %100 = vector.extract_strided_slice %97 {offsets = [0, 64], sizes = [2, 32], strides = [1, 1]} : vector<2x128xf32> to vector<2x32xf32>
    %101 = vector.extract_strided_slice %97 {offsets = [0, 96], sizes = [2, 32], strides = [1, 1]} : vector<2x128xf32> to vector<2x32xf32>
    %102 = arith.mulf %99, %82 : vector<2x32xf32>
    %103 = arith.mulf %98, %100 : vector<2x32xf32>
    %104 = arith.addf %102, %103 : vector<2x32xf32>
    %105 = math.tanh %104 : vector<2x32xf32>
    %106 = arith.mulf %101, %105 : vector<2x32xf32>
    %107 = vector.extract_strided_slice %13 {offsets = [0, 4, 0], sizes = [2, 1, 128], strides = [1, 1, 1]} : vector<2x8x128xf32> to vector<2x1x128xf32>
    %108 = vector.shape_cast %107 : vector<2x1x128xf32> to vector<2x128xf32>
    %cst_30 = arith.constant dense<0.000000e+00> : vector<2x128xf32>
    %109 = tpu.matmul %106, %14, %cst_30 {dimension_numbers = #tpu.dot_dimension_numbers<[1], [0], [0], [1], [0, 0, 1, 1], [], []>} : vector<2x32xf32>, vector<32x128xf32>, vector<2x128xf32> -> vector<2x128xf32>
    %110 = arith.addf %108, %109 : vector<2x128xf32>
    %cst_31 = arith.constant 5.000000e-01 : f32
    %111 = vector.broadcast %cst_31 : f32 to vector<2x128xf32>
    %112 = arith.mulf %111, %110 : vector<2x128xf32>
    %113 = arith.select %5, %110, %112 : vector<2x128xi1>, vector<2x128xf32>
    %114 = math.tanh %113 : vector<2x128xf32>
    %cst_32 = arith.constant 1.000000e+00 : f32
    %115 = vector.broadcast %cst_32 : f32 to vector<2x128xf32>
    %116 = arith.addf %114, %115 : vector<2x128xf32>
    %cst_33 = arith.constant 5.000000e-01 : f32
    %117 = vector.broadcast %cst_33 : f32 to vector<2x128xf32>
    %118 = arith.mulf %117, %116 : vector<2x128xf32>
    %119 = arith.select %5, %114, %118 : vector<2x128xi1>, vector<2x128xf32>
    %120 = vector.extract_strided_slice %119 {offsets = [0, 0], sizes = [2, 32], strides = [1, 1]} : vector<2x128xf32> to vector<2x32xf32>
    %121 = vector.extract_strided_slice %119 {offsets = [0, 32], sizes = [2, 32], strides = [1, 1]} : vector<2x128xf32> to vector<2x32xf32>
    %122 = vector.extract_strided_slice %119 {offsets = [0, 64], sizes = [2, 32], strides = [1, 1]} : vector<2x128xf32> to vector<2x32xf32>
    %123 = vector.extract_strided_slice %119 {offsets = [0, 96], sizes = [2, 32], strides = [1, 1]} : vector<2x128xf32> to vector<2x32xf32>
    %124 = arith.mulf %121, %104 : vector<2x32xf32>
    %125 = arith.mulf %120, %122 : vector<2x32xf32>
    %126 = arith.addf %124, %125 : vector<2x32xf32>
    %127 = math.tanh %126 : vector<2x32xf32>
    %128 = arith.mulf %123, %127 : vector<2x32xf32>
    %129 = vector.extract_strided_slice %13 {offsets = [0, 5, 0], sizes = [2, 1, 128], strides = [1, 1, 1]} : vector<2x8x128xf32> to vector<2x1x128xf32>
    %130 = vector.shape_cast %129 : vector<2x1x128xf32> to vector<2x128xf32>
    %cst_34 = arith.constant dense<0.000000e+00> : vector<2x128xf32>
    %131 = tpu.matmul %128, %14, %cst_34 {dimension_numbers = #tpu.dot_dimension_numbers<[1], [0], [0], [1], [0, 0, 1, 1], [], []>} : vector<2x32xf32>, vector<32x128xf32>, vector<2x128xf32> -> vector<2x128xf32>
    %132 = arith.addf %130, %131 : vector<2x128xf32>
    %cst_35 = arith.constant 5.000000e-01 : f32
    %133 = vector.broadcast %cst_35 : f32 to vector<2x128xf32>
    %134 = arith.mulf %133, %132 : vector<2x128xf32>
    %135 = arith.select %5, %132, %134 : vector<2x128xi1>, vector<2x128xf32>
    %136 = math.tanh %135 : vector<2x128xf32>
    %cst_36 = arith.constant 1.000000e+00 : f32
    %137 = vector.broadcast %cst_36 : f32 to vector<2x128xf32>
    %138 = arith.addf %136, %137 : vector<2x128xf32>
    %cst_37 = arith.constant 5.000000e-01 : f32
    %139 = vector.broadcast %cst_37 : f32 to vector<2x128xf32>
    %140 = arith.mulf %139, %138 : vector<2x128xf32>
    %141 = arith.select %5, %136, %140 : vector<2x128xi1>, vector<2x128xf32>
    %142 = vector.extract_strided_slice %141 {offsets = [0, 0], sizes = [2, 32], strides = [1, 1]} : vector<2x128xf32> to vector<2x32xf32>
    %143 = vector.extract_strided_slice %141 {offsets = [0, 32], sizes = [2, 32], strides = [1, 1]} : vector<2x128xf32> to vector<2x32xf32>
    %144 = vector.extract_strided_slice %141 {offsets = [0, 64], sizes = [2, 32], strides = [1, 1]} : vector<2x128xf32> to vector<2x32xf32>
    %145 = vector.extract_strided_slice %141 {offsets = [0, 96], sizes = [2, 32], strides = [1, 1]} : vector<2x128xf32> to vector<2x32xf32>
    %146 = arith.mulf %143, %126 : vector<2x32xf32>
    %147 = arith.mulf %142, %144 : vector<2x32xf32>
    %148 = arith.addf %146, %147 : vector<2x32xf32>
    %149 = math.tanh %148 : vector<2x32xf32>
    %150 = arith.mulf %145, %149 : vector<2x32xf32>
    %151 = vector.extract_strided_slice %13 {offsets = [0, 6, 0], sizes = [2, 1, 128], strides = [1, 1, 1]} : vector<2x8x128xf32> to vector<2x1x128xf32>
    %152 = vector.shape_cast %151 : vector<2x1x128xf32> to vector<2x128xf32>
    %cst_38 = arith.constant dense<0.000000e+00> : vector<2x128xf32>
    %153 = tpu.matmul %150, %14, %cst_38 {dimension_numbers = #tpu.dot_dimension_numbers<[1], [0], [0], [1], [0, 0, 1, 1], [], []>} : vector<2x32xf32>, vector<32x128xf32>, vector<2x128xf32> -> vector<2x128xf32>
    %154 = arith.addf %152, %153 : vector<2x128xf32>
    %cst_39 = arith.constant 5.000000e-01 : f32
    %155 = vector.broadcast %cst_39 : f32 to vector<2x128xf32>
    %156 = arith.mulf %155, %154 : vector<2x128xf32>
    %157 = arith.select %5, %154, %156 : vector<2x128xi1>, vector<2x128xf32>
    %158 = math.tanh %157 : vector<2x128xf32>
    %cst_40 = arith.constant 1.000000e+00 : f32
    %159 = vector.broadcast %cst_40 : f32 to vector<2x128xf32>
    %160 = arith.addf %158, %159 : vector<2x128xf32>
    %cst_41 = arith.constant 5.000000e-01 : f32
    %161 = vector.broadcast %cst_41 : f32 to vector<2x128xf32>
    %162 = arith.mulf %161, %160 : vector<2x128xf32>
    %163 = arith.select %5, %158, %162 : vector<2x128xi1>, vector<2x128xf32>
    %164 = vector.extract_strided_slice %163 {offsets = [0, 0], sizes = [2, 32], strides = [1, 1]} : vector<2x128xf32> to vector<2x32xf32>
    %165 = vector.extract_strided_slice %163 {offsets = [0, 32], sizes = [2, 32], strides = [1, 1]} : vector<2x128xf32> to vector<2x32xf32>
    %166 = vector.extract_strided_slice %163 {offsets = [0, 64], sizes = [2, 32], strides = [1, 1]} : vector<2x128xf32> to vector<2x32xf32>
    %167 = vector.extract_strided_slice %163 {offsets = [0, 96], sizes = [2, 32], strides = [1, 1]} : vector<2x128xf32> to vector<2x32xf32>
    %168 = arith.mulf %165, %148 : vector<2x32xf32>
    %169 = arith.mulf %164, %166 : vector<2x32xf32>
    %170 = arith.addf %168, %169 : vector<2x32xf32>
    %171 = math.tanh %170 : vector<2x32xf32>
    %172 = arith.mulf %167, %171 : vector<2x32xf32>
    %173 = vector.extract_strided_slice %13 {offsets = [0, 7, 0], sizes = [2, 1, 128], strides = [1, 1, 1]} : vector<2x8x128xf32> to vector<2x1x128xf32>
    %174 = vector.shape_cast %173 : vector<2x1x128xf32> to vector<2x128xf32>
    %cst_42 = arith.constant dense<0.000000e+00> : vector<2x128xf32>
    %175 = tpu.matmul %172, %14, %cst_42 {dimension_numbers = #tpu.dot_dimension_numbers<[1], [0], [0], [1], [0, 0, 1, 1], [], []>} : vector<2x32xf32>, vector<32x128xf32>, vector<2x128xf32> -> vector<2x128xf32>
    %176 = arith.addf %174, %175 : vector<2x128xf32>
    %cst_43 = arith.constant 5.000000e-01 : f32
    %177 = vector.broadcast %cst_43 : f32 to vector<2x128xf32>
    %178 = arith.mulf %177, %176 : vector<2x128xf32>
    %179 = arith.select %5, %176, %178 : vector<2x128xi1>, vector<2x128xf32>
    %180 = math.tanh %179 : vector<2x128xf32>
    %cst_44 = arith.constant 1.000000e+00 : f32
    %181 = vector.broadcast %cst_44 : f32 to vector<2x128xf32>
    %182 = arith.addf %180, %181 : vector<2x128xf32>
    %cst_45 = arith.constant 5.000000e-01 : f32
    %183 = vector.broadcast %cst_45 : f32 to vector<2x128xf32>
    %184 = arith.mulf %183, %182 : vector<2x128xf32>
    %185 = arith.select %5, %180, %184 : vector<2x128xi1>, vector<2x128xf32>
    %186 = vector.extract_strided_slice %185 {offsets = [0, 0], sizes = [2, 32], strides = [1, 1]} : vector<2x128xf32> to vector<2x32xf32>
    %187 = vector.extract_strided_slice %185 {offsets = [0, 32], sizes = [2, 32], strides = [1, 1]} : vector<2x128xf32> to vector<2x32xf32>
    %188 = vector.extract_strided_slice %185 {offsets = [0, 64], sizes = [2, 32], strides = [1, 1]} : vector<2x128xf32> to vector<2x32xf32>
    %189 = vector.extract_strided_slice %185 {offsets = [0, 96], sizes = [2, 32], strides = [1, 1]} : vector<2x128xf32> to vector<2x32xf32>
    %190 = arith.mulf %187, %170 : vector<2x32xf32>
    %191 = arith.mulf %186, %188 : vector<2x32xf32>
    %192 = arith.addf %190, %191 : vector<2x32xf32>
    %193 = math.tanh %192 : vector<2x32xf32>
    %194 = arith.mulf %189, %193 : vector<2x32xf32>
    %195 = vector.shape_cast %40 : vector<2x32xf32> to vector<2x1x32xf32>
    %196 = vector.shape_cast %62 : vector<2x32xf32> to vector<2x1x32xf32>
    %197 = vector.shape_cast %84 : vector<2x32xf32> to vector<2x1x32xf32>
    %198 = vector.shape_cast %106 : vector<2x32xf32> to vector<2x1x32xf32>
    %199 = vector.shape_cast %128 : vector<2x32xf32> to vector<2x1x32xf32>
    %200 = vector.shape_cast %150 : vector<2x32xf32> to vector<2x1x32xf32>
    %201 = vector.shape_cast %172 : vector<2x32xf32> to vector<2x1x32xf32>
    %202 = vector.shape_cast %194 : vector<2x32xf32> to vector<2x1x32xf32>
    %203 = tpu.concatenate %195, %196, %197, %198, %199, %200, %201, %202 in 1 : vector<2x1x32xf32>, vector<2x1x32xf32>, vector<2x1x32xf32>, vector<2x1x32xf32>, vector<2x1x32xf32>, vector<2x1x32xf32>, vector<2x1x32xf32>, vector<2x1x32xf32> -> vector<2x8x32xf32>
    %204 = vector.shape_cast %203 : vector<2x8x32xf32> to vector<16x32xf32>
    %c0_46 = arith.constant 0 : index
    %c0_47 = arith.constant 0 : index
    %205 = vector.load %arg4[%c0_46, %c0_47] : memref<32x128xf32, #tpu.memory_space<vmem>>, vector<32x128xf32>
    %cst_48 = arith.constant dense<0.000000e+00> : vector<16x128xf32>
    %206 = tpu.matmul %204, %205, %cst_48 {dimension_numbers = #tpu.dot_dimension_numbers<[1], [0], [0], [1], [0, 0, 1, 1], [], []>} : vector<16x32xf32>, vector<32x128xf32>, vector<16x128xf32> -> vector<16x128xf32>
    %c0_49 = arith.constant 0 : index
    %c0_50 = arith.constant 0 : index
    %207 = vector.load %arg6[%c0_49, %c0_50] : memref<1x128xf32, #tpu.memory_space<vmem>>, vector<1x128xf32>
    %208 = vector.broadcast %207 : vector<1x128xf32> to vector<16x128xf32>
    %209 = arith.addf %206, %208 : vector<16x128xf32>
    %210 = vector.shape_cast %209 : vector<16x128xf32> to vector<2x8x128xf32>
    %c0_51 = arith.constant 0 : index
    %c0_52 = arith.constant 0 : index
    %211 = vector.load %arg5[%c0_51, %c0_52] : memref<32x128xf32, #tpu.memory_space<vmem>>, vector<32x128xf32>
    %c1 = arith.constant 1 : index
    %c0_53 = arith.constant 0 : index
    %c0_54 = arith.constant 0 : index
    %212 = vector.load %arg9[%c1, %c0_53, %c0_54] : memref<2x2x32xf32, #tpu.memory_space<vmem>>, vector<1x2x32xf32>
    %213 = vector.shape_cast %212 : vector<1x2x32xf32> to vector<2x32xf32>
    %c1_55 = arith.constant 1 : index
    %c0_56 = arith.constant 0 : index
    %c0_57 = arith.constant 0 : index
    %214 = vector.load %arg10[%c1_55, %c0_56, %c0_57] : memref<2x2x32xf32, #tpu.memory_space<vmem>>, vector<1x2x32xf32>
    %215 = vector.shape_cast %214 : vector<1x2x32xf32> to vector<2x32xf32>
    %216 = vector.extract_strided_slice %210 {offsets = [0, 0, 0], sizes = [2, 1, 128], strides = [1, 1, 1]} : vector<2x8x128xf32> to vector<2x1x128xf32>
    %217 = vector.shape_cast %216 : vector<2x1x128xf32> to vector<2x128xf32>
    %cst_58 = arith.constant dense<0.000000e+00> : vector<2x128xf32>
    %218 = tpu.matmul %213, %211, %cst_58 {dimension_numbers = #tpu.dot_dimension_numbers<[1], [0], [0], [1], [0, 0, 1, 1], [], []>} : vector<2x32xf32>, vector<32x128xf32>, vector<2x128xf32> -> vector<2x128xf32>
    %219 = arith.addf %217, %218 : vector<2x128xf32>
    %cst_59 = arith.constant 5.000000e-01 : f32
    %220 = vector.broadcast %cst_59 : f32 to vector<2x128xf32>
    %221 = arith.mulf %220, %219 : vector<2x128xf32>
    %222 = arith.select %5, %219, %221 : vector<2x128xi1>, vector<2x128xf32>
    %223 = math.tanh %222 : vector<2x128xf32>
    %cst_60 = arith.constant 1.000000e+00 : f32
    %224 = vector.broadcast %cst_60 : f32 to vector<2x128xf32>
    %225 = arith.addf %223, %224 : vector<2x128xf32>
    %cst_61 = arith.constant 5.000000e-01 : f32
    %226 = vector.broadcast %cst_61 : f32 to vector<2x128xf32>
    %227 = arith.mulf %226, %225 : vector<2x128xf32>
    %228 = arith.select %5, %223, %227 : vector<2x128xi1>, vector<2x128xf32>
    %229 = vector.extract_strided_slice %228 {offsets = [0, 0], sizes = [2, 32], strides = [1, 1]} : vector<2x128xf32> to vector<2x32xf32>
    %230 = vector.extract_strided_slice %228 {offsets = [0, 32], sizes = [2, 32], strides = [1, 1]} : vector<2x128xf32> to vector<2x32xf32>
    %231 = vector.extract_strided_slice %228 {offsets = [0, 64], sizes = [2, 32], strides = [1, 1]} : vector<2x128xf32> to vector<2x32xf32>
    %232 = vector.extract_strided_slice %228 {offsets = [0, 96], sizes = [2, 32], strides = [1, 1]} : vector<2x128xf32> to vector<2x32xf32>
    %233 = arith.mulf %230, %215 : vector<2x32xf32>
    %234 = arith.mulf %229, %231 : vector<2x32xf32>
    %235 = arith.addf %233, %234 : vector<2x32xf32>
    %236 = math.tanh %235 : vector<2x32xf32>
    %237 = arith.mulf %232, %236 : vector<2x32xf32>
    %238 = vector.extract_strided_slice %210 {offsets = [0, 1, 0], sizes = [2, 1, 128], strides = [1, 1, 1]} : vector<2x8x128xf32> to vector<2x1x128xf32>
    %239 = vector.shape_cast %238 : vector<2x1x128xf32> to vector<2x128xf32>
    %cst_62 = arith.constant dense<0.000000e+00> : vector<2x128xf32>
    %240 = tpu.matmul %237, %211, %cst_62 {dimension_numbers = #tpu.dot_dimension_numbers<[1], [0], [0], [1], [0, 0, 1, 1], [], []>} : vector<2x32xf32>, vector<32x128xf32>, vector<2x128xf32> -> vector<2x128xf32>
    %241 = arith.addf %239, %240 : vector<2x128xf32>
    %cst_63 = arith.constant 5.000000e-01 : f32
    %242 = vector.broadcast %cst_63 : f32 to vector<2x128xf32>
    %243 = arith.mulf %242, %241 : vector<2x128xf32>
    %244 = arith.select %5, %241, %243 : vector<2x128xi1>, vector<2x128xf32>
    %245 = math.tanh %244 : vector<2x128xf32>
    %cst_64 = arith.constant 1.000000e+00 : f32
    %246 = vector.broadcast %cst_64 : f32 to vector<2x128xf32>
    %247 = arith.addf %245, %246 : vector<2x128xf32>
    %cst_65 = arith.constant 5.000000e-01 : f32
    %248 = vector.broadcast %cst_65 : f32 to vector<2x128xf32>
    %249 = arith.mulf %248, %247 : vector<2x128xf32>
    %250 = arith.select %5, %245, %249 : vector<2x128xi1>, vector<2x128xf32>
    %251 = vector.extract_strided_slice %250 {offsets = [0, 0], sizes = [2, 32], strides = [1, 1]} : vector<2x128xf32> to vector<2x32xf32>
    %252 = vector.extract_strided_slice %250 {offsets = [0, 32], sizes = [2, 32], strides = [1, 1]} : vector<2x128xf32> to vector<2x32xf32>
    %253 = vector.extract_strided_slice %250 {offsets = [0, 64], sizes = [2, 32], strides = [1, 1]} : vector<2x128xf32> to vector<2x32xf32>
    %254 = vector.extract_strided_slice %250 {offsets = [0, 96], sizes = [2, 32], strides = [1, 1]} : vector<2x128xf32> to vector<2x32xf32>
    %255 = arith.mulf %252, %235 : vector<2x32xf32>
    %256 = arith.mulf %251, %253 : vector<2x32xf32>
    %257 = arith.addf %255, %256 : vector<2x32xf32>
    %258 = math.tanh %257 : vector<2x32xf32>
    %259 = arith.mulf %254, %258 : vector<2x32xf32>
    %260 = vector.extract_strided_slice %210 {offsets = [0, 2, 0], sizes = [2, 1, 128], strides = [1, 1, 1]} : vector<2x8x128xf32> to vector<2x1x128xf32>
    %261 = vector.shape_cast %260 : vector<2x1x128xf32> to vector<2x128xf32>
    %cst_66 = arith.constant dense<0.000000e+00> : vector<2x128xf32>
    %262 = tpu.matmul %259, %211, %cst_66 {dimension_numbers = #tpu.dot_dimension_numbers<[1], [0], [0], [1], [0, 0, 1, 1], [], []>} : vector<2x32xf32>, vector<32x128xf32>, vector<2x128xf32> -> vector<2x128xf32>
    %263 = arith.addf %261, %262 : vector<2x128xf32>
    %cst_67 = arith.constant 5.000000e-01 : f32
    %264 = vector.broadcast %cst_67 : f32 to vector<2x128xf32>
    %265 = arith.mulf %264, %263 : vector<2x128xf32>
    %266 = arith.select %5, %263, %265 : vector<2x128xi1>, vector<2x128xf32>
    %267 = math.tanh %266 : vector<2x128xf32>
    %cst_68 = arith.constant 1.000000e+00 : f32
    %268 = vector.broadcast %cst_68 : f32 to vector<2x128xf32>
    %269 = arith.addf %267, %268 : vector<2x128xf32>
    %cst_69 = arith.constant 5.000000e-01 : f32
    %270 = vector.broadcast %cst_69 : f32 to vector<2x128xf32>
    %271 = arith.mulf %270, %269 : vector<2x128xf32>
    %272 = arith.select %5, %267, %271 : vector<2x128xi1>, vector<2x128xf32>
    %273 = vector.extract_strided_slice %272 {offsets = [0, 0], sizes = [2, 32], strides = [1, 1]} : vector<2x128xf32> to vector<2x32xf32>
    %274 = vector.extract_strided_slice %272 {offsets = [0, 32], sizes = [2, 32], strides = [1, 1]} : vector<2x128xf32> to vector<2x32xf32>
    %275 = vector.extract_strided_slice %272 {offsets = [0, 64], sizes = [2, 32], strides = [1, 1]} : vector<2x128xf32> to vector<2x32xf32>
    %276 = vector.extract_strided_slice %272 {offsets = [0, 96], sizes = [2, 32], strides = [1, 1]} : vector<2x128xf32> to vector<2x32xf32>
    %277 = arith.mulf %274, %257 : vector<2x32xf32>
    %278 = arith.mulf %273, %275 : vector<2x32xf32>
    %279 = arith.addf %277, %278 : vector<2x32xf32>
    %280 = math.tanh %279 : vector<2x32xf32>
    %281 = arith.mulf %276, %280 : vector<2x32xf32>
    %282 = vector.extract_strided_slice %210 {offsets = [0, 3, 0], sizes = [2, 1, 128], strides = [1, 1, 1]} : vector<2x8x128xf32> to vector<2x1x128xf32>
    %283 = vector.shape_cast %282 : vector<2x1x128xf32> to vector<2x128xf32>
    %cst_70 = arith.constant dense<0.000000e+00> : vector<2x128xf32>
    %284 = tpu.matmul %281, %211, %cst_70 {dimension_numbers = #tpu.dot_dimension_numbers<[1], [0], [0], [1], [0, 0, 1, 1], [], []>} : vector<2x32xf32>, vector<32x128xf32>, vector<2x128xf32> -> vector<2x128xf32>
    %285 = arith.addf %283, %284 : vector<2x128xf32>
    %cst_71 = arith.constant 5.000000e-01 : f32
    %286 = vector.broadcast %cst_71 : f32 to vector<2x128xf32>
    %287 = arith.mulf %286, %285 : vector<2x128xf32>
    %288 = arith.select %5, %285, %287 : vector<2x128xi1>, vector<2x128xf32>
    %289 = math.tanh %288 : vector<2x128xf32>
    %cst_72 = arith.constant 1.000000e+00 : f32
    %290 = vector.broadcast %cst_72 : f32 to vector<2x128xf32>
    %291 = arith.addf %289, %290 : vector<2x128xf32>
    %cst_73 = arith.constant 5.000000e-01 : f32
    %292 = vector.broadcast %cst_73 : f32 to vector<2x128xf32>
    %293 = arith.mulf %292, %291 : vector<2x128xf32>
    %294 = arith.select %5, %289, %293 : vector<2x128xi1>, vector<2x128xf32>
    %295 = vector.extract_strided_slice %294 {offsets = [0, 0], sizes = [2, 32], strides = [1, 1]} : vector<2x128xf32> to vector<2x32xf32>
    %296 = vector.extract_strided_slice %294 {offsets = [0, 32], sizes = [2, 32], strides = [1, 1]} : vector<2x128xf32> to vector<2x32xf32>
    %297 = vector.extract_strided_slice %294 {offsets = [0, 64], sizes = [2, 32], strides = [1, 1]} : vector<2x128xf32> to vector<2x32xf32>
    %298 = vector.extract_strided_slice %294 {offsets = [0, 96], sizes = [2, 32], strides = [1, 1]} : vector<2x128xf32> to vector<2x32xf32>
    %299 = arith.mulf %296, %279 : vector<2x32xf32>
    %300 = arith.mulf %295, %297 : vector<2x32xf32>
    %301 = arith.addf %299, %300 : vector<2x32xf32>
    %302 = math.tanh %301 : vector<2x32xf32>
    %303 = arith.mulf %298, %302 : vector<2x32xf32>
    %304 = vector.extract_strided_slice %210 {offsets = [0, 4, 0], sizes = [2, 1, 128], strides = [1, 1, 1]} : vector<2x8x128xf32> to vector<2x1x128xf32>
    %305 = vector.shape_cast %304 : vector<2x1x128xf32> to vector<2x128xf32>
    %cst_74 = arith.constant dense<0.000000e+00> : vector<2x128xf32>
    %306 = tpu.matmul %303, %211, %cst_74 {dimension_numbers = #tpu.dot_dimension_numbers<[1], [0], [0], [1], [0, 0, 1, 1], [], []>} : vector<2x32xf32>, vector<32x128xf32>, vector<2x128xf32> -> vector<2x128xf32>
    %307 = arith.addf %305, %306 : vector<2x128xf32>
    %cst_75 = arith.constant 5.000000e-01 : f32
    %308 = vector.broadcast %cst_75 : f32 to vector<2x128xf32>
    %309 = arith.mulf %308, %307 : vector<2x128xf32>
    %310 = arith.select %5, %307, %309 : vector<2x128xi1>, vector<2x128xf32>
    %311 = math.tanh %310 : vector<2x128xf32>
    %cst_76 = arith.constant 1.000000e+00 : f32
    %312 = vector.broadcast %cst_76 : f32 to vector<2x128xf32>
    %313 = arith.addf %311, %312 : vector<2x128xf32>
    %cst_77 = arith.constant 5.000000e-01 : f32
    %314 = vector.broadcast %cst_77 : f32 to vector<2x128xf32>
    %315 = arith.mulf %314, %313 : vector<2x128xf32>
    %316 = arith.select %5, %311, %315 : vector<2x128xi1>, vector<2x128xf32>
    %317 = vector.extract_strided_slice %316 {offsets = [0, 0], sizes = [2, 32], strides = [1, 1]} : vector<2x128xf32> to vector<2x32xf32>
    %318 = vector.extract_strided_slice %316 {offsets = [0, 32], sizes = [2, 32], strides = [1, 1]} : vector<2x128xf32> to vector<2x32xf32>
    %319 = vector.extract_strided_slice %316 {offsets = [0, 64], sizes = [2, 32], strides = [1, 1]} : vector<2x128xf32> to vector<2x32xf32>
    %320 = vector.extract_strided_slice %316 {offsets = [0, 96], sizes = [2, 32], strides = [1, 1]} : vector<2x128xf32> to vector<2x32xf32>
    %321 = arith.mulf %318, %301 : vector<2x32xf32>
    %322 = arith.mulf %317, %319 : vector<2x32xf32>
    %323 = arith.addf %321, %322 : vector<2x32xf32>
    %324 = math.tanh %323 : vector<2x32xf32>
    %325 = arith.mulf %320, %324 : vector<2x32xf32>
    %326 = vector.extract_strided_slice %210 {offsets = [0, 5, 0], sizes = [2, 1, 128], strides = [1, 1, 1]} : vector<2x8x128xf32> to vector<2x1x128xf32>
    %327 = vector.shape_cast %326 : vector<2x1x128xf32> to vector<2x128xf32>
    %cst_78 = arith.constant dense<0.000000e+00> : vector<2x128xf32>
    %328 = tpu.matmul %325, %211, %cst_78 {dimension_numbers = #tpu.dot_dimension_numbers<[1], [0], [0], [1], [0, 0, 1, 1], [], []>} : vector<2x32xf32>, vector<32x128xf32>, vector<2x128xf32> -> vector<2x128xf32>
    %329 = arith.addf %327, %328 : vector<2x128xf32>
    %cst_79 = arith.constant 5.000000e-01 : f32
    %330 = vector.broadcast %cst_79 : f32 to vector<2x128xf32>
    %331 = arith.mulf %330, %329 : vector<2x128xf32>
    %332 = arith.select %5, %329, %331 : vector<2x128xi1>, vector<2x128xf32>
    %333 = math.tanh %332 : vector<2x128xf32>
    %cst_80 = arith.constant 1.000000e+00 : f32
    %334 = vector.broadcast %cst_80 : f32 to vector<2x128xf32>
    %335 = arith.addf %333, %334 : vector<2x128xf32>
    %cst_81 = arith.constant 5.000000e-01 : f32
    %336 = vector.broadcast %cst_81 : f32 to vector<2x128xf32>
    %337 = arith.mulf %336, %335 : vector<2x128xf32>
    %338 = arith.select %5, %333, %337 : vector<2x128xi1>, vector<2x128xf32>
    %339 = vector.extract_strided_slice %338 {offsets = [0, 0], sizes = [2, 32], strides = [1, 1]} : vector<2x128xf32> to vector<2x32xf32>
    %340 = vector.extract_strided_slice %338 {offsets = [0, 32], sizes = [2, 32], strides = [1, 1]} : vector<2x128xf32> to vector<2x32xf32>
    %341 = vector.extract_strided_slice %338 {offsets = [0, 64], sizes = [2, 32], strides = [1, 1]} : vector<2x128xf32> to vector<2x32xf32>
    %342 = vector.extract_strided_slice %338 {offsets = [0, 96], sizes = [2, 32], strides = [1, 1]} : vector<2x128xf32> to vector<2x32xf32>
    %343 = arith.mulf %340, %323 : vector<2x32xf32>
    %344 = arith.mulf %339, %341 : vector<2x32xf32>
    %345 = arith.addf %343, %344 : vector<2x32xf32>
    %346 = math.tanh %345 : vector<2x32xf32>
    %347 = arith.mulf %342, %346 : vector<2x32xf32>
    %348 = vector.extract_strided_slice %210 {offsets = [0, 6, 0], sizes = [2, 1, 128], strides = [1, 1, 1]} : vector<2x8x128xf32> to vector<2x1x128xf32>
    %349 = vector.shape_cast %348 : vector<2x1x128xf32> to vector<2x128xf32>
    %cst_82 = arith.constant dense<0.000000e+00> : vector<2x128xf32>
    %350 = tpu.matmul %347, %211, %cst_82 {dimension_numbers = #tpu.dot_dimension_numbers<[1], [0], [0], [1], [0, 0, 1, 1], [], []>} : vector<2x32xf32>, vector<32x128xf32>, vector<2x128xf32> -> vector<2x128xf32>
    %351 = arith.addf %349, %350 : vector<2x128xf32>
    %cst_83 = arith.constant 5.000000e-01 : f32
    %352 = vector.broadcast %cst_83 : f32 to vector<2x128xf32>
    %353 = arith.mulf %352, %351 : vector<2x128xf32>
    %354 = arith.select %5, %351, %353 : vector<2x128xi1>, vector<2x128xf32>
    %355 = math.tanh %354 : vector<2x128xf32>
    %cst_84 = arith.constant 1.000000e+00 : f32
    %356 = vector.broadcast %cst_84 : f32 to vector<2x128xf32>
    %357 = arith.addf %355, %356 : vector<2x128xf32>
    %cst_85 = arith.constant 5.000000e-01 : f32
    %358 = vector.broadcast %cst_85 : f32 to vector<2x128xf32>
    %359 = arith.mulf %358, %357 : vector<2x128xf32>
    %360 = arith.select %5, %355, %359 : vector<2x128xi1>, vector<2x128xf32>
    %361 = vector.extract_strided_slice %360 {offsets = [0, 0], sizes = [2, 32], strides = [1, 1]} : vector<2x128xf32> to vector<2x32xf32>
    %362 = vector.extract_strided_slice %360 {offsets = [0, 32], sizes = [2, 32], strides = [1, 1]} : vector<2x128xf32> to vector<2x32xf32>
    %363 = vector.extract_strided_slice %360 {offsets = [0, 64], sizes = [2, 32], strides = [1, 1]} : vector<2x128xf32> to vector<2x32xf32>
    %364 = vector.extract_strided_slice %360 {offsets = [0, 96], sizes = [2, 32], strides = [1, 1]} : vector<2x128xf32> to vector<2x32xf32>
    %365 = arith.mulf %362, %345 : vector<2x32xf32>
    %366 = arith.mulf %361, %363 : vector<2x32xf32>
    %367 = arith.addf %365, %366 : vector<2x32xf32>
    %368 = math.tanh %367 : vector<2x32xf32>
    %369 = arith.mulf %364, %368 : vector<2x32xf32>
    %370 = vector.extract_strided_slice %210 {offsets = [0, 7, 0], sizes = [2, 1, 128], strides = [1, 1, 1]} : vector<2x8x128xf32> to vector<2x1x128xf32>
    %371 = vector.shape_cast %370 : vector<2x1x128xf32> to vector<2x128xf32>
    %cst_86 = arith.constant dense<0.000000e+00> : vector<2x128xf32>
    %372 = tpu.matmul %369, %211, %cst_86 {dimension_numbers = #tpu.dot_dimension_numbers<[1], [0], [0], [1], [0, 0, 1, 1], [], []>} : vector<2x32xf32>, vector<32x128xf32>, vector<2x128xf32> -> vector<2x128xf32>
    %373 = arith.addf %371, %372 : vector<2x128xf32>
    %cst_87 = arith.constant 5.000000e-01 : f32
    %374 = vector.broadcast %cst_87 : f32 to vector<2x128xf32>
    %375 = arith.mulf %374, %373 : vector<2x128xf32>
    %376 = arith.select %5, %373, %375 : vector<2x128xi1>, vector<2x128xf32>
    %377 = math.tanh %376 : vector<2x128xf32>
    %cst_88 = arith.constant 1.000000e+00 : f32
    %378 = vector.broadcast %cst_88 : f32 to vector<2x128xf32>
    %379 = arith.addf %377, %378 : vector<2x128xf32>
    %cst_89 = arith.constant 5.000000e-01 : f32
    %380 = vector.broadcast %cst_89 : f32 to vector<2x128xf32>
    %381 = arith.mulf %380, %379 : vector<2x128xf32>
    %382 = arith.select %5, %377, %381 : vector<2x128xi1>, vector<2x128xf32>
    %383 = vector.extract_strided_slice %382 {offsets = [0, 0], sizes = [2, 32], strides = [1, 1]} : vector<2x128xf32> to vector<2x32xf32>
    %384 = vector.extract_strided_slice %382 {offsets = [0, 32], sizes = [2, 32], strides = [1, 1]} : vector<2x128xf32> to vector<2x32xf32>
    %385 = vector.extract_strided_slice %382 {offsets = [0, 64], sizes = [2, 32], strides = [1, 1]} : vector<2x128xf32> to vector<2x32xf32>
    %386 = vector.extract_strided_slice %382 {offsets = [0, 96], sizes = [2, 32], strides = [1, 1]} : vector<2x128xf32> to vector<2x32xf32>
    %387 = arith.mulf %384, %367 : vector<2x32xf32>
    %388 = arith.mulf %383, %385 : vector<2x32xf32>
    %389 = arith.addf %387, %388 : vector<2x32xf32>
    %390 = math.tanh %389 : vector<2x32xf32>
    %391 = arith.mulf %386, %390 : vector<2x32xf32>
    %392 = vector.shape_cast %237 : vector<2x32xf32> to vector<2x1x32xf32>
    %393 = vector.shape_cast %259 : vector<2x32xf32> to vector<2x1x32xf32>
    %394 = vector.shape_cast %281 : vector<2x32xf32> to vector<2x1x32xf32>
    %395 = vector.shape_cast %303 : vector<2x32xf32> to vector<2x1x32xf32>
    %396 = vector.shape_cast %325 : vector<2x32xf32> to vector<2x1x32xf32>
    %397 = vector.shape_cast %347 : vector<2x32xf32> to vector<2x1x32xf32>
    %398 = vector.shape_cast %369 : vector<2x32xf32> to vector<2x1x32xf32>
    %399 = vector.shape_cast %391 : vector<2x32xf32> to vector<2x1x32xf32>
    %400 = tpu.concatenate %392, %393, %394, %395, %396, %397, %398, %399 in 1 : vector<2x1x32xf32>, vector<2x1x32xf32>, vector<2x1x32xf32>, vector<2x1x32xf32>, vector<2x1x32xf32>, vector<2x1x32xf32>, vector<2x1x32xf32>, vector<2x1x32xf32> -> vector<2x8x32xf32>
    %401 = vector.shape_cast %400 : vector<2x8x32xf32> to vector<16x32xf32>
    %c0_90 = arith.constant 0 : index
    %c0_91 = arith.constant 0 : index
    %402 = vector.load %arg7[%c0_90, %c0_91] : memref<32x8xf32, #tpu.memory_space<vmem>>, vector<32x8xf32>
    %cst_92 = arith.constant dense<0.000000e+00> : vector<16x8xf32>
    %403 = tpu.matmul %401, %402, %cst_92 {dimension_numbers = #tpu.dot_dimension_numbers<[1], [0], [0], [1], [0, 0, 1, 1], [], []>} : vector<16x32xf32>, vector<32x8xf32>, vector<16x8xf32> -> vector<16x8xf32>
    %c0_93 = arith.constant 0 : index
    %c0_94 = arith.constant 0 : index
    %404 = vector.load %arg8[%c0_93, %c0_94] : memref<1x8xf32, #tpu.memory_space<vmem>>, vector<1x8xf32>
    %405 = vector.broadcast %404 : vector<1x8xf32> to vector<16x8xf32>
    %406 = arith.addf %403, %405 : vector<16x8xf32>
    %c0_95 = arith.constant 0 : index
    %c0_96 = arith.constant 0 : index
    %407 = vector.load %arg11[%c0_95, %c0_96] : memref<16x8xf32, #tpu.memory_space<vmem>>, vector<16x8xf32>
    tpu.vector_store %arg11[%c0_95, %c0_96], %406 {strides = array<i32>} : memref<16x8xf32, #tpu.memory_space<vmem>>, vector<16x8xf32>,
    %c0_97 = arith.constant 0 : index
    %c0_98 = arith.constant 0 : index
    %c0_99 = arith.constant 0 : index
    %408 = vector.load %arg12[%c0_97, %c0_98, %c0_99] : memref<2x2x32xf32, #tpu.memory_space<vmem>>, vector<1x2x32xf32>
    %409 = vector.shape_cast %408 : vector<1x2x32xf32> to vector<2x32xf32>
    %410 = vector.shape_cast %194 : vector<2x32xf32> to vector<1x2x32xf32>
    tpu.vector_store %arg12[%c0_97, %c0_98, %c0_99], %410 {strides = array<i32>} : memref<2x2x32xf32, #tpu.memory_space<vmem>>, vector<1x2x32xf32>,
    %c0_100 = arith.constant 0 : index
    %c0_101 = arith.constant 0 : index
    %c0_102 = arith.constant 0 : index
    %411 = vector.load %arg13[%c0_100, %c0_101, %c0_102] : memref<2x2x32xf32, #tpu.memory_space<vmem>>, vector<1x2x32xf32>
    %412 = vector.shape_cast %411 : vector<1x2x32xf32> to vector<2x32xf32>
    %413 = vector.shape_cast %192 : vector<2x32xf32> to vector<1x2x32xf32>
    tpu.vector_store %arg13[%c0_100, %c0_101, %c0_102], %413 {strides = array<i32>} : memref<2x2x32xf32, #tpu.memory_space<vmem>>, vector<1x2x32xf32>,
    %c1_103 = arith.constant 1 : index
    %c0_104 = arith.constant 0 : index
    %c0_105 = arith.constant 0 : index
    %414 = vector.load %arg12[%c1_103, %c0_104, %c0_105] : memref<2x2x32xf32, #tpu.memory_space<vmem>>, vector<1x2x32xf32>
    %415 = vector.shape_cast %414 : vector<1x2x32xf32> to vector<2x32xf32>
    %416 = vector.shape_cast %391 : vector<2x32xf32> to vector<1x2x32xf32>
    tpu.vector_store %arg12[%c1_103, %c0_104, %c0_105], %416 {strides = array<i32>} : memref<2x2x32xf32, #tpu.memory_space<vmem>>, vector<1x2x32xf32>,
    %c1_106 = arith.constant 1 : index
    %c0_107 = arith.constant 0 : index
    %c0_108 = arith.constant 0 : index
    %417 = vector.load %arg13[%c1_106, %c0_107, %c0_108] : memref<2x2x32xf32, #tpu.memory_space<vmem>>, vector<1x2x32xf32>
    %418 = vector.shape_cast %417 : vector<1x2x32xf32> to vector<2x32xf32>
    %419 = vector.shape_cast %389 : vector<2x32xf32> to vector<1x2x32xf32>
    tpu.vector_store %arg13[%c1_106, %c0_107, %c0_108], %419 {strides = array<i32>} : memref<2x2x32xf32, #tpu.memory_space<vmem>>, vector<1x2x32xf32>,
    return
  }
}

</mosaic_0001>

<llo_original>
// kernel: tpu_custom_call.1
$region0: #{tpu_custom_call.1}
  #allocation0 [shape = 'u32[]', space=smem, size = 0x4, offset = 0x4, fixed_abs, tag = 'smem constant byte address 0x4 - core index']
  #allocation1 [shape = 'u32[144,128]{1,0:T(1,128)}', space=vmem, size = 0x12000, scoped, tag = 'internal scratch']
  %s0 = inlined_call_operand.hbm [shape: f32[2,8,16], index: 0, kind: input, shape index: {}]
  %s1 = inlined_call_operand.hbm [shape: f32[16,128], index: 1, kind: input, shape index: {}]
  %s2 = inlined_call_operand.vmem [shape: f32[32,128], index: 2, kind: input, shape index: {}]
  %s3 = inlined_call_operand.vmem [shape: f32[1,128], index: 3, kind: input, shape index: {}]
  %s4 = inlined_call_operand.hbm [shape: f32[32,128], index: 4, kind: input, shape index: {}]
  %s5 = inlined_call_operand.hbm [shape: f32[32,128], index: 5, kind: input, shape index: {}]
  %s6 = inlined_call_operand.vmem [shape: f32[1,128], index: 6, kind: input, shape index: {}]
  %s7 = inlined_call_operand.vmem [shape: f32[32,8], index: 7, kind: input, shape index: {}]
  %s8 = inlined_call_operand.vmem [shape: f32[1,8], index: 8, kind: input, shape index: {}]
  %s9 = inlined_call_operand.vmem [shape: f32[2,2,32], index: 9, kind: input, shape index: {}]
  %s10 = inlined_call_operand.vmem [shape: f32[2,2,32], index: 10, kind: input, shape index: {}]
  %s11 = inlined_call_operand.vmem [shape: f32[16,8], index: 11, kind: output, shape index: {0}]
  %s12 = inlined_call_operand.hbm [shape: f32[2,2,32], index: 12, kind: output, shape index: {1}]
  %s13 = inlined_call_operand.hbm [shape: f32[2,2,32], index: 13, kind: output, shape index: {2}]
  %14 = xla_tuple %s11, %s12, %s13
  %s15 = sld [smem:[#allocation0]]
  $region86: #{tpu_custom_call.1} parent=0
    _
  %s17 = ssub.s32 1, %s15
  %s18 = scalar_select 0, %s17, %s15
  $region1: #{tpu_custom_call.1} parent=0
    #allocation2 [shape = 'u8[8192]{0}', space=vmem, size = 0x2000, scoped, tag = 'input window, operand 0, single buffered']
    #allocation3 [shape = 's32[1]{0}', space=sflag, size = 0x4, scoped, tag = 'scoped memory for tpu_custom_call.1']
    #allocation4 [shape = 's32[1]{0}', space=sflag, size = 0x4, scoped, tag = 'scoped memory for tpu_custom_call.1']
    #allocation5 [shape = 'u8[8192]{0}', space=vmem, size = 0x2000, scoped, tag = 'input window, operand 1, single buffered']
    #allocation6 [shape = 's32[1]{0}', space=sflag, size = 0x4, scoped, tag = 'scoped memory for tpu_custom_call.1']
    #allocation7 [shape = 'u8[16384]{0}', space=vmem, size = 0x4000, scoped, tag = 'input window, operand 4, single buffered']
    #allocation8 [shape = 'u8[16384]{0}', space=vmem, size = 0x4000, scoped, tag = 'input window, operand 5, single buffered']
    #allocation9 [shape = 's32[1]{0}', space=sflag, size = 0x4, scoped, tag = 'scoped memory for tpu_custom_call.1']
    #allocation10 [shape = 'u8[2048]{0}', space=vmem, size = 0x800, scoped, tag = 'output window, operand 1, single buffered']
    #allocation11 [shape = 'u8[2048]{0}', space=vmem, size = 0x800, scoped, tag = 'output window, operand 2, single buffered']
    #allocation12 [shape = 's32[1]{0}', space=sflag, size = 0x4, scoped, tag = 'scoped memory for tpu_custom_call.1']
    %19 = vsyncpa [#allocation3], 0
    %20 = vsyncpa [#allocation6], 0
    %21 = vsyncpa [#allocation9], 0
    %22 = vsyncpa [#allocation4], 0
    %23 = vsyncpa [#allocation12], 0
    // Predicated region
    $region2: #{tpu_custom_call.1} parent=1 // pred_check
      _
    $region3: #{tpu_custom_call.1} parent=1 // pred_check_branch
      %25 = sbr.rel (0) target = $region5
    $region4: #{tpu_custom_call.1} parent=1 // pred_region
      %s27 = ssub.s32 256, 256
      %28 = vsyncadd [#allocation3], %s27
      %s29 = sshll.u32 [#allocation2], 4
      %s30 = int_to_ptr.vmem [resolvable:$true] %s29
      %35 = dma.hbm_to_vmem [thread:$0]  %s0, 256, %s30, [#allocation3], 128, 128, 8
    $region5: #{tpu_custom_call.1} parent=1 // pred_fallthru
      _
    // Predicated region
    $region6: #{tpu_custom_call.1} parent=1 // pred_check
      _
    $region7: #{tpu_custom_call.1} parent=1 // pred_check_branch
      %37 = sbr.rel (0) target = $region9
    $region8: #{tpu_custom_call.1} parent=1 // pred_region
      %s39 = ssub.s32 256, 256
      %40 = vsyncadd [#allocation6], %s39
      %s41 = sshll.u32 [#allocation5], 4
      %s42 = int_to_ptr.vmem [resolvable:$true] %s41
      %47 = dma.hbm_to_vmem [thread:$0]  %s1, 256, %s42, [#allocation6], 128, 128, 8
    $region9: #{tpu_custom_call.1} parent=1 // pred_fallthru
      _
    // Predicated region
    $region10: #{tpu_custom_call.1} parent=1 // pred_check
      _
    $region11: #{tpu_custom_call.1} parent=1 // pred_check_branch
      %49 = sbr.rel (0) target = $region13
    $region12: #{tpu_custom_call.1} parent=1 // pred_region
      _
    $region13: #{tpu_custom_call.1} parent=1 // pred_fallthru
      _
    // Predicated region
    $region14: #{tpu_custom_call.1} parent=1 // pred_check
      _
    $region15: #{tpu_custom_call.1} parent=1 // pred_check_branch
      %51 = sbr.rel (0) target = $region17
    $region16: #{tpu_custom_call.1} parent=1 // pred_region
      _
    $region17: #{tpu_custom_call.1} parent=1 // pred_fallthru
      _
    // Predicated region
    $region18: #{tpu_custom_call.1} parent=1 // pred_check
      _
    $region19: #{tpu_custom_call.1} parent=1 // pred_check_branch
      %53 = sbr.rel (0) target = $region21
    $region20: #{tpu_custom_call.1} parent=1 // pred_region
      %s55 = ssub.s32 512, 512
      %56 = vsyncadd [#allocation6], %s55
      %s57 = sshll.u32 [#allocation7], 4
      %s58 = int_to_ptr.vmem [resolvable:$true] %s57
      %63 = dma.hbm_to_vmem [thread:$0]  %s4, 512, %s58, [#allocation6], 128, 128, 8
    $region21: #{tpu_custom_call.1} parent=1 // pred_fallthru
      _
    // Predicated region
    $region22: #{tpu_custom_call.1} parent=1 // pred_check
      _
    $region23: #{tpu_custom_call.1} parent=1 // pred_check_branch
      %65 = sbr.rel (0) target = $region25
    $region24: #{tpu_custom_call.1} parent=1 // pred_region
      %s67 = ssub.s32 512, 512
      %68 = vsyncadd [#allocation9], %s67
      %s69 = sshll.u32 [#allocation8], 4
      %s70 = int_to_ptr.vmem [resolvable:$true] %s69
      %75 = dma.hbm_to_vmem [thread:$0]  %s5, 512, %s70, [#allocation9], 128, 128, 8
    $region25: #{tpu_custom_call.1} parent=1 // pred_fallthru
      _
    // Predicated region
    $region26: #{tpu_custom_call.1} parent=1 // pred_check
      _
    $region27: #{tpu_custom_call.1} parent=1 // pred_check_branch
      %77 = sbr.rel (0) target = $region29
    $region28: #{tpu_custom_call.1} parent=1 // pred_region
      _
    $region29: #{tpu_custom_call.1} parent=1 // pred_fallthru
      _
    // Predicated region
    $region30: #{tpu_custom_call.1} parent=1 // pred_check
      _
    $region31: #{tpu_custom_call.1} parent=1 // pred_check_branch
      %79 = sbr.rel (0) target = $region33
    $region32: #{tpu_custom_call.1} parent=1 // pred_region
      _
    $region33: #{tpu_custom_call.1} parent=1 // pred_fallthru
      _
    // Predicated region
    $region34: #{tpu_custom_call.1} parent=1 // pred_check
      _
    $region35: #{tpu_custom_call.1} parent=1 // pred_check_branch
      %81 = sbr.rel (0) target = $region37
    $region36: #{tpu_custom_call.1} parent=1 // pred_region
      _
    $region37: #{tpu_custom_call.1} parent=1 // pred_fallthru
      _
    // Predicated region
    $region38: #{tpu_custom_call.1} parent=1 // pred_check
      _
    $region39: #{tpu_custom_call.1} parent=1 // pred_check_branch
      %83 = sbr.rel (0) target = $region41
    $region40: #{tpu_custom_call.1} parent=1 // pred_region
      _
    $region41: #{tpu_custom_call.1} parent=1 // pred_fallthru
      _
    // Predicated region
    $region42: #{tpu_custom_call.1} parent=1 // pred_check
      _
    $region43: #{tpu_custom_call.1} parent=1 // pred_check_branch
      %85 = sbr.rel (0) target = $region45
    $region44: #{tpu_custom_call.1} parent=1 // pred_region
      _
    $region45: #{tpu_custom_call.1} parent=1 // pred_fallthru
      _
    // Predicated region
    $region46: #{tpu_custom_call.1} parent=1 // pred_check
      _
    $region47: #{tpu_custom_call.1} parent=1 // pred_check_branch
      %87 = sbr.rel (0) target = $region49
    $region48: #{tpu_custom_call.1} parent=1 // pred_region
      %88 = dma.done [#allocation3], 256
    $region49: #{tpu_custom_call.1} parent=1 // pred_fallthru
      _
    // Predicated region
    $region50: #{tpu_custom_call.1} parent=1 // pred_check
      _
    $region51: #{tpu_custom_call.1} parent=1 // pred_check_branch
      %90 = sbr.rel (0) target = $region53
    $region52: #{tpu_custom_call.1} parent=1 // pred_region
      %91 = dma.done [#allocation6], 256
    $region53: #{tpu_custom_call.1} parent=1 // pred_fallthru
      _
    // Predicated region
    $region54: #{tpu_custom_call.1} parent=1 // pred_check
      _
    $region55: #{tpu_custom_call.1} parent=1 // pred_check_branch
      %93 = sbr.rel (0) target = $region57
    $region56: #{tpu_custom_call.1} parent=1 // pred_region
      %94 = dma.done [#allocation6], 512
    $region57: #{tpu_custom_call.1} parent=1 // pred_fallthru
      _
    // Predicated region
    $region58: #{tpu_custom_call.1} parent=1 // pred_check
      _
    $region59: #{tpu_custom_call.1} parent=1 // pred_check_branch
      %96 = sbr.rel (0) target = $region61
    $region60: #{tpu_custom_call.1} parent=1 // pred_region
      %97 = dma.done [#allocation9], 512
    $region61: #{tpu_custom_call.1} parent=1 // pred_fallthru
      _
    %v98 = vlaneseq
    %v99 = vand.u32 %v98, 127
    %vm100 = vcmp.ge.s32.totalorder %v99, 64
    %vm101 = vcmp.lt.s32.totalorder %v99, 96
    %vm102 = vmand %vm100, %vm101
    %v103 = vld [vmem:[#allocation2] sm:$0xff]
    %v104 = vld [vmem:[#allocation2 + $0x8] sm:$0xff]
    %v105 = vld [vmem:[#allocation5] sm:$0xff]
    %v106 = vld [vmem:[#allocation5 + $0x8] sm:$0xff]
    %v107 = vld [vmem:[%s3] sm:$0x1]
    %v109 = vlaneseq
    %v110 = vshrl.u32 %v109, 7
    %v111 = vsub.s32 0, %v110
    %v112 = vrot.slane %v107, %v111
    %vm114 = vcmask 130048
    %v116 = vsel %vm114, %v103, 0
    %v119 = vsel %vm114, %v104, 0
    %121 = vmatprep.subr.mxu0 0.0
    %122 = vmatpush1.msra.mxu0 0.0
    %123 = vmatprep.subr.mxu0 0.0
    %124 = vmatpush1.msra.mxu0 0.0
    %125 = vmatprep.subr.mxu0 0.0
    %126 = vmatpush1.msra.mxu0 0.0
    %127 = vmatprep.subr.mxu0 0.0
    %128 = vmatpush1.msra.mxu0 0.0
    %129 = vmatprep.subr.mxu0 0.0
    %130 = vmatpush1.msra.mxu0 0.0
    %131 = vmatprep.subr.mxu0 0.0
    %132 = vmatpush1.msra.mxu0 0.0
    %133 = vmatprep.subr.mxu0 0.0
    %134 = vmatpush1.msra.mxu0 0.0
    %135 = vmatprep.subr.mxu0 0.0
    %136 = vmatpush1.msra.mxu0 0.0
    %137 = vmatprep.subr.mxu0 0.0
    %138 = vmatpush1.msra.mxu0 0.0
    %139 = vmatprep.subr.mxu0 0.0
    %140 = vmatpush1.msra.mxu0 0.0
    %141 = vmatprep.subr.mxu0 0.0
    %142 = vmatpush1.msra.mxu0 0.0
    %143 = vmatprep.subr.mxu0 0.0
    %144 = vmatpush1.msra.mxu0 0.0
    %145 = vmatprep.subr.mxu0 0.0
    %146 = vmatpush1.msra.mxu0 0.0
    %147 = vmatprep.subr.mxu0 0.0
    %148 = vmatpush1.msra.mxu0 0.0
    %149 = vmatprep.subr.mxu0 0.0
    %150 = vmatpush1.msra.mxu0 %v106
    %151 = vmatprep.subr.mxu0 0.0
    %152 = vmatpush1.msra.mxu0 %v105
    %153 = vmatprep.subr.mxu0 0.0
    %154 = vmatpush2.msra.mxu0 0.0
    %155 = vmatprep.subr.mxu0 0.0
    %156 = vmatpush2.msra.mxu0 0.0
    %157 = vmatprep.subr.mxu0 0.0
    %158 = vmatpush2.msra.mxu0 0.0
    %159 = vmatprep.subr.mxu0 0.0
    %160 = vmatpush2.msra.mxu0 0.0
    %161 = vmatprep.subr.mxu0 0.0
    %162 = vmatpush2.msra.mxu0 0.0
    %163 = vmatprep.subr.mxu0 0.0
    %164 = vmatpush2.msra.mxu0 0.0
    %165 = vmatprep.subr.mxu0 0.0
    %166 = vmatpush2.msra.mxu0 0.0
    %167 = vmatprep.subr.mxu0 0.0
    %168 = vmatpush2.msra.mxu0 0.0
    %169 = vmatprep.subr.mxu0 0.0
    %170 = vmatpush2.msra.mxu0 0.0
    %171 = vmatprep.subr.mxu0 0.0
    %172 = vmatpush2.msra.mxu0 0.0
    %173 = vmatprep.subr.mxu0 0.0
    %174 = vmatpush2.msra.mxu0 0.0
    %175 = vmatprep.subr.mxu0 0.0
    %176 = vmatpush2.msra.mxu0 0.0
    %177 = vmatprep.subr.mxu0 0.0
    %178 = vmatpush2.msra.mxu0 0.0
    %179 = vmatprep.subr.mxu0 0.0
    %180 = vmatpush2.msra.mxu0 0.0
    %181 = vmatprep.subr.mxu0 0.0
    %182 = vmatpush2.msra.mxu0 0.0
    %183 = vmatprep.subr.mxu0 0.0
    %184 = vmatpush2.msra.mxu0 0.0
    %185 = vmatprep.mubr.f32.mxu0 0.0
    %186 = vmatmul.mubr.f32.gmra.mxu0 %v116
    %v187 = vpop.f32.mrf.mxu0
    %v188 = vadd.f32 %v112, %v187
    %v189 = vpop.f32.mrf.mxu0
    %190 = vmatprep.mubr.f32.mxu0 0.0
    %191 = vmatmul.mubr.f32.gmra.mxu0 %v119
    %v192 = vpop.f32.mrf.mxu0
    %v193 = vadd.f32 %v112, %v192
    %v194 = vpop.f32.mrf.mxu0
    %195 = vdwg.mxu0
    %v196 = vld [vmem:[%s2] sm:$0xff]
    %v197 = vld [vmem:[%s2 + $0x8] sm:$0xff]
    %v198 = vld [vmem:[%s2 + $0x10] sm:$0xff]
    %v199 = vld [vmem:[%s2 + $0x18] sm:$0xff]
    %v200 = vld [vmem:[%s9] sm:$0x3]
    %v201 = vld [vmem:[%s10] sm:$0x3]
    %vm202 = vcmask 261120
    %v204 = vsel %vm202, %v200, 0
    %206 = vmatprep.subr.mxu0 0.0
    %207 = vmatpush1.msra.mxu0 0.0
    %208 = vmatprep.subr.mxu0 0.0
    %209 = vmatpush1.msra.mxu0 0.0
    %210 = vmatprep.subr.mxu0 0.0
    %211 = vmatpush1.msra.mxu0 0.0
    %212 = vmatprep.subr.mxu0 0.0
    %213 = vmatpush1.msra.mxu0 0.0
    %214 = vmatprep.subr.mxu0 0.0
    %215 = vmatpush1.msra.mxu0 0.0
    %216 = vmatprep.subr.mxu0 0.0
    %217 = vmatpush1.msra.mxu0 0.0
    %218 = vmatprep.subr.mxu0 0.0
    %219 = vmatpush1.msra.mxu0 0.0
    %220 = vmatprep.subr.mxu0 0.0
    %221 = vmatpush1.msra.mxu0 0.0
    %222 = vmatprep.subr.mxu0 0.0
    %223 = vmatpush1.msra.mxu0 0.0
    %224 = vmatprep.subr.mxu0 0.0
    %225 = vmatpush1.msra.mxu0 0.0
    %226 = vmatprep.subr.mxu0 0.0
    %227 = vmatpush1.msra.mxu0 0.0
    %228 = vmatprep.subr.mxu0 0.0
    %229 = vmatpush1.msra.mxu0 0.0
    %230 = vmatprep.subr.mxu0 0.0
    %231 = vmatpush1.msra.mxu0 %v199
    %232 = vmatprep.subr.mxu0 0.0
    %233 = vmatpush1.msra.mxu0 %v198
    %234 = vmatprep.subr.mxu0 0.0
    %235 = vmatpush1.msra.mxu0 %v197
    %236 = vmatprep.subr.mxu0 0.0
    %237 = vmatpush1.msra.mxu0 %v196
    %238 = vmatprep.subr.mxu0 0.0
    %239 = vmatpush2.msra.mxu0 0.0
    %240 = vmatprep.subr.mxu0 0.0
    %241 = vmatpush2.msra.mxu0 0.0
    %242 = vmatprep.subr.mxu0 0.0
    %243 = vmatpush2.msra.mxu0 0.0
    %244 = vmatprep.subr.mxu0 0.0
    %245 = vmatpush2.msra.mxu0 0.0
    %246 = vmatprep.subr.mxu0 0.0
    %247 = vmatpush2.msra.mxu0 0.0
    %248 = vmatprep.subr.mxu0 0.0
    %249 = vmatpush2.msra.mxu0 0.0
    %250 = vmatprep.subr.mxu0 0.0
    %251 = vmatpush2.msra.mxu0 0.0
    %252 = vmatprep.subr.mxu0 0.0
    %253 = vmatpush2.msra.mxu0 0.0
    %254 = vmatprep.subr.mxu0 0.0
    %255 = vmatpush2.msra.mxu0 0.0
    %256 = vmatprep.subr.mxu0 0.0
    %257 = vmatpush2.msra.mxu0 0.0
    %258 = vmatprep.subr.mxu0 0.0
    %259 = vmatpush2.msra.mxu0 0.0
    %260 = vmatprep.subr.mxu0 0.0
    %261 = vmatpush2.msra.mxu0 0.0
    %262 = vmatprep.subr.mxu0 0.0
    %263 = vmatpush2.msra.mxu0 0.0
    %264 = vmatprep.subr.mxu0 0.0
    %265 = vmatpush2.msra.mxu0 0.0
    %266 = vmatprep.subr.mxu0 0.0
    %267 = vmatpush2.msra.mxu0 0.0
    %268 = vmatprep.subr.mxu0 0.0
    %269 = vmatpush2.msra.mxu0 0.0
    %270 = vmatprep.mubr.f32.mxu0 0.0
    %271 = vmatmul.mubr.f32.gmra.mxu0 %v204
    %v272 = vpop.f32.mrf.mxu0
    %v273 = vadd.f32 0.0, %v272
    %v274 = vpop.f32.mrf.mxu0
    %275 = vdwg.mxu0
    %v277 = vrot.slane %v273, 1
    %v280 = vadd.f32 %v188, %v273
    %v281 = vadd.f32 %v193, %v277
    %v282 = vmul.f32 %v280, 0.5
    %v283 = vmul.f32 %v281, 0.5
    %v286 = vrot.slane %v281, 7
    %vm287 = vcmask 1041409
    %v288 = vsel %vm287, %v286, %v280
    %v292 = vrot.slane %v283, 7
    %v293 = vsel %vm287, %v292, %v282
    %v295 = vsel %vm102, %v288, %v293
    %v296 = vtanh.pop %v295
    %v297 = vadd.f32 %v296, 1.0
    %v298 = vmul.f32 %v297, 0.5
    %v299 = vsel %vm102, %v296, %v298
    %301 = vrot.lane.b32.xlu0 %v201, 32
    %v302 = vpop.permute.xlu0 %301
    %v304 = vmul.f32 %v299, %v302
    %306 = vrot.lane.b32.xlu0 %v299, 64
    %v307 = vpop.permute.xlu0 %306
    %v309 = vmul.f32 %v299, %v307
    %311 = vrot.lane.b32.xlu0 %v309, 32
    %v312 = vpop.permute.xlu0 %311
    %v314 = vadd.f32 %v304, %v312
    %v315 = vtanh.pop %v314
    %317 = vrot.lane.b32.xlu0 %v315, 64
    %v318 = vpop.permute.xlu0 %317
    %v320 = vmul.f32 %v299, %v318
    %322 = vrot.lane.b32.xlu0 %v320, 32
    %v323 = vpop.permute.xlu0 %322
    %v324 = vsel %vm202, %v323, 0
    %326 = vmatprep.subr.mxu0 0.0
    %327 = vmatpush1.msra.mxu0 0.0
    %328 = vmatprep.subr.mxu0 0.0
    %329 = vmatpush1.msra.mxu0 0.0
    %330 = vmatprep.subr.mxu0 0.0
    %331 = vmatpush1.msra.mxu0 0.0
    %332 = vmatprep.subr.mxu0 0.0
    %333 = vmatpush1.msra.mxu0 0.0
    %334 = vmatprep.subr.mxu0 0.0
    %335 = vmatpush1.msra.mxu0 0.0
    %336 = vmatprep.subr.mxu0 0.0
    %337 = vmatpush1.msra.mxu0 0.0
    %338 = vmatprep.subr.mxu0 0.0
    %339 = vmatpush1.msra.mxu0 0.0
    %340 = vmatprep.subr.mxu0 0.0
    %341 = vmatpush1.msra.mxu0 0.0
    %342 = vmatprep.subr.mxu0 0.0
    %343 = vmatpush1.msra.mxu0 0.0
    %344 = vmatprep.subr.mxu0 0.0
    %345 = vmatpush1.msra.mxu0 0.0
    %346 = vmatprep.subr.mxu0 0.0
    %347 = vmatpush1.msra.mxu0 0.0
    %348 = vmatprep.subr.mxu0 0.0
    %349 = vmatpush1.msra.mxu0 0.0
    %350 = vmatprep.subr.mxu0 0.0
    %351 = vmatpush1.msra.mxu0 %v199
    %352 = vmatprep.subr.mxu0 0.0
    %353 = vmatpush1.msra.mxu0 %v198
    %354 = vmatprep.subr.mxu0 0.0
    %355 = vmatpush1.msra.mxu0 %v197
    %356 = vmatprep.subr.mxu0 0.0
    %357 = vmatpush1.msra.mxu0 %v196
    %358 = vmatprep.subr.mxu0 0.0
    %359 = vmatpush2.msra.mxu0 0.0
    %360 = vmatprep.subr.mxu0 0.0
    %361 = vmatpush2.msra.mxu0 0.0
    %362 = vmatprep.subr.mxu0 0.0
    %363 = vmatpush2.msra.mxu0 0.0
    %364 = vmatprep.subr.mxu0 0.0
    %365 = vmatpush2.msra.mxu0 0.0
    %366 = vmatprep.subr.mxu0 0.0
    %367 = vmatpush2.msra.mxu0 0.0
    %368 = vmatprep.subr.mxu0 0.0
    %369 = vmatpush2.msra.mxu0 0.0
    %370 = vmatprep.subr.mxu0 0.0
    %371 = vmatpush2.msra.mxu0 0.0
    %372 = vmatprep.subr.mxu0 0.0
    %373 = vmatpush2.msra.mxu0 0.0
    %374 = vmatprep.subr.mxu0 0.0
    %375 = vmatpush2.msra.mxu0 0.0
    %376 = vmatprep.subr.mxu0 0.0
    %377 = vmatpush2.msra.mxu0 0.0
    %378 = vmatprep.subr.mxu0 0.0
    %379 = vmatpush2.msra.mxu0 0.0
    %380 = vmatprep.subr.mxu0 0.0
    %381 = vmatpush2.msra.mxu0 0.0
    %382 = vmatprep.subr.mxu0 0.0
    %383 = vmatpush2.msra.mxu0 0.0
    %384 = vmatprep.subr.mxu0 0.0
    %385 = vmatpush2.msra.mxu0 0.0
    %386 = vmatprep.subr.mxu0 0.0
    %387 = vmatpush2.msra.mxu0 0.0
    %388 = vmatprep.subr.mxu0 0.0
    %389 = vmatpush2.msra.mxu0 0.0
    %390 = vmatprep.mubr.f32.mxu0 0.0
    %391 = vmatmul.mubr.f32.gmra.mxu0 %v324
    %v392 = vpop.f32.mrf.mxu0
    %v393 = vadd.f32 0.0, %v392
    %v394 = vpop.f32.mrf.mxu0
    %395 = vdwg.mxu0
    %v397 = vrot.slane %v393, 7
    %v400 = vadd.f32 %v188, %v397
    %v401 = vadd.f32 %v193, %v393
    %v402 = vmul.f32 %v400, 0.5
    %v403 = vmul.f32 %v401, 0.5
    %v406 = vrot.slane %v400, 1
    %v407 = vsel %vm287, %v401, %v406
    %v411 = vrot.slane %v402, 1
    %v412 = vsel %vm287, %v403, %v411
    %v414 = vsel %vm102, %v407, %v412
    %v415 = vtanh.pop %v414
    %v416 = vadd.f32 %v415, 1.0
    %v417 = vmul.f32 %v416, 0.5
    %v418 = vsel %vm102, %v415, %v417
    %v419 = vmul.f32 %v418, %v314
    %421 = vrot.lane.b32.xlu0 %v418, 64
    %v422 = vpop.permute.xlu0 %421
    %v424 = vmul.f32 %v418, %v422
    %426 = vrot.lane.b32.xlu0 %v424, 32
    %v427 = vpop.permute.xlu0 %426
    %v429 = vadd.f32 %v419, %v427
    %v430 = vtanh.pop %v429
    %432 = vrot.lane.b32.xlu0 %v430, 64
    %v433 = vpop.permute.xlu0 %432
    %v435 = vmul.f32 %v418, %v433
    %437 = vrot.lane.b32.xlu0 %v435, 32
    %v438 = vpop.permute.xlu0 %437
    %v439 = vsel %vm202, %v438, 0
    %441 = vmatprep.subr.mxu0 0.0
    %442 = vmatpush1.msra.mxu0 0.0
    %443 = vmatprep.subr.mxu0 0.0
    %444 = vmatpush1.msra.mxu0 0.0
    %445 = vmatprep.subr.mxu0 0.0
    %446 = vmatpush1.msra.mxu0 0.0
    %447 = vmatprep.subr.mxu0 0.0
    %448 = vmatpush1.msra.mxu0 0.0
    %449 = vmatprep.subr.mxu0 0.0
    %450 = vmatpush1.msra.mxu0 0.0
    %451 = vmatprep.subr.mxu0 0.0
    %452 = vmatpush1.msra.mxu0 0.0
    %453 = vmatprep.subr.mxu0 0.0
    %454 = vmatpush1.msra.mxu0 0.0
    %455 = vmatprep.subr.mxu0 0.0
    %456 = vmatpush1.msra.mxu0 0.0
    %457 = vmatprep.subr.mxu0 0.0
    %458 = vmatpush1.msra.mxu0 0.0
    %459 = vmatprep.subr.mxu0 0.0
    %460 = vmatpush1.msra.mxu0 0.0
    %461 = vmatprep.subr.mxu0 0.0
    %462 = vmatpush1.msra.mxu0 0.0
    %463 = vmatprep.subr.mxu0 0.0
    %464 = vmatpush1.msra.mxu0 0.0
    %465 = vmatprep.subr.mxu0 0.0
    %466 = vmatpush1.msra.mxu0 %v199
    %467 = vmatprep.subr.mxu0 0.0
    %468 = vmatpush1.msra.mxu0 %v198
    %469 = vmatprep.subr.mxu0 0.0
    %470 = vmatpush1.msra.mxu0 %v197
    %471 = vmatprep.subr.mxu0 0.0
    %472 = vmatpush1.msra.mxu0 %v196
    %473 = vmatprep.subr.mxu0 0.0
    %474 = vmatpush2.msra.mxu0 0.0
    %475 = vmatprep.subr.mxu0 0.0
    %476 = vmatpush2.msra.mxu0 0.0
    %477 = vmatprep.subr.mxu0 0.0
    %478 = vmatpush2.msra.mxu0 0.0
    %479 = vmatprep.subr.mxu0 0.0
    %480 = vmatpush2.msra.mxu0 0.0
    %481 = vmatprep.subr.mxu0 0.0
    %482 = vmatpush2.msra.mxu0 0.0
    %483 = vmatprep.subr.mxu0 0.0
    %484 = vmatpush2.msra.mxu0 0.0
    %485 = vmatprep.subr.mxu0 0.0
    %486 = vmatpush2.msra.mxu0 0.0
    %487 = vmatprep.subr.mxu0 0.0
    %488 = vmatpush2.msra.mxu0 0.0
    %489 = vmatprep.subr.mxu0 0.0
    %490 = vmatpush2.msra.mxu0 0.0
    %491 = vmatprep.subr.mxu0 0.0
    %492 = vmatpush2.msra.mxu0 0.0
    %493 = vmatprep.subr.mxu0 0.0
    %494 = vmatpush2.msra.mxu0 0.0
    %495 = vmatprep.subr.mxu0 0.0
    %496 = vmatpush2.msra.mxu0 0.0
    %497 = vmatprep.subr.mxu0 0.0
    %498 = vmatpush2.msra.mxu0 0.0
    %499 = vmatprep.subr.mxu0 0.0
    %500 = vmatpush2.msra.mxu0 0.0
    %501 = vmatprep.subr.mxu0 0.0
    %502 = vmatpush2.msra.mxu0 0.0
    %503 = vmatprep.subr.mxu0 0.0
    %504 = vmatpush2.msra.mxu0 0.0
    %505 = vmatprep.mubr.f32.mxu0 0.0
    %506 = vmatmul.mubr.f32.gmra.mxu0 %v439
    %v507 = vpop.f32.mrf.mxu0
    %v508 = vadd.f32 0.0, %v507
    %v509 = vpop.f32.mrf.mxu0
    %510 = vdwg.mxu0
    %v512 = vrot.slane %v508, 6
    %v513 = vrot.slane %v508, 7
    %v516 = vadd.f32 %v188, %v512
    %v517 = vadd.f32 %v193, %v513
    %v518 = vmul.f32 %v516, 0.5
    %v519 = vmul.f32 %v517, 0.5
    %v522 = vrot.slane %v516, 2
    %v523 = vrot.slane %v517, 1
    %v524 = vsel %vm287, %v523, %v522
    %v528 = vrot.slane %v518, 2
    %v529 = vrot.slane %v519, 1
    %v530 = vsel %vm287, %v529, %v528
    %v532 = vsel %vm102, %v524, %v530
    %v533 = vtanh.pop %v532
    %v534 = vadd.f32 %v533, 1.0
    %v535 = vmul.f32 %v534, 0.5
    %v536 = vsel %vm102, %v533, %v535
    %v537 = vmul.f32 %v536, %v429
    %539 = vrot.lane.b32.xlu0 %v536, 64
    %v540 = vpop.permute.xlu0 %539
    %v542 = vmul.f32 %v536, %v540
    %544 = vrot.lane.b32.xlu0 %v542, 32
    %v545 = vpop.permute.xlu0 %544
    %v547 = vadd.f32 %v537, %v545
    %v548 = vtanh.pop %v547
    %550 = vrot.lane.b32.xlu0 %v548, 64
    %v551 = vpop.permute.xlu0 %550
    %v553 = vmul.f32 %v536, %v551
    %555 = vrot.lane.b32.xlu0 %v553, 32
    %v556 = vpop.permute.xlu0 %555
    %v557 = vsel %vm202, %v556, 0
    %559 = vmatprep.subr.mxu0 0.0
    %560 = vmatpush1.msra.mxu0 0.0
    %561 = vmatprep.subr.mxu0 0.0
    %562 = vmatpush1.msra.mxu0 0.0
    %563 = vmatprep.subr.mxu0 0.0
    %564 = vmatpush1.msra.mxu0 0.0
    %565 = vmatprep.subr.mxu0 0.0
    %566 = vmatpush1.msra.mxu0 0.0
    %567 = vmatprep.subr.mxu0 0.0
    %568 = vmatpush1.msra.mxu0 0.0
    %569 = vmatprep.subr.mxu0 0.0
    %570 = vmatpush1.msra.mxu0 0.0
    %571 = vmatprep.subr.mxu0 0.0
    %572 = vmatpush1.msra.mxu0 0.0
    %573 = vmatprep.subr.mxu0 0.0
    %574 = vmatpush1.msra.mxu0 0.0
    %575 = vmatprep.subr.mxu0 0.0
    %576 = vmatpush1.msra.mxu0 0.0
    %577 = vmatprep.subr.mxu0 0.0
    %578 = vmatpush1.msra.mxu0 0.0
    %579 = vmatprep.subr.mxu0 0.0
    %580 = vmatpush1.msra.mxu0 0.0
    %581 = vmatprep.subr.mxu0 0.0
    %582 = vmatpush1.msra.mxu0 0.0
    %583 = vmatprep.subr.mxu0 0.0
    %584 = vmatpush1.msra.mxu0 %v199
    %585 = vmatprep.subr.mxu0 0.0
    %586 = vmatpush1.msra.mxu0 %v198
    %587 = vmatprep.subr.mxu0 0.0
    %588 = vmatpush1.msra.mxu0 %v197
    %589 = vmatprep.subr.mxu0 0.0
    %590 = vmatpush1.msra.mxu0 %v196
    %591 = vmatprep.subr.mxu0 0.0
    %592 = vmatpush2.msra.mxu0 0.0
    %593 = vmatprep.subr.mxu0 0.0
    %594 = vmatpush2.msra.mxu0 0.0
    %595 = vmatprep.subr.mxu0 0.0
    %596 = vmatpush2.msra.mxu0 0.0
    %597 = vmatprep.subr.mxu0 0.0
    %598 = vmatpush2.msra.mxu0 0.0
    %599 = vmatprep.subr.mxu0 0.0
    %600 = vmatpush2.msra.mxu0 0.0
    %601 = vmatprep.subr.mxu0 0.0
    %602 = vmatpush2.msra.mxu0 0.0
    %603 = vmatprep.subr.mxu0 0.0
    %604 = vmatpush2.msra.mxu0 0.0
    %605 = vmatprep.subr.mxu0 0.0
    %606 = vmatpush2.msra.mxu0 0.0
    %607 = vmatprep.subr.mxu0 0.0
    %608 = vmatpush2.msra.mxu0 0.0
    %609 = vmatprep.subr.mxu0 0.0
    %610 = vmatpush2.msra.mxu0 0.0
    %611 = vmatprep.subr.mxu0 0.0
    %612 = vmatpush2.msra.mxu0 0.0
    %613 = vmatprep.subr.mxu0 0.0
    %614 = vmatpush2.msra.mxu0 0.0
    %615 = vmatprep.subr.mxu0 0.0
    %616 = vmatpush2.msra.mxu0 0.0
    %617 = vmatprep.subr.mxu0 0.0
    %618 = vmatpush2.msra.mxu0 0.0
    %619 = vmatprep.subr.mxu0 0.0
    %620 = vmatpush2.msra.mxu0 0.0
    %621 = vmatprep.subr.mxu0 0.0
    %622 = vmatpush2.msra.mxu0 0.0
    %623 = vmatprep.mubr.f32.mxu0 0.0
    %624 = vmatmul.mubr.f32.gmra.mxu0 %v557
    %v625 = vpop.f32.mrf.mxu0
    %v626 = vadd.f32 0.0, %v625
    %v627 = vpop.f32.mrf.mxu0
    %628 = vdwg.mxu0
    %v630 = vrot.slane %v626, 5
    %v631 = vrot.slane %v626, 6
    %v634 = vadd.f32 %v188, %v630
    %v635 = vadd.f32 %v193, %v631
    %v636 = vmul.f32 %v634, 0.5
    %v637 = vmul.f32 %v635, 0.5
    %v640 = vrot.slane %v634, 3
    %v641 = vrot.slane %v635, 2
    %v642 = vsel %vm287, %v641, %v640
    %v646 = vrot.slane %v636, 3
    %v647 = vrot.slane %v637, 2
    %v648 = vsel %vm287, %v647, %v646
    %v650 = vsel %vm102, %v642, %v648
    %v651 = vtanh.pop %v650
    %v652 = vadd.f32 %v651, 1.0
    %v653 = vmul.f32 %v652, 0.5
    %v654 = vsel %vm102, %v651, %v653
    %v655 = vmul.f32 %v654, %v547
    %657 = vrot.lane.b32.xlu0 %v654, 64
    %v658 = vpop.permute.xlu0 %657
    %v660 = vmul.f32 %v654, %v658
    %662 = vrot.lane.b32.xlu0 %v660, 32
    %v663 = vpop.permute.xlu0 %662
    %v665 = vadd.f32 %v655, %v663
    %v666 = vtanh.pop %v665
    %668 = vrot.lane.b32.xlu0 %v666, 64
    %v669 = vpop.permute.xlu0 %668
    %v671 = vmul.f32 %v654, %v669
    %673 = vrot.lane.b32.xlu0 %v671, 32
    %v674 = vpop.permute.xlu0 %673
    %v675 = vsel %vm202, %v674, 0
    %677 = vmatprep.subr.mxu0 0.0
    %678 = vmatpush1.msra.mxu0 0.0
    %679 = vmatprep.subr.mxu0 0.0
    %680 = vmatpush1.msra.mxu0 0.0
    %681 = vmatprep.subr.mxu0 0.0
    %682 = vmatpush1.msra.mxu0 0.0
    %683 = vmatprep.subr.mxu0 0.0
    %684 = vmatpush1.msra.mxu0 0.0
    %685 = vmatprep.subr.mxu0 0.0
    %686 = vmatpush1.msra.mxu0 0.0
    %687 = vmatprep.subr.mxu0 0.0
    %688 = vmatpush1.msra.mxu0 0.0
    %689 = vmatprep.subr.mxu0 0.0
    %690 = vmatpush1.msra.mxu0 0.0
    %691 = vmatprep.subr.mxu0 0.0
    %692 = vmatpush1.msra.mxu0 0.0
    %693 = vmatprep.subr.mxu0 0.0
    %694 = vmatpush1.msra.mxu0 0.0
    %695 = vmatprep.subr.mxu0 0.0
    %696 = vmatpush1.msra.mxu0 0.0
    %697 = vmatprep.subr.mxu0 0.0
    %698 = vmatpush1.msra.mxu0 0.0
    %699 = vmatprep.subr.mxu0 0.0
    %700 = vmatpush1.msra.mxu0 0.0
    %701 = vmatprep.subr.mxu0 0.0
    %702 = vmatpush1.msra.mxu0 %v199
    %703 = vmatprep.subr.mxu0 0.0
    %704 = vmatpush1.msra.mxu0 %v198
    %705 = vmatprep.subr.mxu0 0.0
    %706 = vmatpush1.msra.mxu0 %v197
    %707 = vmatprep.subr.mxu0 0.0
    %708 = vmatpush1.msra.mxu0 %v196
    %709 = vmatprep.subr.mxu0 0.0
    %710 = vmatpush2.msra.mxu0 0.0
    %711 = vmatprep.subr.mxu0 0.0
    %712 = vmatpush2.msra.mxu0 0.0
    %713 = vmatprep.subr.mxu0 0.0
    %714 = vmatpush2.msra.mxu0 0.0
    %715 = vmatprep.subr.mxu0 0.0
    %716 = vmatpush2.msra.mxu0 0.0
    %717 = vmatprep.subr.mxu0 0.0
    %718 = vmatpush2.msra.mxu0 0.0
    %719 = vmatprep.subr.mxu0 0.0
    %720 = vmatpush2.msra.mxu0 0.0
    %721 = vmatprep.subr.mxu0 0.0
    %722 = vmatpush2.msra.mxu0 0.0
    %723 = vmatprep.subr.mxu0 0.0
    %724 = vmatpush2.msra.mxu0 0.0
    %725 = vmatprep.subr.mxu0 0.0
    %726 = vmatpush2.msra.mxu0 0.0
    %727 = vmatprep.subr.mxu0 0.0
    %728 = vmatpush2.msra.mxu0 0.0
    %729 = vmatprep.subr.mxu0 0.0
    %730 = vmatpush2.msra.mxu0 0.0
    %731 = vmatprep.subr.mxu0 0.0
    %732 = vmatpush2.msra.mxu0 0.0
    %733 = vmatprep.subr.mxu0 0.0
    %734 = vmatpush2.msra.mxu0 0.0
    %735 = vmatprep.subr.mxu0 0.0
    %736 = vmatpush2.msra.mxu0 0.0
    %737 = vmatprep.subr.mxu0 0.0
    %738 = vmatpush2.msra.mxu0 0.0
    %739 = vmatprep.subr.mxu0 0.0
    %740 = vmatpush2.msra.mxu0 0.0
    %741 = vmatprep.mubr.f32.mxu0 0.0
    %742 = vmatmul.mubr.f32.gmra.mxu0 %v675
    %v743 = vpop.f32.mrf.mxu0
    %v744 = vadd.f32 0.0, %v743
    %v745 = vpop.f32.mrf.mxu0
    %746 = vdwg.mxu0
    %v748 = vrot.slane %v744, 4
    %v749 = vrot.slane %v744, 5
    %v752 = vadd.f32 %v188, %v748
    %v753 = vadd.f32 %v193, %v749
    %v754 = vmul.f32 %v752, 0.5
    %v755 = vmul.f32 %v753, 0.5
    %v758 = vrot.slane %v752, 4
    %v759 = vrot.slane %v753, 3
    %v760 = vsel %vm287, %v759, %v758
    %v764 = vrot.slane %v754, 4
    %v765 = vrot.slane %v755, 3
    %v766 = vsel %vm287, %v765, %v764
    %v768 = vsel %vm102, %v760, %v766
    %v769 = vtanh.pop %v768
    %v770 = vadd.f32 %v769, 1.0
    %v771 = vmul.f32 %v770, 0.5
    %v772 = vsel %vm102, %v769, %v771
    %v773 = vmul.f32 %v772, %v665
    %775 = vrot.lane.b32.xlu0 %v772, 64
    %v776 = vpop.permute.xlu0 %775
    %v778 = vmul.f32 %v772, %v776
    %780 = vrot.lane.b32.xlu0 %v778, 32
    %v781 = vpop.permute.xlu0 %780
    %v783 = vadd.f32 %v773, %v781
    %v784 = vtanh.pop %v783
    %786 = vrot.lane.b32.xlu0 %v784, 64
    %v787 = vpop.permute.xlu0 %786
    %v789 = vmul.f32 %v772, %v787
    %791 = vrot.lane.b32.xlu0 %v789, 32
    %v792 = vpop.permute.xlu0 %791
    %v793 = vsel %vm202, %v792, 0
    %795 = vmatprep.subr.mxu0 0.0
    %796 = vmatpush1.msra.mxu0 0.0
    %797 = vmatprep.subr.mxu0 0.0
    %798 = vmatpush1.msra.mxu0 0.0
    %799 = vmatprep.subr.mxu0 0.0
    %800 = vmatpush1.msra.mxu0 0.0
    %801 = vmatprep.subr.mxu0 0.0
    %802 = vmatpush1.msra.mxu0 0.0
    %803 = vmatprep.subr.mxu0 0.0
    %804 = vmatpush1.msra.mxu0 0.0
    %805 = vmatprep.subr.mxu0 0.0
    %806 = vmatpush1.msra.mxu0 0.0
    %807 = vmatprep.subr.mxu0 0.0
    %808 = vmatpush1.msra.mxu0 0.0
    %809 = vmatprep.subr.mxu0 0.0
    %810 = vmatpush1.msra.mxu0 0.0
    %811 = vmatprep.subr.mxu0 0.0
    %812 = vmatpush1.msra.mxu0 0.0
    %813 = vmatprep.subr.mxu0 0.0
    %814 = vmatpush1.msra.mxu0 0.0
    %815 = vmatprep.subr.mxu0 0.0
    %816 = vmatpush1.msra.mxu0 0.0
    %817 = vmatprep.subr.mxu0 0.0
    %818 = vmatpush1.msra.mxu0 0.0
    %819 = vmatprep.subr.mxu0 0.0
    %820 = vmatpush1.msra.mxu0 %v199
    %821 = vmatprep.subr.mxu0 0.0
    %822 = vmatpush1.msra.mxu0 %v198
    %823 = vmatprep.subr.mxu0 0.0
    %824 = vmatpush1.msra.mxu0 %v197
    %825 = vmatprep.subr.mxu0 0.0
    %826 = vmatpush1.msra.mxu0 %v196
    %827 = vmatprep.subr.mxu0 0.0
    %828 = vmatpush2.msra.mxu0 0.0
    %829 = vmatprep.subr.mxu0 0.0
    %830 = vmatpush2.msra.mxu0 0.0
    %831 = vmatprep.subr.mxu0 0.0
    %832 = vmatpush2.msra.mxu0 0.0
    %833 = vmatprep.subr.mxu0 0.0
    %834 = vmatpush2.msra.mxu0 0.0
    %835 = vmatprep.subr.mxu0 0.0
    %836 = vmatpush2.msra.mxu0 0.0
    %837 = vmatprep.subr.mxu0 0.0
    %838 = vmatpush2.msra.mxu0 0.0
    %839 = vmatprep.subr.mxu0 0.0
    %840 = vmatpush2.msra.mxu0 0.0
    %841 = vmatprep.subr.mxu0 0.0
    %842 = vmatpush2.msra.mxu0 0.0
    %843 = vmatprep.subr.mxu0 0.0
    %844 = vmatpush2.msra.mxu0 0.0
    %845 = vmatprep.subr.mxu0 0.0
    %846 = vmatpush2.msra.mxu0 0.0
    %847 = vmatprep.subr.mxu0 0.0
    %848 = vmatpush2.msra.mxu0 0.0
    %849 = vmatprep.subr.mxu0 0.0
    %850 = vmatpush2.msra.mxu0 0.0
    %851 = vmatprep.subr.mxu0 0.0
    %852 = vmatpush2.msra.mxu0 0.0
    %853 = vmatprep.subr.mxu0 0.0
    %854 = vmatpush2.msra.mxu0 0.0
    %855 = vmatprep.subr.mxu0 0.0
    %856 = vmatpush2.msra.mxu0 0.0
    %857 = vmatprep.subr.mxu0 0.0
    %858 = vmatpush2.msra.mxu0 0.0
    %859 = vmatprep.mubr.f32.mxu0 0.0
    %860 = vmatmul.mubr.f32.gmra.mxu0 %v793
    %v861 = vpop.f32.mrf.mxu0
    %v862 = vadd.f32 0.0, %v861
    %v863 = vpop.f32.mrf.mxu0
    %864 = vdwg.mxu0
    %v866 = vrot.slane %v862, 3
    %v867 = vrot.slane %v862, 4
    %v870 = vadd.f32 %v188, %v866
    %v871 = vadd.f32 %v193, %v867
    %v872 = vmul.f32 %v870, 0.5
    %v873 = vmul.f32 %v871, 0.5
    %v876 = vrot.slane %v870, 5
    %v877 = vrot.slane %v871, 4
    %v878 = vsel %vm287, %v877, %v876
    %v882 = vrot.slane %v872, 5
    %v883 = vrot.slane %v873, 4
    %v884 = vsel %vm287, %v883, %v882
    %v886 = vsel %vm102, %v878, %v884
    %v887 = vtanh.pop %v886
    %v888 = vadd.f32 %v887, 1.0
    %v889 = vmul.f32 %v888, 0.5
    %v890 = vsel %vm102, %v887, %v889
    %v891 = vmul.f32 %v890, %v783
    %893 = vrot.lane.b32.xlu0 %v890, 64
    %v894 = vpop.permute.xlu0 %893
    %v896 = vmul.f32 %v890, %v894
    %898 = vrot.lane.b32.xlu0 %v896, 32
    %v899 = vpop.permute.xlu0 %898
    %v901 = vadd.f32 %v891, %v899
    %v902 = vtanh.pop %v901
    %904 = vrot.lane.b32.xlu0 %v902, 64
    %v905 = vpop.permute.xlu0 %904
    %v907 = vmul.f32 %v890, %v905
    %909 = vrot.lane.b32.xlu0 %v907, 32
    %v910 = vpop.permute.xlu0 %909
    %v911 = vsel %vm202, %v910, 0
    %913 = vmatprep.subr.mxu0 0.0
    %914 = vmatpush1.msra.mxu0 0.0
    %915 = vmatprep.subr.mxu0 0.0
    %916 = vmatpush1.msra.mxu0 0.0
    %917 = vmatprep.subr.mxu0 0.0
    %918 = vmatpush1.msra.mxu0 0.0
    %919 = vmatprep.subr.mxu0 0.0
    %920 = vmatpush1.msra.mxu0 0.0
    %921 = vmatprep.subr.mxu0 0.0
    %922 = vmatpush1.msra.mxu0 0.0
    %923 = vmatprep.subr.mxu0 0.0
    %924 = vmatpush1.msra.mxu0 0.0
    %925 = vmatprep.subr.mxu0 0.0
    %926 = vmatpush1.msra.mxu0 0.0
    %927 = vmatprep.subr.mxu0 0.0
    %928 = vmatpush1.msra.mxu0 0.0
    %929 = vmatprep.subr.mxu0 0.0
    %930 = vmatpush1.msra.mxu0 0.0
    %931 = vmatprep.subr.mxu0 0.0
    %932 = vmatpush1.msra.mxu0 0.0
    %933 = vmatprep.subr.mxu0 0.0
    %934 = vmatpush1.msra.mxu0 0.0
    %935 = vmatprep.subr.mxu0 0.0
    %936 = vmatpush1.msra.mxu0 0.0
    %937 = vmatprep.subr.mxu0 0.0
    %938 = vmatpush1.msra.mxu0 %v199
    %939 = vmatprep.subr.mxu0 0.0
    %940 = vmatpush1.msra.mxu0 %v198
    %941 = vmatprep.subr.mxu0 0.0
    %942 = vmatpush1.msra.mxu0 %v197
    %943 = vmatprep.subr.mxu0 0.0
    %944 = vmatpush1.msra.mxu0 %v196
    %945 = vmatprep.subr.mxu0 0.0
    %946 = vmatpush2.msra.mxu0 0.0
    %947 = vmatprep.subr.mxu0 0.0
    %948 = vmatpush2.msra.mxu0 0.0
    %949 = vmatprep.subr.mxu0 0.0
    %950 = vmatpush2.msra.mxu0 0.0
    %951 = vmatprep.subr.mxu0 0.0
    %952 = vmatpush2.msra.mxu0 0.0
    %953 = vmatprep.subr.mxu0 0.0
    %954 = vmatpush2.msra.mxu0 0.0
    %955 = vmatprep.subr.mxu0 0.0
    %956 = vmatpush2.msra.mxu0 0.0
    %957 = vmatprep.subr.mxu0 0.0
    %958 = vmatpush2.msra.mxu0 0.0
    %959 = vmatprep.subr.mxu0 0.0
    %960 = vmatpush2.msra.mxu0 0.0
    %961 = vmatprep.subr.mxu0 0.0
    %962 = vmatpush2.msra.mxu0 0.0
    %963 = vmatprep.subr.mxu0 0.0
    %964 = vmatpush2.msra.mxu0 0.0
    %965 = vmatprep.subr.mxu0 0.0
    %966 = vmatpush2.msra.mxu0 0.0
    %967 = vmatprep.subr.mxu0 0.0
    %968 = vmatpush2.msra.mxu0 0.0
    %969 = vmatprep.subr.mxu0 0.0
    %970 = vmatpush2.msra.mxu0 0.0
    %971 = vmatprep.subr.mxu0 0.0
    %972 = vmatpush2.msra.mxu0 0.0
    %973 = vmatprep.subr.mxu0 0.0
    %974 = vmatpush2.msra.mxu0 0.0
    %975 = vmatprep.subr.mxu0 0.0
    %976 = vmatpush2.msra.mxu0 0.0
    %977 = vmatprep.mubr.f32.mxu0 0.0
    %978 = vmatmul.mubr.f32.gmra.mxu0 %v911
    %v979 = vpop.f32.mrf.mxu0
    %v980 = vadd.f32 0.0, %v979
    %v981 = vpop.f32.mrf.mxu0
    %982 = vdwg.mxu0
    %v984 = vrot.slane %v980, 2
    %v985 = vrot.slane %v980, 3
    %v988 = vadd.f32 %v188, %v984
    %v989 = vadd.f32 %v193, %v985
    %v990 = vmul.f32 %v988, 0.5
    %v991 = vmul.f32 %v989, 0.5
    %v994 = vrot.slane %v988, 6
    %v995 = vrot.slane %v989, 5
    %v996 = vsel %vm287, %v995, %v994
    %v1000 = vrot.slane %v990, 6
    %v1001 = vrot.slane %v991, 5
    %v1002 = vsel %vm287, %v1001, %v1000
    %v1004 = vsel %vm102, %v996, %v1002
    %v1005 = vtanh.pop %v1004
    %v1006 = vadd.f32 %v1005, 1.0
    %v1007 = vmul.f32 %v1006, 0.5
    %v1008 = vsel %vm102, %v1005, %v1007
    %v1009 = vmul.f32 %v1008, %v901
    %1011 = vrot.lane.b32.xlu0 %v1008, 64
    %v1012 = vpop.permute.xlu0 %1011
    %v1014 = vmul.f32 %v1008, %v1012
    %1016 = vrot.lane.b32.xlu0 %v1014, 32
    %v1017 = vpop.permute.xlu0 %1016
    %v1019 = vadd.f32 %v1009, %v1017
    %v1020 = vtanh.pop %v1019
    %1022 = vrot.lane.b32.xlu0 %v1020, 64
    %v1023 = vpop.permute.xlu0 %1022
    %v1025 = vmul.f32 %v1008, %v1023
    %1027 = vrot.lane.b32.xlu0 %v1025, 32
    %v1028 = vpop.permute.xlu0 %1027
    %v1029 = vsel %vm202, %v1028, 0
    %1031 = vmatprep.subr.mxu0 0.0
    %1032 = vmatpush1.msra.mxu0 0.0
    %1033 = vmatprep.subr.mxu0 0.0
    %1034 = vmatpush1.msra.mxu0 0.0
    %1035 = vmatprep.subr.mxu0 0.0
    %1036 = vmatpush1.msra.mxu0 0.0
    %1037 = vmatprep.subr.mxu0 0.0
    %1038 = vmatpush1.msra.mxu0 0.0
    %1039 = vmatprep.subr.mxu0 0.0
    %1040 = vmatpush1.msra.mxu0 0.0
    %1041 = vmatprep.subr.mxu0 0.0
    %1042 = vmatpush1.msra.mxu0 0.0
    %1043 = vmatprep.subr.mxu0 0.0
    %1044 = vmatpush1.msra.mxu0 0.0
    %1045 = vmatprep.subr.mxu0 0.0
    %1046 = vmatpush1.msra.mxu0 0.0
    %1047 = vmatprep.subr.mxu0 0.0
    %1048 = vmatpush1.msra.mxu0 0.0
    %1049 = vmatprep.subr.mxu0 0.0
    %1050 = vmatpush1.msra.mxu0 0.0
    %1051 = vmatprep.subr.mxu0 0.0
    %1052 = vmatpush1.msra.mxu0 0.0
    %1053 = vmatprep.subr.mxu0 0.0
    %1054 = vmatpush1.msra.mxu0 0.0
    %1055 = vmatprep.subr.mxu0 0.0
    %1056 = vmatpush1.msra.mxu0 %v199
    %1057 = vmatprep.subr.mxu0 0.0
    %1058 = vmatpush1.msra.mxu0 %v198
    %1059 = vmatprep.subr.mxu0 0.0
    %1060 = vmatpush1.msra.mxu0 %v197
    %1061 = vmatprep.subr.mxu0 0.0
    %1062 = vmatpush1.msra.mxu0 %v196
    %1063 = vmatprep.subr.mxu0 0.0
    %1064 = vmatpush2.msra.mxu0 0.0
    %1065 = vmatprep.subr.mxu0 0.0
    %1066 = vmatpush2.msra.mxu0 0.0
    %1067 = vmatprep.subr.mxu0 0.0
    %1068 = vmatpush2.msra.mxu0 0.0
    %1069 = vmatprep.subr.mxu0 0.0
    %1070 = vmatpush2.msra.mxu0 0.0
    %1071 = vmatprep.subr.mxu0 0.0
    %1072 = vmatpush2.msra.mxu0 0.0
    %1073 = vmatprep.subr.mxu0 0.0
    %1074 = vmatpush2.msra.mxu0 0.0
    %1075 = vmatprep.subr.mxu0 0.0
    %1076 = vmatpush2.msra.mxu0 0.0
    %1077 = vmatprep.subr.mxu0 0.0
    %1078 = vmatpush2.msra.mxu0 0.0
    %1079 = vmatprep.subr.mxu0 0.0
    %1080 = vmatpush2.msra.mxu0 0.0
    %1081 = vmatprep.subr.mxu0 0.0
    %1082 = vmatpush2.msra.mxu0 0.0
    %1083 = vmatprep.subr.mxu0 0.0
    %1084 = vmatpush2.msra.mxu0 0.0
    %1085 = vmatprep.subr.mxu0 0.0
    %1086 = vmatpush2.msra.mxu0 0.0
    %1087 = vmatprep.subr.mxu0 0.0
    %1088 = vmatpush2.msra.mxu0 0.0
    %1089 = vmatprep.subr.mxu0 0.0
    %1090 = vmatpush2.msra.mxu0 0.0
    %1091 = vmatprep.subr.mxu0 0.0
    %1092 = vmatpush2.msra.mxu0 0.0
    %1093 = vmatprep.subr.mxu0 0.0
    %1094 = vmatpush2.msra.mxu0 0.0
    %1095 = vmatprep.mubr.f32.mxu0 0.0
    %1096 = vmatmul.mubr.f32.gmra.mxu0 %v1029
    %v1097 = vpop.f32.mrf.mxu0
    %v1098 = vadd.f32 0.0, %v1097
    %v1099 = vpop.f32.mrf.mxu0
    %1100 = vdwg.mxu0
    %v1102 = vrot.slane %v1098, 1
    %v1103 = vrot.slane %v1098, 2
    %v1106 = vadd.f32 %v188, %v1102
    %v1107 = vadd.f32 %v193, %v1103
    %v1108 = vmul.f32 %v1106, 0.5
    %v1109 = vmul.f32 %v1107, 0.5
    %v1112 = vrot.slane %v1106, 7
    %v1113 = vrot.slane %v1107, 6
    %v1114 = vsel %vm287, %v1113, %v1112
    %v1118 = vrot.slane %v1108, 7
    %v1119 = vrot.slane %v1109, 6
    %v1120 = vsel %vm287, %v1119, %v1118
    %v1122 = vsel %vm102, %v1114, %v1120
    %v1123 = vtanh.pop %v1122
    %v1124 = vadd.f32 %v1123, 1.0
    %v1125 = vmul.f32 %v1124, 0.5
    %v1126 = vsel %vm102, %v1123, %v1125
    %v1127 = vmul.f32 %v1126, %v1019
    %1129 = vrot.lane.b32.xlu0 %v1126, 64
    %v1130 = vpop.permute.xlu0 %1129
    %v1132 = vmul.f32 %v1126, %v1130
    %1134 = vrot.lane.b32.xlu0 %v1132, 32
    %v1135 = vpop.permute.xlu0 %1134
    %v1137 = vadd.f32 %v1127, %v1135
    %v1138 = vtanh.pop %v1137
    %1140 = vrot.lane.b32.xlu0 %v1138, 64
    %v1141 = vpop.permute.xlu0 %1140
    %v1143 = vmul.f32 %v1126, %v1141
    %v1145 = vunpack.c.l.s4 1966171168
    %v1146 = vunpack.c.0.s8 %v1145
    %v1147 = vlaneseq
    %v1148 = vshrl.u32 %v1147, 7
    %v1149 = vsub.s32 %v1146, %v1148
    %v1150 = vrot.slane %v320, %v1149
    %v1151 = vcombine.high %v1150, %v1150
    %v1153 = vunpack.c.l.s4 1966171168
    %v1154 = vunpack.c.0.s8 %v1153
    %v1155 = vlaneseq
    %v1156 = vshrl.u32 %v1155, 7
    %v1157 = vsub.s32 %v1154, %v1156
    %v1158 = vrot.slane %v1150, %v1157
    %v1160 = vunpack.c.l.s4 1966171168
    %v1161 = vunpack.c.0.s8 %v1160
    %v1162 = vlaneseq
    %v1163 = vshrl.u32 %v1162, 7
    %v1164 = vsub.s32 %v1161, %v1163
    %v1165 = vrot.slane %v1151, %v1164
    %v1169 = vunpack.c.l.s4 1966171168
    %v1170 = vunpack.c.0.s8 %v1169
    %v1171 = vlaneseq
    %v1172 = vshrl.u32 %v1171, 7
    %v1173 = vsub.s32 %v1170, %v1172
    %v1174 = vrot.slane %v435, %v1173
    %v1175 = vcombine.high %v1174, %v1174
    %v1177 = vunpack.c.l.s4 1966171168
    %v1178 = vunpack.c.0.s8 %v1177
    %v1179 = vlaneseq
    %v1180 = vshrl.u32 %v1179, 7
    %v1181 = vsub.s32 %v1178, %v1180
    %v1182 = vrot.slane %v1174, %v1181
    %v1184 = vunpack.c.l.s4 1966171168
    %v1185 = vunpack.c.0.s8 %v1184
    %v1186 = vlaneseq
    %v1187 = vshrl.u32 %v1186, 7
    %v1188 = vsub.s32 %v1185, %v1187
    %v1189 = vrot.slane %v1175, %v1188
    %v1191 = vunpack.c.l.s4 1966171168
    %v1192 = vunpack.c.0.s8 %v1191
    %v1193 = vlaneseq
    %v1194 = vshrl.u32 %v1193, 7
    %v1195 = vsub.s32 %v1192, %v1194
    %v1196 = vrot.slane %v553, %v1195
    %v1197 = vcombine.high %v1196, %v1196
    %v1199 = vunpack.c.l.s4 1966171168
    %v1200 = vunpack.c.0.s8 %v1199
    %v1201 = vlaneseq
    %v1202 = vshrl.u32 %v1201, 7
    %v1203 = vsub.s32 %v1200, %v1202
    %v1204 = vrot.slane %v1196, %v1203
    %v1206 = vunpack.c.l.s4 1966171168
    %v1207 = vunpack.c.0.s8 %v1206
    %v1208 = vlaneseq
    %v1209 = vshrl.u32 %v1208, 7
    %v1210 = vsub.s32 %v1207, %v1209
    %v1211 = vrot.slane %v1197, %v1210
    %v1213 = vunpack.c.l.s4 1966171168
    %v1214 = vunpack.c.0.s8 %v1213
    %v1215 = vlaneseq
    %v1216 = vshrl.u32 %v1215, 7
    %v1217 = vsub.s32 %v1214, %v1216
    %v1218 = vrot.slane %v671, %v1217
    %v1219 = vcombine.high %v1218, %v1218
    %v1221 = vunpack.c.l.s4 1966171168
    %v1222 = vunpack.c.0.s8 %v1221
    %v1223 = vlaneseq
    %v1224 = vshrl.u32 %v1223, 7
    %v1225 = vsub.s32 %v1222, %v1224
    %v1226 = vrot.slane %v1218, %v1225
    %v1228 = vunpack.c.l.s4 1966171168
    %v1229 = vunpack.c.0.s8 %v1228
    %v1230 = vlaneseq
    %v1231 = vshrl.u32 %v1230, 7
    %v1232 = vsub.s32 %v1229, %v1231
    %v1233 = vrot.slane %v1219, %v1232
    %v1235 = vunpack.c.l.s4 1966171168
    %v1236 = vunpack.c.0.s8 %v1235
    %v1237 = vlaneseq
    %v1238 = vshrl.u32 %v1237, 7
    %v1239 = vsub.s32 %v1236, %v1238
    %v1240 = vrot.slane %v789, %v1239
    %v1241 = vcombine.high %v1240, %v1240
    %v1243 = vunpack.c.l.s4 1966171168
    %v1244 = vunpack.c.0.s8 %v1243
    %v1245 = vlaneseq
    %v1246 = vshrl.u32 %v1245, 7
    %v1247 = vsub.s32 %v1244, %v1246
    %v1248 = vrot.slane %v1240, %v1247
    %v1250 = vunpack.c.l.s4 1966171168
    %v1251 = vunpack.c.0.s8 %v1250
    %v1252 = vlaneseq
    %v1253 = vshrl.u32 %v1252, 7
    %v1254 = vsub.s32 %v1251, %v1253
    %v1255 = vrot.slane %v1241, %v1254
    %v1257 = vunpack.c.l.s4 1966171168
    %v1258 = vunpack.c.0.s8 %v1257
    %v1259 = vlaneseq
    %v1260 = vshrl.u32 %v1259, 7
    %v1261 = vsub.s32 %v1258, %v1260
    %v1262 = vrot.slane %v907, %v1261
    %v1263 = vcombine.high %v1262, %v1262
    %v1265 = vunpack.c.l.s4 1966171168
    %v1266 = vunpack.c.0.s8 %v1265
    %v1267 = vlaneseq
    %v1268 = vshrl.u32 %v1267, 7
    %v1269 = vsub.s32 %v1266, %v1268
    %v1270 = vrot.slane %v1262, %v1269
    %v1272 = vunpack.c.l.s4 1966171168
    %v1273 = vunpack.c.0.s8 %v1272
    %v1274 = vlaneseq
    %v1275 = vshrl.u32 %v1274, 7
    %v1276 = vsub.s32 %v1273, %v1275
    %v1277 = vrot.slane %v1263, %v1276
    %v1279 = vunpack.c.l.s4 1966171168
    %v1280 = vunpack.c.0.s8 %v1279
    %v1281 = vlaneseq
    %v1282 = vshrl.u32 %v1281, 7
    %v1283 = vsub.s32 %v1280, %v1282
    %v1284 = vrot.slane %v1025, %v1283
    %v1285 = vcombine.high %v1284, %v1284
    %v1287 = vunpack.c.l.s4 1966171168
    %v1288 = vunpack.c.0.s8 %v1287
    %v1289 = vlaneseq
    %v1290 = vshrl.u32 %v1289, 7
    %v1291 = vsub.s32 %v1288, %v1290
    %v1292 = vrot.slane %v1284, %v1291
    %v1294 = vunpack.c.l.s4 1966171168
    %v1295 = vunpack.c.0.s8 %v1294
    %v1296 = vlaneseq
    %v1297 = vshrl.u32 %v1296, 7
    %v1298 = vsub.s32 %v1295, %v1297
    %v1299 = vrot.slane %v1285, %v1298
    %v1302 = vunpack.c.l.s4 1966171168
    %v1303 = vunpack.c.0.s8 %v1302
    %v1304 = vlaneseq
    %v1305 = vshrl.u32 %v1304, 7
    %v1306 = vsub.s32 %v1303, %v1305
    %v1307 = vrot.slane %v1143, %v1306
    %v1308 = vcombine.high %v1307, %v1307
    %v1310 = vunpack.c.l.s4 1966171168
    %v1311 = vunpack.c.0.s8 %v1310
    %v1312 = vlaneseq
    %v1313 = vshrl.u32 %v1312, 7
    %v1314 = vsub.s32 %v1311, %v1313
    %v1315 = vrot.slane %v1307, %v1314
    %v1317 = vunpack.c.l.s4 1966171168
    %v1318 = vunpack.c.0.s8 %v1317
    %v1319 = vlaneseq
    %v1320 = vshrl.u32 %v1319, 7
    %v1321 = vsub.s32 %v1318, %v1320
    %v1322 = vrot.slane %v1308, %v1321
    %v1323 = vlaneseq
    %v1324 = vshrl.u32 %v1323, 7
    %v1325 = vsub.s32 0, %v1324
    %v1326 = vrot.slane %v1182, %v1325
    %v1327 = vlaneseq
    %v1328 = vshrl.u32 %v1327, 7
    %v1329 = vsub.s32 0, %v1328
    %v1330 = vrot.slane %v1189, %v1329
    %v1333 = vlaneseq
    %v1334 = vshrl.u32 %v1333, 7
    %v1335 = vsub.s32 0, %v1334
    %v1336 = vrot.slane %v1204, %v1335
    %v1337 = vlaneseq
    %v1338 = vshrl.u32 %v1337, 7
    %v1339 = vsub.s32 0, %v1338
    %v1340 = vrot.slane %v1211, %v1339
    %v1343 = vlaneseq
    %v1344 = vshrl.u32 %v1343, 7
    %v1345 = vsub.s32 0, %v1344
    %v1346 = vrot.slane %v1226, %v1345
    %v1347 = vlaneseq
    %v1348 = vshrl.u32 %v1347, 7
    %v1349 = vsub.s32 0, %v1348
    %v1350 = vrot.slane %v1233, %v1349
    %v1353 = vlaneseq
    %v1354 = vshrl.u32 %v1353, 7
    %v1355 = vsub.s32 0, %v1354
    %v1356 = vrot.slane %v1248, %v1355
    %v1357 = vlaneseq
    %v1358 = vshrl.u32 %v1357, 7
    %v1359 = vsub.s32 0, %v1358
    %v1360 = vrot.slane %v1255, %v1359
    %v1363 = vlaneseq
    %v1364 = vshrl.u32 %v1363, 7
    %v1365 = vsub.s32 0, %v1364
    %v1366 = vrot.slane %v1270, %v1365
    %v1367 = vlaneseq
    %v1368 = vshrl.u32 %v1367, 7
    %v1369 = vsub.s32 0, %v1368
    %v1370 = vrot.slane %v1277, %v1369
    %v1373 = vlaneseq
    %v1374 = vshrl.u32 %v1373, 7
    %v1375 = vsub.s32 0, %v1374
    %v1376 = vrot.slane %v1292, %v1375
    %v1377 = vlaneseq
    %v1378 = vshrl.u32 %v1377, 7
    %v1379 = vsub.s32 0, %v1378
    %v1380 = vrot.slane %v1299, %v1379
    %v1383 = vlaneseq
    %v1384 = vshrl.u32 %v1383, 7
    %v1385 = vsub.s32 0, %v1384
    %v1386 = vrot.slane %v1315, %v1385
    %v1387 = vlaneseq
    %v1388 = vshrl.u32 %v1387, 7
    %v1389 = vsub.s32 0, %v1388
    %v1390 = vrot.slane %v1322, %v1389
    %vm1393 = vcmask 1040384
    %v1394 = vsel %vm1393, %v1158, %v1326
    %v1395 = vsel %vm1393, %v1165, %v1330
    %vm1396 = vcmask 1041408
    %v1397 = vsel %vm1396, %v1394, %v1336
    %v1398 = vsel %vm1396, %v1395, %v1340
    %vm1399 = vcmask 1042432
    %v1400 = vsel %vm1399, %v1397, %v1346
    %v1401 = vsel %vm1399, %v1398, %v1350
    %vm1402 = vcmask 1043456
    %v1403 = vsel %vm1402, %v1400, %v1356
    %v1404 = vsel %vm1402, %v1401, %v1360
    %vm1405 = vcmask 1044480
    %v1406 = vsel %vm1405, %v1403, %v1366
    %v1407 = vsel %vm1405, %v1404, %v1370
    %vm1408 = vcmask 1045504
    %v1409 = vsel %vm1408, %v1406, %v1376
    %v1410 = vsel %vm1408, %v1407, %v1380
    %vm1411 = vcmask 1046528
    %v1412 = vsel %vm1411, %v1409, %v1386
    %v1413 = vsel %vm1411, %v1410, %v1390
    %v1414 = vld [vmem:[#allocation7] sm:$0xff]
    %v1415 = vld [vmem:[#allocation7 + $0x8] sm:$0xff]
    %v1416 = vld [vmem:[#allocation7 + $0x10] sm:$0xff]
    %v1417 = vld [vmem:[#allocation7 + $0x18] sm:$0xff]
    %v1418 = vld [vmem:[%s6] sm:$0x1]
    %v1420 = vlaneseq
    %v1421 = vshrl.u32 %v1420, 7
    %v1422 = vsub.s32 0, %v1421
    %v1423 = vrot.slane %v1418, %v1422
    %1427 = vrot.lane.b32.xlu0 %v1412, 32
    %v1428 = vpop.permute.xlu0 %1427
    %1429 = vrot.lane.b32.xlu0 %v1413, 32
    %v1430 = vpop.permute.xlu0 %1429
    %v1431 = vsel %vm202, %v1428, 0
    %v1433 = vsel %vm202, %v1430, 0
    %1435 = vmatprep.subr.mxu0 0.0
    %1436 = vmatpush1.msra.mxu0 0.0
    %1437 = vmatprep.subr.mxu0 0.0
    %1438 = vmatpush1.msra.mxu0 0.0
    %1439 = vmatprep.subr.mxu0 0.0
    %1440 = vmatpush1.msra.mxu0 0.0
    %1441 = vmatprep.subr.mxu0 0.0
    %1442 = vmatpush1.msra.mxu0 0.0
    %1443 = vmatprep.subr.mxu0 0.0
    %1444 = vmatpush1.msra.mxu0 0.0
    %1445 = vmatprep.subr.mxu0 0.0
    %1446 = vmatpush1.msra.mxu0 0.0
    %1447 = vmatprep.subr.mxu0 0.0
    %1448 = vmatpush1.msra.mxu0 0.0
    %1449 = vmatprep.subr.mxu0 0.0
    %1450 = vmatpush1.msra.mxu0 0.0
    %1451 = vmatprep.subr.mxu0 0.0
    %1452 = vmatpush1.msra.mxu0 0.0
    %1453 = vmatprep.subr.mxu0 0.0
    %1454 = vmatpush1.msra.mxu0 0.0
    %1455 = vmatprep.subr.mxu0 0.0
    %1456 = vmatpush1.msra.mxu0 0.0
    %1457 = vmatprep.subr.mxu0 0.0
    %1458 = vmatpush1.msra.mxu0 0.0
    %1459 = vmatprep.subr.mxu0 0.0
    %1460 = vmatpush1.msra.mxu0 %v1417
    %1461 = vmatprep.subr.mxu0 0.0
    %1462 = vmatpush1.msra.mxu0 %v1416
    %1463 = vmatprep.subr.mxu0 0.0
    %1464 = vmatpush1.msra.mxu0 %v1415
    %1465 = vmatprep.subr.mxu0 0.0
    %1466 = vmatpush1.msra.mxu0 %v1414
    %1467 = vmatprep.subr.mxu0 0.0
    %1468 = vmatpush2.msra.mxu0 0.0
    %1469 = vmatprep.subr.mxu0 0.0
    %1470 = vmatpush2.msra.mxu0 0.0
    %1471 = vmatprep.subr.mxu0 0.0
    %1472 = vmatpush2.msra.mxu0 0.0
    %1473 = vmatprep.subr.mxu0 0.0
    %1474 = vmatpush2.msra.mxu0 0.0
    %1475 = vmatprep.subr.mxu0 0.0
    %1476 = vmatpush2.msra.mxu0 0.0
    %1477 = vmatprep.subr.mxu0 0.0
    %1478 = vmatpush2.msra.mxu0 0.0
    %1479 = vmatprep.subr.mxu0 0.0
    %1480 = vmatpush2.msra.mxu0 0.0
    %1481 = vmatprep.subr.mxu0 0.0
    %1482 = vmatpush2.msra.mxu0 0.0
    %1483 = vmatprep.subr.mxu0 0.0
    %1484 = vmatpush2.msra.mxu0 0.0
    %1485 = vmatprep.subr.mxu0 0.0
    %1486 = vmatpush2.msra.mxu0 0.0
    %1487 = vmatprep.subr.mxu0 0.0
    %1488 = vmatpush2.msra.mxu0 0.0
    %1489 = vmatprep.subr.mxu0 0.0
    %1490 = vmatpush2.msra.mxu0 0.0
    %1491 = vmatprep.subr.mxu0 0.0
    %1492 = vmatpush2.msra.mxu0 0.0
    %1493 = vmatprep.subr.mxu0 0.0
    %1494 = vmatpush2.msra.mxu0 0.0
    %1495 = vmatprep.subr.mxu0 0.0
    %1496 = vmatpush2.msra.mxu0 0.0
    %1497 = vmatprep.subr.mxu0 0.0
    %1498 = vmatpush2.msra.mxu0 0.0
    %1499 = vmatprep.mubr.f32.mxu0 0.0
    %1500 = vmatmul.mubr.f32.gmra.mxu0 %v1431
    %v1501 = vpop.f32.mrf.mxu0
    %v1502 = vadd.f32 %v1423, %v1501
    %v1503 = vpop.f32.mrf.mxu0
    %1504 = vmatprep.mubr.f32.mxu0 0.0
    %1505 = vmatmul.mubr.f32.gmra.mxu0 %v1433
    %v1506 = vpop.f32.mrf.mxu0
    %v1507 = vadd.f32 %v1423, %v1506
    %v1508 = vpop.f32.mrf.mxu0
    %1509 = vdwg.mxu0
    %v1510 = vld [vmem:[#allocation8] sm:$0xff]
    %v1511 = vld [vmem:[#allocation8 + $0x8] sm:$0xff]
    %v1512 = vld [vmem:[#allocation8 + $0x10] sm:$0xff]
    %v1513 = vld [vmem:[#allocation8 + $0x18] sm:$0xff]
    %s1514 = scalar_lea.vmem %s9, 2
    %v1515 = vld [vmem:[%s1514] sm:$0x3]
    %s1516 = scalar_lea.vmem %s10, 2
    %v1517 = vld [vmem:[%s1516] sm:$0x3]
    %v1519 = vsel %vm202, %v1515, 0
    %1521 = vmatprep.subr.mxu0 0.0
    %1522 = vmatpush1.msra.mxu0 0.0
    %1523 = vmatprep.subr.mxu0 0.0
    %1524 = vmatpush1.msra.mxu0 0.0
    %1525 = vmatprep.subr.mxu0 0.0
    %1526 = vmatpush1.msra.mxu0 0.0
    %1527 = vmatprep.subr.mxu0 0.0
    %1528 = vmatpush1.msra.mxu0 0.0
    %1529 = vmatprep.subr.mxu0 0.0
    %1530 = vmatpush1.msra.mxu0 0.0
    %1531 = vmatprep.subr.mxu0 0.0
    %1532 = vmatpush1.msra.mxu0 0.0
    %1533 = vmatprep.subr.mxu0 0.0
    %1534 = vmatpush1.msra.mxu0 0.0
    %1535 = vmatprep.subr.mxu0 0.0
    %1536 = vmatpush1.msra.mxu0 0.0
    %1537 = vmatprep.subr.mxu0 0.0
    %1538 = vmatpush1.msra.mxu0 0.0
    %1539 = vmatprep.subr.mxu0 0.0
    %1540 = vmatpush1.msra.mxu0 0.0
    %1541 = vmatprep.subr.mxu0 0.0
    %1542 = vmatpush1.msra.mxu0 0.0
    %1543 = vmatprep.subr.mxu0 0.0
    %1544 = vmatpush1.msra.mxu0 0.0
    %1545 = vmatprep.subr.mxu0 0.0
    %1546 = vmatpush1.msra.mxu0 %v1513
    %1547 = vmatprep.subr.mxu0 0.0
    %1548 = vmatpush1.msra.mxu0 %v1512
    %1549 = vmatprep.subr.mxu0 0.0
    %1550 = vmatpush1.msra.mxu0 %v1511
    %1551 = vmatprep.subr.mxu0 0.0
    %1552 = vmatpush1.msra.mxu0 %v1510
    %1553 = vmatprep.subr.mxu0 0.0
    %1554 = vmatpush2.msra.mxu0 0.0
    %1555 = vmatprep.subr.mxu0 0.0
    %1556 = vmatpush2.msra.mxu0 0.0
    %1557 = vmatprep.subr.mxu0 0.0
    %1558 = vmatpush2.msra.mxu0 0.0
    %1559 = vmatprep.subr.mxu0 0.0
    %1560 = vmatpush2.msra.mxu0 0.0
    %1561 = vmatprep.subr.mxu0 0.0
    %1562 = vmatpush2.msra.mxu0 0.0
    %1563 = vmatprep.subr.mxu0 0.0
    %1564 = vmatpush2.msra.mxu0 0.0
    %1565 = vmatprep.subr.mxu0 0.0
    %1566 = vmatpush2.msra.mxu0 0.0
    %1567 = vmatprep.subr.mxu0 0.0
    %1568 = vmatpush2.msra.mxu0 0.0
    %1569 = vmatprep.subr.mxu0 0.0
    %1570 = vmatpush2.msra.mxu0 0.0
    %1571 = vmatprep.subr.mxu0 0.0
    %1572 = vmatpush2.msra.mxu0 0.0
    %1573 = vmatprep.subr.mxu0 0.0
    %1574 = vmatpush2.msra.mxu0 0.0
    %1575 = vmatprep.subr.mxu0 0.0
    %1576 = vmatpush2.msra.mxu0 0.0
    %1577 = vmatprep.subr.mxu0 0.0
    %1578 = vmatpush2.msra.mxu0 0.0
    %1579 = vmatprep.subr.mxu0 0.0
    %1580 = vmatpush2.msra.mxu0 0.0
    %1581 = vmatprep.subr.mxu0 0.0
    %1582 = vmatpush2.msra.mxu0 0.0
    %1583 = vmatprep.subr.mxu0 0.0
    %1584 = vmatpush2.msra.mxu0 0.0
    %1585 = vmatprep.mubr.f32.mxu0 0.0
    %1586 = vmatmul.mubr.f32.gmra.mxu0 %v1519
    %v1587 = vpop.f32.mrf.mxu0
    %v1588 = vadd.f32 0.0, %v1587
    %v1589 = vpop.f32.mrf.mxu0
    %1590 = vdwg.mxu0
    %v1592 = vrot.slane %v1588, 1
    %v1595 = vadd.f32 %v1502, %v1588
    %v1596 = vadd.f32 %v1507, %v1592
    %v1597 = vmul.f32 %v1595, 0.5
    %v1598 = vmul.f32 %v1596, 0.5
    %v1601 = vrot.slane %v1596, 7
    %v1602 = vsel %vm287, %v1601, %v1595
    %v1606 = vrot.slane %v1598, 7
    %v1607 = vsel %vm287, %v1606, %v1597
    %v1609 = vsel %vm102, %v1602, %v1607
    %v1610 = vtanh.pop %v1609
    %v1611 = vadd.f32 %v1610, 1.0
    %v1612 = vmul.f32 %v1611, 0.5
    %v1613 = vsel %vm102, %v1610, %v1612
    %1615 = vrot.lane.b32.xlu0 %v1517, 32
    %v1616 = vpop.permute.xlu0 %1615
    %v1618 = vmul.f32 %v1613, %v1616
    %1620 = vrot.lane.b32.xlu0 %v1613, 64
    %v1621 = vpop.permute.xlu0 %1620
    %v1623 = vmul.f32 %v1613, %v1621
    %1625 = vrot.lane.b32.xlu0 %v1623, 32
    %v1626 = vpop.permute.xlu0 %1625
    %v1628 = vadd.f32 %v1618, %v1626
    %v1629 = vtanh.pop %v1628
    %1631 = vrot.lane.b32.xlu0 %v1629, 64
    %v1632 = vpop.permute.xlu0 %1631
    %v1634 = vmul.f32 %v1613, %v1632
    %1636 = vrot.lane.b32.xlu0 %v1634, 32
    %v1637 = vpop.permute.xlu0 %1636
    %v1638 = vsel %vm202, %v1637, 0
    %1640 = vmatprep.subr.mxu0 0.0
    %1641 = vmatpush1.msra.mxu0 0.0
    %1642 = vmatprep.subr.mxu0 0.0
    %1643 = vmatpush1.msra.mxu0 0.0
    %1644 = vmatprep.subr.mxu0 0.0
    %1645 = vmatpush1.msra.mxu0 0.0
    %1646 = vmatprep.subr.mxu0 0.0
    %1647 = vmatpush1.msra.mxu0 0.0
    %1648 = vmatprep.subr.mxu0 0.0
    %1649 = vmatpush1.msra.mxu0 0.0
    %1650 = vmatprep.subr.mxu0 0.0
    %1651 = vmatpush1.msra.mxu0 0.0
    %1652 = vmatprep.subr.mxu0 0.0
    %1653 = vmatpush1.msra.mxu0 0.0
    %1654 = vmatprep.subr.mxu0 0.0
    %1655 = vmatpush1.msra.mxu0 0.0
    %1656 = vmatprep.subr.mxu0 0.0
    %1657 = vmatpush1.msra.mxu0 0.0
    %1658 = vmatprep.subr.mxu0 0.0
    %1659 = vmatpush1.msra.mxu0 0.0
    %1660 = vmatprep.subr.mxu0 0.0
    %1661 = vmatpush1.msra.mxu0 0.0
    %1662 = vmatprep.subr.mxu0 0.0
    %1663 = vmatpush1.msra.mxu0 0.0
    %1664 = vmatprep.subr.mxu0 0.0
    %1665 = vmatpush1.msra.mxu0 %v1513
    %1666 = vmatprep.subr.mxu0 0.0
    %1667 = vmatpush1.msra.mxu0 %v1512
    %1668 = vmatprep.subr.mxu0 0.0
    %1669 = vmatpush1.msra.mxu0 %v1511
    %1670 = vmatprep.subr.mxu0 0.0
    %1671 = vmatpush1.msra.mxu0 %v1510
    %1672 = vmatprep.subr.mxu0 0.0
    %1673 = vmatpush2.msra.mxu0 0.0
    %1674 = vmatprep.subr.mxu0 0.0
    %1675 = vmatpush2.msra.mxu0 0.0
    %1676 = vmatprep.subr.mxu0 0.0
    %1677 = vmatpush2.msra.mxu0 0.0
    %1678 = vmatprep.subr.mxu0 0.0
    %1679 = vmatpush2.msra.mxu0 0.0
    %1680 = vmatprep.subr.mxu0 0.0
    %1681 = vmatpush2.msra.mxu0 0.0
    %1682 = vmatprep.subr.mxu0 0.0
    %1683 = vmatpush2.msra.mxu0 0.0
    %1684 = vmatprep.subr.mxu0 0.0
    %1685 = vmatpush2.msra.mxu0 0.0
    %1686 = vmatprep.subr.mxu0 0.0
    %1687 = vmatpush2.msra.mxu0 0.0
    %1688 = vmatprep.subr.mxu0 0.0
    %1689 = vmatpush2.msra.mxu0 0.0
    %1690 = vmatprep.subr.mxu0 0.0
    %1691 = vmatpush2.msra.mxu0 0.0
    %1692 = vmatprep.subr.mxu0 0.0
    %1693 = vmatpush2.msra.mxu0 0.0
    %1694 = vmatprep.subr.mxu0 0.0
    %1695 = vmatpush2.msra.mxu0 0.0
    %1696 = vmatprep.subr.mxu0 0.0
    %1697 = vmatpush2.msra.mxu0 0.0
    %1698 = vmatprep.subr.mxu0 0.0
    %1699 = vmatpush2.msra.mxu0 0.0
    %1700 = vmatprep.subr.mxu0 0.0
    %1701 = vmatpush2.msra.mxu0 0.0
    %1702 = vmatprep.subr.mxu0 0.0
    %1703 = vmatpush2.msra.mxu0 0.0
    %1704 = vmatprep.mubr.f32.mxu0 0.0
    %1705 = vmatmul.mubr.f32.gmra.mxu0 %v1638
    %v1706 = vpop.f32.mrf.mxu0
    %v1707 = vadd.f32 0.0, %v1706
    %v1708 = vpop.f32.mrf.mxu0
    %1709 = vdwg.mxu0
    %v1711 = vrot.slane %v1707, 7
    %v1714 = vadd.f32 %v1502, %v1711
    %v1715 = vadd.f32 %v1507, %v1707
    %v1716 = vmul.f32 %v1714, 0.5
    %v1717 = vmul.f32 %v1715, 0.5
    %v1720 = vrot.slane %v1714, 1
    %v1721 = vsel %vm287, %v1715, %v1720
    %v1725 = vrot.slane %v1716, 1
    %v1726 = vsel %vm287, %v1717, %v1725
    %v1728 = vsel %vm102, %v1721, %v1726
    %v1729 = vtanh.pop %v1728
    %v1730 = vadd.f32 %v1729, 1.0
    %v1731 = vmul.f32 %v1730, 0.5
    %v1732 = vsel %vm102, %v1729, %v1731
    %v1733 = vmul.f32 %v1732, %v1628
    %1735 = vrot.lane.b32.xlu0 %v1732, 64
    %v1736 = vpop.permute.xlu0 %1735
    %v1738 = vmul.f32 %v1732, %v1736
    %1740 = vrot.lane.b32.xlu0 %v1738, 32
    %v1741 = vpop.permute.xlu0 %1740
    %v1743 = vadd.f32 %v1733, %v1741
    %v1744 = vtanh.pop %v1743
    %1746 = vrot.lane.b32.xlu0 %v1744, 64
    %v1747 = vpop.permute.xlu0 %1746
    %v1749 = vmul.f32 %v1732, %v1747
    %1751 = vrot.lane.b32.xlu0 %v1749, 32
    %v1752 = vpop.permute.xlu0 %1751
    %v1753 = vsel %vm202, %v1752, 0
    %1755 = vmatprep.subr.mxu0 0.0
    %1756 = vmatpush1.msra.mxu0 0.0
    %1757 = vmatprep.subr.mxu0 0.0
    %1758 = vmatpush1.msra.mxu0 0.0
    %1759 = vmatprep.subr.mxu0 0.0
    %1760 = vmatpush1.msra.mxu0 0.0
    %1761 = vmatprep.subr.mxu0 0.0
    %1762 = vmatpush1.msra.mxu0 0.0
    %1763 = vmatprep.subr.mxu0 0.0
    %1764 = vmatpush1.msra.mxu0 0.0
    %1765 = vmatprep.subr.mxu0 0.0
    %1766 = vmatpush1.msra.mxu0 0.0
    %1767 = vmatprep.subr.mxu0 0.0
    %1768 = vmatpush1.msra.mxu0 0.0
    %1769 = vmatprep.subr.mxu0 0.0
    %1770 = vmatpush1.msra.mxu0 0.0
    %1771 = vmatprep.subr.mxu0 0.0
    %1772 = vmatpush1.msra.mxu0 0.0
    %1773 = vmatprep.subr.mxu0 0.0
    %1774 = vmatpush1.msra.mxu0 0.0
    %1775 = vmatprep.subr.mxu0 0.0
    %1776 = vmatpush1.msra.mxu0 0.0
    %1777 = vmatprep.subr.mxu0 0.0
    %1778 = vmatpush1.msra.mxu0 0.0
    %1779 = vmatprep.subr.mxu0 0.0
    %1780 = vmatpush1.msra.mxu0 %v1513
    %1781 = vmatprep.subr.mxu0 0.0
    %1782 = vmatpush1.msra.mxu0 %v1512
    %1783 = vmatprep.subr.mxu0 0.0
    %1784 = vmatpush1.msra.mxu0 %v1511
    %1785 = vmatprep.subr.mxu0 0.0
    %1786 = vmatpush1.msra.mxu0 %v1510
    %1787 = vmatprep.subr.mxu0 0.0
    %1788 = vmatpush2.msra.mxu0 0.0
    %1789 = vmatprep.subr.mxu0 0.0
    %1790 = vmatpush2.msra.mxu0 0.0
    %1791 = vmatprep.subr.mxu0 0.0
    %1792 = vmatpush2.msra.mxu0 0.0
    %1793 = vmatprep.subr.mxu0 0.0
    %1794 = vmatpush2.msra.mxu0 0.0
    %1795 = vmatprep.subr.mxu0 0.0
    %1796 = vmatpush2.msra.mxu0 0.0
    %1797 = vmatprep.subr.mxu0 0.0
    %1798 = vmatpush2.msra.mxu0 0.0
    %1799 = vmatprep.subr.mxu0 0.0
    %1800 = vmatpush2.msra.mxu0 0.0
    %1801 = vmatprep.subr.mxu0 0.0
    %1802 = vmatpush2.msra.mxu0 0.0
    %1803 = vmatprep.subr.mxu0 0.0
    %1804 = vmatpush2.msra.mxu0 0.0
    %1805 = vmatprep.subr.mxu0 0.0
    %1806 = vmatpush2.msra.mxu0 0.0
    %1807 = vmatprep.subr.mxu0 0.0
    %1808 = vmatpush2.msra.mxu0 0.0
    %1809 = vmatprep.subr.mxu0 0.0
    %1810 = vmatpush2.msra.mxu0 0.0
    %1811 = vmatprep.subr.mxu0 0.0
    %1812 = vmatpush2.msra.mxu0 0.0
    %1813 = vmatprep.subr.mxu0 0.0
    %1814 = vmatpush2.msra.mxu0 0.0
    %1815 = vmatprep.subr.mxu0 0.0
    %1816 = vmatpush2.msra.mxu0 0.0
    %1817 = vmatprep.subr.mxu0 0.0
    %1818 = vmatpush2.msra.mxu0 0.0
    %1819 = vmatprep.mubr.f32.mxu0 0.0
    %1820 = vmatmul.mubr.f32.gmra.mxu0 %v1753
    %v1821 = vpop.f32.mrf.mxu0
    %v1822 = vadd.f32 0.0, %v1821
    %v1823 = vpop.f32.mrf.mxu0
    %1824 = vdwg.mxu0
    %v1826 = vrot.slane %v1822, 6
    %v1827 = vrot.slane %v1822, 7
    %v1830 = vadd.f32 %v1502, %v1826
    %v1831 = vadd.f32 %v1507, %v1827
    %v1832 = vmul.f32 %v1830, 0.5
    %v1833 = vmul.f32 %v1831, 0.5
    %v1836 = vrot.slane %v1830, 2
    %v1837 = vrot.slane %v1831, 1
    %v1838 = vsel %vm287, %v1837, %v1836
    %v1842 = vrot.slane %v1832, 2
    %v1843 = vrot.slane %v1833, 1
    %v1844 = vsel %vm287, %v1843, %v1842
    %v1846 = vsel %vm102, %v1838, %v1844
    %v1847 = vtanh.pop %v1846
    %v1848 = vadd.f32 %v1847, 1.0
    %v1849 = vmul.f32 %v1848, 0.5
    %v1850 = vsel %vm102, %v1847, %v1849
    %v1851 = vmul.f32 %v1850, %v1743
    %1853 = vrot.lane.b32.xlu0 %v1850, 64
    %v1854 = vpop.permute.xlu0 %1853
    %v1856 = vmul.f32 %v1850, %v1854
    %1858 = vrot.lane.b32.xlu0 %v1856, 32
    %v1859 = vpop.permute.xlu0 %1858
    %v1861 = vadd.f32 %v1851, %v1859
    %v1862 = vtanh.pop %v1861
    %1864 = vrot.lane.b32.xlu0 %v1862, 64
    %v1865 = vpop.permute.xlu0 %1864
    %v1867 = vmul.f32 %v1850, %v1865
    %1869 = vrot.lane.b32.xlu0 %v1867, 32
    %v1870 = vpop.permute.xlu0 %1869
    %v1871 = vsel %vm202, %v1870, 0
    %1873 = vmatprep.subr.mxu0 0.0
    %1874 = vmatpush1.msra.mxu0 0.0
    %1875 = vmatprep.subr.mxu0 0.0
    %1876 = vmatpush1.msra.mxu0 0.0
    %1877 = vmatprep.subr.mxu0 0.0
    %1878 = vmatpush1.msra.mxu0 0.0
    %1879 = vmatprep.subr.mxu0 0.0
    %1880 = vmatpush1.msra.mxu0 0.0
    %1881 = vmatprep.subr.mxu0 0.0
    %1882 = vmatpush1.msra.mxu0 0.0
    %1883 = vmatprep.subr.mxu0 0.0
    %1884 = vmatpush1.msra.mxu0 0.0
    %1885 = vmatprep.subr.mxu0 0.0
    %1886 = vmatpush1.msra.mxu0 0.0
    %1887 = vmatprep.subr.mxu0 0.0
    %1888 = vmatpush1.msra.mxu0 0.0
    %1889 = vmatprep.subr.mxu0 0.0
    %1890 = vmatpush1.msra.mxu0 0.0
    %1891 = vmatprep.subr.mxu0 0.0
    %1892 = vmatpush1.msra.mxu0 0.0
    %1893 = vmatprep.subr.mxu0 0.0
    %1894 = vmatpush1.msra.mxu0 0.0
    %1895 = vmatprep.subr.mxu0 0.0
    %1896 = vmatpush1.msra.mxu0 0.0
    %1897 = vmatprep.subr.mxu0 0.0
    %1898 = vmatpush1.msra.mxu0 %v1513
    %1899 = vmatprep.subr.mxu0 0.0
    %1900 = vmatpush1.msra.mxu0 %v1512
    %1901 = vmatprep.subr.mxu0 0.0
    %1902 = vmatpush1.msra.mxu0 %v1511
    %1903 = vmatprep.subr.mxu0 0.0
    %1904 = vmatpush1.msra.mxu0 %v1510
    %1905 = vmatprep.subr.mxu0 0.0
    %1906 = vmatpush2.msra.mxu0 0.0
    %1907 = vmatprep.subr.mxu0 0.0
    %1908 = vmatpush2.msra.mxu0 0.0
    %1909 = vmatprep.subr.mxu0 0.0
    %1910 = vmatpush2.msra.mxu0 0.0
    %1911 = vmatprep.subr.mxu0 0.0
    %1912 = vmatpush2.msra.mxu0 0.0
    %1913 = vmatprep.subr.mxu0 0.0
    %1914 = vmatpush2.msra.mxu0 0.0
    %1915 = vmatprep.subr.mxu0 0.0
    %1916 = vmatpush2.msra.mxu0 0.0
    %1917 = vmatprep.subr.mxu0 0.0
    %1918 = vmatpush2.msra.mxu0 0.0
    %1919 = vmatprep.subr.mxu0 0.0
    %1920 = vmatpush2.msra.mxu0 0.0
    %1921 = vmatprep.subr.mxu0 0.0
    %1922 = vmatpush2.msra.mxu0 0.0
    %1923 = vmatprep.subr.mxu0 0.0
    %1924 = vmatpush2.msra.mxu0 0.0
    %1925 = vmatprep.subr.mxu0 0.0
    %1926 = vmatpush2.msra.mxu0 0.0
    %1927 = vmatprep.subr.mxu0 0.0
    %1928 = vmatpush2.msra.mxu0 0.0
    %1929 = vmatprep.subr.mxu0 0.0
    %1930 = vmatpush2.msra.mxu0 0.0
    %1931 = vmatprep.subr.mxu0 0.0
    %1932 = vmatpush2.msra.mxu0 0.0
    %1933 = vmatprep.subr.mxu0 0.0
    %1934 = vmatpush2.msra.mxu0 0.0
    %1935 = vmatprep.subr.mxu0 0.0
    %1936 = vmatpush2.msra.mxu0 0.0
    %1937 = vmatprep.mubr.f32.mxu0 0.0
    %1938 = vmatmul.mubr.f32.gmra.mxu0 %v1871
    %v1939 = vpop.f32.mrf.mxu0
    %v1940 = vadd.f32 0.0, %v1939
    %v1941 = vpop.f32.mrf.mxu0
    %1942 = vdwg.mxu0
    %v1944 = vrot.slane %v1940, 5
    %v1945 = vrot.slane %v1940, 6
    %v1948 = vadd.f32 %v1502, %v1944
    %v1949 = vadd.f32 %v1507, %v1945
    %v1950 = vmul.f32 %v1948, 0.5
    %v1951 = vmul.f32 %v1949, 0.5
    %v1954 = vrot.slane %v1948, 3
    %v1955 = vrot.slane %v1949, 2
    %v1956 = vsel %vm287, %v1955, %v1954
    %v1960 = vrot.slane %v1950, 3
    %v1961 = vrot.slane %v1951, 2
    %v1962 = vsel %vm287, %v1961, %v1960
    %v1964 = vsel %vm102, %v1956, %v1962
    %v1965 = vtanh.pop %v1964
    %v1966 = vadd.f32 %v1965, 1.0
    %v1967 = vmul.f32 %v1966, 0.5
    %v1968 = vsel %vm102, %v1965, %v1967
    %v1969 = vmul.f32 %v1968, %v1861
    %1971 = vrot.lane.b32.xlu0 %v1968, 64
    %v1972 = vpop.permute.xlu0 %1971
    %v1974 = vmul.f32 %v1968, %v1972
    %1976 = vrot.lane.b32.xlu0 %v1974, 32
    %v1977 = vpop.permute.xlu0 %1976
    %v1979 = vadd.f32 %v1969, %v1977
    %v1980 = vtanh.pop %v1979
    %1982 = vrot.lane.b32.xlu0 %v1980, 64
    %v1983 = vpop.permute.xlu0 %1982
    %v1985 = vmul.f32 %v1968, %v1983
    %1987 = vrot.lane.b32.xlu0 %v1985, 32
    %v1988 = vpop.permute.xlu0 %1987
    %v1989 = vsel %vm202, %v1988, 0
    %1991 = vmatprep.subr.mxu0 0.0
    %1992 = vmatpush1.msra.mxu0 0.0
    %1993 = vmatprep.subr.mxu0 0.0
    %1994 = vmatpush1.msra.mxu0 0.0
    %1995 = vmatprep.subr.mxu0 0.0
    %1996 = vmatpush1.msra.mxu0 0.0
    %1997 = vmatprep.subr.mxu0 0.0
    %1998 = vmatpush1.msra.mxu0 0.0
    %1999 = vmatprep.subr.mxu0 0.0
    %2000 = vmatpush1.msra.mxu0 0.0
    %2001 = vmatprep.subr.mxu0 0.0
    %2002 = vmatpush1.msra.mxu0 0.0
    %2003 = vmatprep.subr.mxu0 0.0
    %2004 = vmatpush1.msra.mxu0 0.0
    %2005 = vmatprep.subr.mxu0 0.0
    %2006 = vmatpush1.msra.mxu0 0.0
    %2007 = vmatprep.subr.mxu0 0.0
    %2008 = vmatpush1.msra.mxu0 0.0
    %2009 = vmatprep.subr.mxu0 0.0
    %2010 = vmatpush1.msra.mxu0 0.0
    %2011 = vmatprep.subr.mxu0 0.0
    %2012 = vmatpush1.msra.mxu0 0.0
    %2013 = vmatprep.subr.mxu0 0.0
    %2014 = vmatpush1.msra.mxu0 0.0
    %2015 = vmatprep.subr.mxu0 0.0
    %2016 = vmatpush1.msra.mxu0 %v1513
    %2017 = vmatprep.subr.mxu0 0.0
    %2018 = vmatpush1.msra.mxu0 %v1512
    %2019 = vmatprep.subr.mxu0 0.0
    %2020 = vmatpush1.msra.mxu0 %v1511
    %2021 = vmatprep.subr.mxu0 0.0
    %2022 = vmatpush1.msra.mxu0 %v1510
    %2023 = vmatprep.subr.mxu0 0.0
    %2024 = vmatpush2.msra.mxu0 0.0
    %2025 = vmatprep.subr.mxu0 0.0
    %2026 = vmatpush2.msra.mxu0 0.0
    %2027 = vmatprep.subr.mxu0 0.0
    %2028 = vmatpush2.msra.mxu0 0.0
    %2029 = vmatprep.subr.mxu0 0.0
    %2030 = vmatpush2.msra.mxu0 0.0
    %2031 = vmatprep.subr.mxu0 0.0
    %2032 = vmatpush2.msra.mxu0 0.0
    %2033 = vmatprep.subr.mxu0 0.0
    %2034 = vmatpush2.msra.mxu0 0.0
    %2035 = vmatprep.subr.mxu0 0.0
    %2036 = vmatpush2.msra.mxu0 0.0
    %2037 = vmatprep.subr.mxu0 0.0
    %2038 = vmatpush2.msra.mxu0 0.0
    %2039 = vmatprep.subr.mxu0 0.0
    %2040 = vmatpush2.msra.mxu0 0.0
    %2041 = vmatprep.subr.mxu0 0.0
    %2042 = vmatpush2.msra.mxu0 0.0
    %2043 = vmatprep.subr.mxu0 0.0
    %2044 = vmatpush2.msra.mxu0 0.0
    %2045 = vmatprep.subr.mxu0 0.0
    %2046 = vmatpush2.msra.mxu0 0.0
    %2047 = vmatprep.subr.mxu0 0.0
    %2048 = vmatpush2.msra.mxu0 0.0
    %2049 = vmatprep.subr.mxu0 0.0
    %2050 = vmatpush2.msra.mxu0 0.0
    %2051 = vmatprep.subr.mxu0 0.0
    %2052 = vmatpush2.msra.mxu0 0.0
    %2053 = vmatprep.subr.mxu0 0.0
    %2054 = vmatpush2.msra.mxu0 0.0
    %2055 = vmatprep.mubr.f32.mxu0 0.0
    %2056 = vmatmul.mubr.f32.gmra.mxu0 %v1989
    %v2057 = vpop.f32.mrf.mxu0
    %v2058 = vadd.f32 0.0, %v2057
    %v2059 = vpop.f32.mrf.mxu0
    %2060 = vdwg.mxu0
    %v2062 = vrot.slane %v2058, 4
    %v2063 = vrot.slane %v2058, 5
    %v2066 = vadd.f32 %v1502, %v2062
    %v2067 = vadd.f32 %v1507, %v2063
    %v2068 = vmul.f32 %v2066, 0.5
    %v2069 = vmul.f32 %v2067, 0.5
    %v2072 = vrot.slane %v2066, 4
    %v2073 = vrot.slane %v2067, 3
    %v2074 = vsel %vm287, %v2073, %v2072
    %v2078 = vrot.slane %v2068, 4
    %v2079 = vrot.slane %v2069, 3
    %v2080 = vsel %vm287, %v2079, %v2078
    %v2082 = vsel %vm102, %v2074, %v2080
    %v2083 = vtanh.pop %v2082
    %v2084 = vadd.f32 %v2083, 1.0
    %v2085 = vmul.f32 %v2084, 0.5
    %v2086 = vsel %vm102, %v2083, %v2085
    %v2087 = vmul.f32 %v2086, %v1979
    %2089 = vrot.lane.b32.xlu0 %v2086, 64
    %v2090 = vpop.permute.xlu0 %2089
    %v2092 = vmul.f32 %v2086, %v2090
    %2094 = vrot.lane.b32.xlu0 %v2092, 32
    %v2095 = vpop.permute.xlu0 %2094
    %v2097 = vadd.f32 %v2087, %v2095
    %v2098 = vtanh.pop %v2097
    %2100 = vrot.lane.b32.xlu0 %v2098, 64
    %v2101 = vpop.permute.xlu0 %2100
    %v2103 = vmul.f32 %v2086, %v2101
    %2105 = vrot.lane.b32.xlu0 %v2103, 32
    %v2106 = vpop.permute.xlu0 %2105
    %v2107 = vsel %vm202, %v2106, 0
    %2109 = vmatprep.subr.mxu0 0.0
    %2110 = vmatpush1.msra.mxu0 0.0
    %2111 = vmatprep.subr.mxu0 0.0
    %2112 = vmatpush1.msra.mxu0 0.0
    %2113 = vmatprep.subr.mxu0 0.0
    %2114 = vmatpush1.msra.mxu0 0.0
    %2115 = vmatprep.subr.mxu0 0.0
    %2116 = vmatpush1.msra.mxu0 0.0
    %2117 = vmatprep.subr.mxu0 0.0
    %2118 = vmatpush1.msra.mxu0 0.0
    %2119 = vmatprep.subr.mxu0 0.0
    %2120 = vmatpush1.msra.mxu0 0.0
    %2121 = vmatprep.subr.mxu0 0.0
    %2122 = vmatpush1.msra.mxu0 0.0
    %2123 = vmatprep.subr.mxu0 0.0
    %2124 = vmatpush1.msra.mxu0 0.0
    %2125 = vmatprep.subr.mxu0 0.0
    %2126 = vmatpush1.msra.mxu0 0.0
    %2127 = vmatprep.subr.mxu0 0.0
    %2128 = vmatpush1.msra.mxu0 0.0
    %2129 = vmatprep.subr.mxu0 0.0
    %2130 = vmatpush1.msra.mxu0 0.0
    %2131 = vmatprep.subr.mxu0 0.0
    %2132 = vmatpush1.msra.mxu0 0.0
    %2133 = vmatprep.subr.mxu0 0.0
    %2134 = vmatpush1.msra.mxu0 %v1513
    %2135 = vmatprep.subr.mxu0 0.0
    %2136 = vmatpush1.msra.mxu0 %v1512
    %2137 = vmatprep.subr.mxu0 0.0
    %2138 = vmatpush1.msra.mxu0 %v1511
    %2139 = vmatprep.subr.mxu0 0.0
    %2140 = vmatpush1.msra.mxu0 %v1510
    %2141 = vmatprep.subr.mxu0 0.0
    %2142 = vmatpush2.msra.mxu0 0.0
    %2143 = vmatprep.subr.mxu0 0.0
    %2144 = vmatpush2.msra.mxu0 0.0
    %2145 = vmatprep.subr.mxu0 0.0
    %2146 = vmatpush2.msra.mxu0 0.0
    %2147 = vmatprep.subr.mxu0 0.0
    %2148 = vmatpush2.msra.mxu0 0.0
    %2149 = vmatprep.subr.mxu0 0.0
    %2150 = vmatpush2.msra.mxu0 0.0
    %2151 = vmatprep.subr.mxu0 0.0
    %2152 = vmatpush2.msra.mxu0 0.0
    %2153 = vmatprep.subr.mxu0 0.0
    %2154 = vmatpush2.msra.mxu0 0.0
    %2155 = vmatprep.subr.mxu0 0.0
    %2156 = vmatpush2.msra.mxu0 0.0
    %2157 = vmatprep.subr.mxu0 0.0
    %2158 = vmatpush2.msra.mxu0 0.0
    %2159 = vmatprep.subr.mxu0 0.0
    %2160 = vmatpush2.msra.mxu0 0.0
    %2161 = vmatprep.subr.mxu0 0.0
    %2162 = vmatpush2.msra.mxu0 0.0
    %2163 = vmatprep.subr.mxu0 0.0
    %2164 = vmatpush2.msra.mxu0 0.0
    %2165 = vmatprep.subr.mxu0 0.0
    %2166 = vmatpush2.msra.mxu0 0.0
    %2167 = vmatprep.subr.mxu0 0.0
    %2168 = vmatpush2.msra.mxu0 0.0
    %2169 = vmatprep.subr.mxu0 0.0
    %2170 = vmatpush2.msra.mxu0 0.0
    %2171 = vmatprep.subr.mxu0 0.0
    %2172 = vmatpush2.msra.mxu0 0.0
    %2173 = vmatprep.mubr.f32.mxu0 0.0
    %2174 = vmatmul.mubr.f32.gmra.mxu0 %v2107
    %v2175 = vpop.f32.mrf.mxu0
    %v2176 = vadd.f32 0.0, %v2175
    %v2177 = vpop.f32.mrf.mxu0
    %2178 = vdwg.mxu0
    %v2180 = vrot.slane %v2176, 3
    %v2181 = vrot.slane %v2176, 4
    %v2184 = vadd.f32 %v1502, %v2180
    %v2185 = vadd.f32 %v1507, %v2181
    %v2186 = vmul.f32 %v2184, 0.5
    %v2187 = vmul.f32 %v2185, 0.5
    %v2190 = vrot.slane %v2184, 5
    %v2191 = vrot.slane %v2185, 4
    %v2192 = vsel %vm287, %v2191, %v2190
    %v2196 = vrot.slane %v2186, 5
    %v2197 = vrot.slane %v2187, 4
    %v2198 = vsel %vm287, %v2197, %v2196
    %v2200 = vsel %vm102, %v2192, %v2198
    %v2201 = vtanh.pop %v2200
    %v2202 = vadd.f32 %v2201, 1.0
    %v2203 = vmul.f32 %v2202, 0.5
    %v2204 = vsel %vm102, %v2201, %v2203
    %v2205 = vmul.f32 %v2204, %v2097
    %2207 = vrot.lane.b32.xlu0 %v2204, 64
    %v2208 = vpop.permute.xlu0 %2207
    %v2210 = vmul.f32 %v2204, %v2208
    %2212 = vrot.lane.b32.xlu0 %v2210, 32
    %v2213 = vpop.permute.xlu0 %2212
    %v2215 = vadd.f32 %v2205, %v2213
    %v2216 = vtanh.pop %v2215
    %2218 = vrot.lane.b32.xlu0 %v2216, 64
    %v2219 = vpop.permute.xlu0 %2218
    %v2221 = vmul.f32 %v2204, %v2219
    %2223 = vrot.lane.b32.xlu0 %v2221, 32
    %v2224 = vpop.permute.xlu0 %2223
    %v2225 = vsel %vm202, %v2224, 0
    %2227 = vmatprep.subr.mxu0 0.0
    %2228 = vmatpush1.msra.mxu0 0.0
    %2229 = vmatprep.subr.mxu0 0.0
    %2230 = vmatpush1.msra.mxu0 0.0
    %2231 = vmatprep.subr.mxu0 0.0
    %2232 = vmatpush1.msra.mxu0 0.0
    %2233 = vmatprep.subr.mxu0 0.0
    %2234 = vmatpush1.msra.mxu0 0.0
    %2235 = vmatprep.subr.mxu0 0.0
    %2236 = vmatpush1.msra.mxu0 0.0
    %2237 = vmatprep.subr.mxu0 0.0
    %2238 = vmatpush1.msra.mxu0 0.0
    %2239 = vmatprep.subr.mxu0 0.0
    %2240 = vmatpush1.msra.mxu0 0.0
    %2241 = vmatprep.subr.mxu0 0.0
    %2242 = vmatpush1.msra.mxu0 0.0
    %2243 = vmatprep.subr.mxu0 0.0
    %2244 = vmatpush1.msra.mxu0 0.0
    %2245 = vmatprep.subr.mxu0 0.0
    %2246 = vmatpush1.msra.mxu0 0.0
    %2247 = vmatprep.subr.mxu0 0.0
    %2248 = vmatpush1.msra.mxu0 0.0
    %2249 = vmatprep.subr.mxu0 0.0
    %2250 = vmatpush1.msra.mxu0 0.0
    %2251 = vmatprep.subr.mxu0 0.0
    %2252 = vmatpush1.msra.mxu0 %v1513
    %2253 = vmatprep.subr.mxu0 0.0
    %2254 = vmatpush1.msra.mxu0 %v1512
    %2255 = vmatprep.subr.mxu0 0.0
    %2256 = vmatpush1.msra.mxu0 %v1511
    %2257 = vmatprep.subr.mxu0 0.0
    %2258 = vmatpush1.msra.mxu0 %v1510
    %2259 = vmatprep.subr.mxu0 0.0
    %2260 = vmatpush2.msra.mxu0 0.0
    %2261 = vmatprep.subr.mxu0 0.0
    %2262 = vmatpush2.msra.mxu0 0.0
    %2263 = vmatprep.subr.mxu0 0.0
    %2264 = vmatpush2.msra.mxu0 0.0
    %2265 = vmatprep.subr.mxu0 0.0
    %2266 = vmatpush2.msra.mxu0 0.0
    %2267 = vmatprep.subr.mxu0 0.0
    %2268 = vmatpush2.msra.mxu0 0.0
    %2269 = vmatprep.subr.mxu0 0.0
    %2270 = vmatpush2.msra.mxu0 0.0
    %2271 = vmatprep.subr.mxu0 0.0
    %2272 = vmatpush2.msra.mxu0 0.0
    %2273 = vmatprep.subr.mxu0 0.0
    %2274 = vmatpush2.msra.mxu0 0.0
    %2275 = vmatprep.subr.mxu0 0.0
    %2276 = vmatpush2.msra.mxu0 0.0
    %2277 = vmatprep.subr.mxu0 0.0
    %2278 = vmatpush2.msra.mxu0 0.0
    %2279 = vmatprep.subr.mxu0 0.0
    %2280 = vmatpush2.msra.mxu0 0.0
    %2281 = vmatprep.subr.mxu0 0.0
    %2282 = vmatpush2.msra.mxu0 0.0
    %2283 = vmatprep.subr.mxu0 0.0
    %2284 = vmatpush2.msra.mxu0 0.0
    %2285 = vmatprep.subr.mxu0 0.0
    %2286 = vmatpush2.msra.mxu0 0.0
    %2287 = vmatprep.subr.mxu0 0.0
    %2288 = vmatpush2.msra.mxu0 0.0
    %2289 = vmatprep.subr.mxu0 0.0
    %2290 = vmatpush2.msra.mxu0 0.0
    %2291 = vmatprep.mubr.f32.mxu0 0.0
    %2292 = vmatmul.mubr.f32.gmra.mxu0 %v2225
    %v2293 = vpop.f32.mrf.mxu0
    %v2294 = vadd.f32 0.0, %v2293
    %v2295 = vpop.f32.mrf.mxu0
    %2296 = vdwg.mxu0
    %v2298 = vrot.slane %v2294, 2
    %v2299 = vrot.slane %v2294, 3
    %v2302 = vadd.f32 %v1502, %v2298
    %v2303 = vadd.f32 %v1507, %v2299
    %v2304 = vmul.f32 %v2302, 0.5
    %v2305 = vmul.f32 %v2303, 0.5
    %v2308 = vrot.slane %v2302, 6
    %v2309 = vrot.slane %v2303, 5
    %v2310 = vsel %vm287, %v2309, %v2308
    %v2314 = vrot.slane %v2304, 6
    %v2315 = vrot.slane %v2305, 5
    %v2316 = vsel %vm287, %v2315, %v2314
    %v2318 = vsel %vm102, %v2310, %v2316
    %v2319 = vtanh.pop %v2318
    %v2320 = vadd.f32 %v2319, 1.0
    %v2321 = vmul.f32 %v2320, 0.5
    %v2322 = vsel %vm102, %v2319, %v2321
    %v2323 = vmul.f32 %v2322, %v2215
    %2325 = vrot.lane.b32.xlu0 %v2322, 64
    %v2326 = vpop.permute.xlu0 %2325
    %v2328 = vmul.f32 %v2322, %v2326
    %2330 = vrot.lane.b32.xlu0 %v2328, 32
    %v2331 = vpop.permute.xlu0 %2330
    %v2333 = vadd.f32 %v2323, %v2331
    %v2334 = vtanh.pop %v2333
    %2336 = vrot.lane.b32.xlu0 %v2334, 64
    %v2337 = vpop.permute.xlu0 %2336
    %v2339 = vmul.f32 %v2322, %v2337
    %2341 = vrot.lane.b32.xlu0 %v2339, 32
    %v2342 = vpop.permute.xlu0 %2341
    %v2343 = vsel %vm202, %v2342, 0
    %2345 = vmatprep.subr.mxu0 0.0
    %2346 = vmatpush1.msra.mxu0 0.0
    %2347 = vmatprep.subr.mxu0 0.0
    %2348 = vmatpush1.msra.mxu0 0.0
    %2349 = vmatprep.subr.mxu0 0.0
    %2350 = vmatpush1.msra.mxu0 0.0
    %2351 = vmatprep.subr.mxu0 0.0
    %2352 = vmatpush1.msra.mxu0 0.0
    %2353 = vmatprep.subr.mxu0 0.0
    %2354 = vmatpush1.msra.mxu0 0.0
    %2355 = vmatprep.subr.mxu0 0.0
    %2356 = vmatpush1.msra.mxu0 0.0
    %2357 = vmatprep.subr.mxu0 0.0
    %2358 = vmatpush1.msra.mxu0 0.0
    %2359 = vmatprep.subr.mxu0 0.0
    %2360 = vmatpush1.msra.mxu0 0.0
    %2361 = vmatprep.subr.mxu0 0.0
    %2362 = vmatpush1.msra.mxu0 0.0
    %2363 = vmatprep.subr.mxu0 0.0
    %2364 = vmatpush1.msra.mxu0 0.0
    %2365 = vmatprep.subr.mxu0 0.0
    %2366 = vmatpush1.msra.mxu0 0.0
    %2367 = vmatprep.subr.mxu0 0.0
    %2368 = vmatpush1.msra.mxu0 0.0
    %2369 = vmatprep.subr.mxu0 0.0
    %2370 = vmatpush1.msra.mxu0 %v1513
    %2371 = vmatprep.subr.mxu0 0.0
    %2372 = vmatpush1.msra.mxu0 %v1512
    %2373 = vmatprep.subr.mxu0 0.0
    %2374 = vmatpush1.msra.mxu0 %v1511
    %2375 = vmatprep.subr.mxu0 0.0
    %2376 = vmatpush1.msra.mxu0 %v1510
    %2377 = vmatprep.subr.mxu0 0.0
    %2378 = vmatpush2.msra.mxu0 0.0
    %2379 = vmatprep.subr.mxu0 0.0
    %2380 = vmatpush2.msra.mxu0 0.0
    %2381 = vmatprep.subr.mxu0 0.0
    %2382 = vmatpush2.msra.mxu0 0.0
    %2383 = vmatprep.subr.mxu0 0.0
    %2384 = vmatpush2.msra.mxu0 0.0
    %2385 = vmatprep.subr.mxu0 0.0
    %2386 = vmatpush2.msra.mxu0 0.0
    %2387 = vmatprep.subr.mxu0 0.0
    %2388 = vmatpush2.msra.mxu0 0.0
    %2389 = vmatprep.subr.mxu0 0.0
    %2390 = vmatpush2.msra.mxu0 0.0
    %2391 = vmatprep.subr.mxu0 0.0
    %2392 = vmatpush2.msra.mxu0 0.0
    %2393 = vmatprep.subr.mxu0 0.0
    %2394 = vmatpush2.msra.mxu0 0.0
    %2395 = vmatprep.subr.mxu0 0.0
    %2396 = vmatpush2.msra.mxu0 0.0
    %2397 = vmatprep.subr.mxu0 0.0
    %2398 = vmatpush2.msra.mxu0 0.0
    %2399 = vmatprep.subr.mxu0 0.0
    %2400 = vmatpush2.msra.mxu0 0.0
    %2401 = vmatprep.subr.mxu0 0.0
    %2402 = vmatpush2.msra.mxu0 0.0
    %2403 = vmatprep.subr.mxu0 0.0
    %2404 = vmatpush2.msra.mxu0 0.0
    %2405 = vmatprep.subr.mxu0 0.0
    %2406 = vmatpush2.msra.mxu0 0.0
    %2407 = vmatprep.subr.mxu0 0.0
    %2408 = vmatpush2.msra.mxu0 0.0
    %2409 = vmatprep.mubr.f32.mxu0 0.0
    %2410 = vmatmul.mubr.f32.gmra.mxu0 %v2343
    %v2411 = vpop.f32.mrf.mxu0
    %v2412 = vadd.f32 0.0, %v2411
    %v2413 = vpop.f32.mrf.mxu0
    %2414 = vdwg.mxu0
    %v2416 = vrot.slane %v2412, 1
    %v2417 = vrot.slane %v2412, 2
    %v2420 = vadd.f32 %v1502, %v2416
    %v2421 = vadd.f32 %v1507, %v2417
    %v2422 = vmul.f32 %v2420, 0.5
    %v2423 = vmul.f32 %v2421, 0.5
    %v2426 = vrot.slane %v2420, 7
    %v2427 = vrot.slane %v2421, 6
    %v2428 = vsel %vm287, %v2427, %v2426
    %v2432 = vrot.slane %v2422, 7
    %v2433 = vrot.slane %v2423, 6
    %v2434 = vsel %vm287, %v2433, %v2432
    %v2436 = vsel %vm102, %v2428, %v2434
    %v2437 = vtanh.pop %v2436
    %v2438 = vadd.f32 %v2437, 1.0
    %v2439 = vmul.f32 %v2438, 0.5
    %v2440 = vsel %vm102, %v2437, %v2439
    %v2441 = vmul.f32 %v2440, %v2333
    %2443 = vrot.lane.b32.xlu0 %v2440, 64
    %v2444 = vpop.permute.xlu0 %2443
    %v2446 = vmul.f32 %v2440, %v2444
    %2448 = vrot.lane.b32.xlu0 %v2446, 32
    %v2449 = vpop.permute.xlu0 %2448
    %v2451 = vadd.f32 %v2441, %v2449
    %v2452 = vtanh.pop %v2451
    %2454 = vrot.lane.b32.xlu0 %v2452, 64
    %v2455 = vpop.permute.xlu0 %2454
    %v2457 = vmul.f32 %v2440, %v2455
    %v2459 = vunpack.c.l.s4 1966171168
    %v2460 = vunpack.c.0.s8 %v2459
    %v2461 = vlaneseq
    %v2462 = vshrl.u32 %v2461, 7
    %v2463 = vsub.s32 %v2460, %v2462
    %v2464 = vrot.slane %v1634, %v2463
    %v2465 = vcombine.high %v2464, %v2464
    %v2467 = vunpack.c.l.s4 1966171168
    %v2468 = vunpack.c.0.s8 %v2467
    %v2469 = vlaneseq
    %v2470 = vshrl.u32 %v2469, 7
    %v2471 = vsub.s32 %v2468, %v2470
    %v2472 = vrot.slane %v2464, %v2471
    %v2474 = vunpack.c.l.s4 1966171168
    %v2475 = vunpack.c.0.s8 %v2474
    %v2476 = vlaneseq
    %v2477 = vshrl.u32 %v2476, 7
    %v2478 = vsub.s32 %v2475, %v2477
    %v2479 = vrot.slane %v2465, %v2478
    %v2483 = vunpack.c.l.s4 1966171168
    %v2484 = vunpack.c.0.s8 %v2483
    %v2485 = vlaneseq
    %v2486 = vshrl.u32 %v2485, 7
    %v2487 = vsub.s32 %v2484, %v2486
    %v2488 = vrot.slane %v1749, %v2487
    %v2489 = vcombine.high %v2488, %v2488
    %v2491 = vunpack.c.l.s4 1966171168
    %v2492 = vunpack.c.0.s8 %v2491
    %v2493 = vlaneseq
    %v2494 = vshrl.u32 %v2493, 7
    %v2495 = vsub.s32 %v2492, %v2494
    %v2496 = vrot.slane %v2488, %v2495
    %v2498 = vunpack.c.l.s4 1966171168
    %v2499 = vunpack.c.0.s8 %v2498
    %v2500 = vlaneseq
    %v2501 = vshrl.u32 %v2500, 7
    %v2502 = vsub.s32 %v2499, %v2501
    %v2503 = vrot.slane %v2489, %v2502
    %v2505 = vunpack.c.l.s4 1966171168
    %v2506 = vunpack.c.0.s8 %v2505
    %v2507 = vlaneseq
    %v2508 = vshrl.u32 %v2507, 7
    %v2509 = vsub.s32 %v2506, %v2508
    %v2510 = vrot.slane %v1867, %v2509
    %v2511 = vcombine.high %v2510, %v2510
    %v2513 = vunpack.c.l.s4 1966171168
    %v2514 = vunpack.c.0.s8 %v2513
    %v2515 = vlaneseq
    %v2516 = vshrl.u32 %v2515, 7
    %v2517 = vsub.s32 %v2514, %v2516
    %v2518 = vrot.slane %v2510, %v2517
    %v2520 = vunpack.c.l.s4 1966171168
    %v2521 = vunpack.c.0.s8 %v2520
    %v2522 = vlaneseq
    %v2523 = vshrl.u32 %v2522, 7
    %v2524 = vsub.s32 %v2521, %v2523
    %v2525 = vrot.slane %v2511, %v2524
    %v2527 = vunpack.c.l.s4 1966171168
    %v2528 = vunpack.c.0.s8 %v2527
    %v2529 = vlaneseq
    %v2530 = vshrl.u32 %v2529, 7
    %v2531 = vsub.s32 %v2528, %v2530
    %v2532 = vrot.slane %v1985, %v2531
    %v2533 = vcombine.high %v2532, %v2532
    %v2535 = vunpack.c.l.s4 1966171168
    %v2536 = vunpack.c.0.s8 %v2535
    %v2537 = vlaneseq
    %v2538 = vshrl.u32 %v2537, 7
    %v2539 = vsub.s32 %v2536, %v2538
    %v2540 = vrot.slane %v2532, %v2539
    %v2542 = vunpack.c.l.s4 1966171168
    %v2543 = vunpack.c.0.s8 %v2542
    %v2544 = vlaneseq
    %v2545 = vshrl.u32 %v2544, 7
    %v2546 = vsub.s32 %v2543, %v2545
    %v2547 = vrot.slane %v2533, %v2546
    %v2549 = vunpack.c.l.s4 1966171168
    %v2550 = vunpack.c.0.s8 %v2549
    %v2551 = vlaneseq
    %v2552 = vshrl.u32 %v2551, 7
    %v2553 = vsub.s32 %v2550, %v2552
    %v2554 = vrot.slane %v2103, %v2553
    %v2555 = vcombine.high %v2554, %v2554
    %v2557 = vunpack.c.l.s4 1966171168
    %v2558 = vunpack.c.0.s8 %v2557
    %v2559 = vlaneseq
    %v2560 = vshrl.u32 %v2559, 7
    %v2561 = vsub.s32 %v2558, %v2560
    %v2562 = vrot.slane %v2554, %v2561
    %v2564 = vunpack.c.l.s4 1966171168
    %v2565 = vunpack.c.0.s8 %v2564
    %v2566 = vlaneseq
    %v2567 = vshrl.u32 %v2566, 7
    %v2568 = vsub.s32 %v2565, %v2567
    %v2569 = vrot.slane %v2555, %v2568
    %v2571 = vunpack.c.l.s4 1966171168
    %v2572 = vunpack.c.0.s8 %v2571
    %v2573 = vlaneseq
    %v2574 = vshrl.u32 %v2573, 7
    %v2575 = vsub.s32 %v2572, %v2574
    %v2576 = vrot.slane %v2221, %v2575
    %v2577 = vcombine.high %v2576, %v2576
    %v2579 = vunpack.c.l.s4 1966171168
    %v2580 = vunpack.c.0.s8 %v2579
    %v2581 = vlaneseq
    %v2582 = vshrl.u32 %v2581, 7
    %v2583 = vsub.s32 %v2580, %v2582
    %v2584 = vrot.slane %v2576, %v2583
    %v2586 = vunpack.c.l.s4 1966171168
    %v2587 = vunpack.c.0.s8 %v2586
    %v2588 = vlaneseq
    %v2589 = vshrl.u32 %v2588, 7
    %v2590 = vsub.s32 %v2587, %v2589
    %v2591 = vrot.slane %v2577, %v2590
    %v2593 = vunpack.c.l.s4 1966171168
    %v2594 = vunpack.c.0.s8 %v2593
    %v2595 = vlaneseq
    %v2596 = vshrl.u32 %v2595, 7
    %v2597 = vsub.s32 %v2594, %v2596
    %v2598 = vrot.slane %v2339, %v2597
    %v2599 = vcombine.high %v2598, %v2598
    %v2601 = vunpack.c.l.s4 1966171168
    %v2602 = vunpack.c.0.s8 %v2601
    %v2603 = vlaneseq
    %v2604 = vshrl.u32 %v2603, 7
    %v2605 = vsub.s32 %v2602, %v2604
    %v2606 = vrot.slane %v2598, %v2605
    %v2608 = vunpack.c.l.s4 1966171168
    %v2609 = vunpack.c.0.s8 %v2608
    %v2610 = vlaneseq
    %v2611 = vshrl.u32 %v2610, 7
    %v2612 = vsub.s32 %v2609, %v2611
    %v2613 = vrot.slane %v2599, %v2612
    %v2616 = vunpack.c.l.s4 1966171168
    %v2617 = vunpack.c.0.s8 %v2616
    %v2618 = vlaneseq
    %v2619 = vshrl.u32 %v2618, 7
    %v2620 = vsub.s32 %v2617, %v2619
    %v2621 = vrot.slane %v2457, %v2620
    %v2622 = vcombine.high %v2621, %v2621
    %v2624 = vunpack.c.l.s4 1966171168
    %v2625 = vunpack.c.0.s8 %v2624
    %v2626 = vlaneseq
    %v2627 = vshrl.u32 %v2626, 7
    %v2628 = vsub.s32 %v2625, %v2627
    %v2629 = vrot.slane %v2621, %v2628
    %v2631 = vunpack.c.l.s4 1966171168
    %v2632 = vunpack.c.0.s8 %v2631
    %v2633 = vlaneseq
    %v2634 = vshrl.u32 %v2633, 7
    %v2635 = vsub.s32 %v2632, %v2634
    %v2636 = vrot.slane %v2622, %v2635
    %v2637 = vlaneseq
    %v2638 = vshrl.u32 %v2637, 7
    %v2639 = vsub.s32 0, %v2638
    %v2640 = vrot.slane %v2496, %v2639
    %v2641 = vlaneseq
    %v2642 = vshrl.u32 %v2641, 7
    %v2643 = vsub.s32 0, %v2642
    %v2644 = vrot.slane %v2503, %v2643
    %v2647 = vlaneseq
    %v2648 = vshrl.u32 %v2647, 7
    %v2649 = vsub.s32 0, %v2648
    %v2650 = vrot.slane %v2518, %v2649
    %v2651 = vlaneseq
    %v2652 = vshrl.u32 %v2651, 7
    %v2653 = vsub.s32 0, %v2652
    %v2654 = vrot.slane %v2525, %v2653
    %v2657 = vlaneseq
    %v2658 = vshrl.u32 %v2657, 7
    %v2659 = vsub.s32 0, %v2658
    %v2660 = vrot.slane %v2540, %v2659
    %v2661 = vlaneseq
    %v2662 = vshrl.u32 %v2661, 7
    %v2663 = vsub.s32 0, %v2662
    %v2664 = vrot.slane %v2547, %v2663
    %v2667 = vlaneseq
    %v2668 = vshrl.u32 %v2667, 7
    %v2669 = vsub.s32 0, %v2668
    %v2670 = vrot.slane %v2562, %v2669
    %v2671 = vlaneseq
    %v2672 = vshrl.u32 %v2671, 7
    %v2673 = vsub.s32 0, %v2672
    %v2674 = vrot.slane %v2569, %v2673
    %v2677 = vlaneseq
    %v2678 = vshrl.u32 %v2677, 7
    %v2679 = vsub.s32 0, %v2678
    %v2680 = vrot.slane %v2584, %v2679
    %v2681 = vlaneseq
    %v2682 = vshrl.u32 %v2681, 7
    %v2683 = vsub.s32 0, %v2682
    %v2684 = vrot.slane %v2591, %v2683
    %v2687 = vlaneseq
    %v2688 = vshrl.u32 %v2687, 7
    %v2689 = vsub.s32 0, %v2688
    %v2690 = vrot.slane %v2606, %v2689
    %v2691 = vlaneseq
    %v2692 = vshrl.u32 %v2691, 7
    %v2693 = vsub.s32 0, %v2692
    %v2694 = vrot.slane %v2613, %v2693
    %v2697 = vlaneseq
    %v2698 = vshrl.u32 %v2697, 7
    %v2699 = vsub.s32 0, %v2698
    %v2700 = vrot.slane %v2629, %v2699
    %v2701 = vlaneseq
    %v2702 = vshrl.u32 %v2701, 7
    %v2703 = vsub.s32 0, %v2702
    %v2704 = vrot.slane %v2636, %v2703
    %v2707 = vsel %vm1393, %v2472, %v2640
    %v2708 = vsel %vm1393, %v2479, %v2644
    %v2709 = vsel %vm1396, %v2707, %v2650
    %v2710 = vsel %vm1396, %v2708, %v2654
    %v2711 = vsel %vm1399, %v2709, %v2660
    %v2712 = vsel %vm1399, %v2710, %v2664
    %v2713 = vsel %vm1402, %v2711, %v2670
    %v2714 = vsel %vm1402, %v2712, %v2674
    %v2715 = vsel %vm1405, %v2713, %v2680
    %v2716 = vsel %vm1405, %v2714, %v2684
    %v2717 = vsel %vm1408, %v2715, %v2690
    %v2718 = vsel %vm1408, %v2716, %v2694
    %v2719 = vsel %vm1411, %v2717, %v2700
    %v2720 = vsel %vm1411, %v2718, %v2704
    %v2721 = vld [vmem:[%s7] sm:$0xff]
    %v2722 = vld [vmem:[%s7 + $0x8] sm:$0xff]
    %v2723 = vld [vmem:[%s7 + $0x10] sm:$0xff]
    %v2724 = vld [vmem:[%s7 + $0x18] sm:$0xff]
    %v2725 = vld [vmem:[%s8] sm:$0x1]
    %v2727 = vlaneseq
    %v2728 = vshrl.u32 %v2727, 7
    %v2729 = vsub.s32 0, %v2728
    %v2730 = vrot.slane %v2725, %v2729
    %2734 = vrot.lane.b32.xlu0 %v2719, 32
    %v2735 = vpop.permute.xlu0 %2734
    %2736 = vrot.lane.b32.xlu0 %v2720, 32
    %v2737 = vpop.permute.xlu0 %2736
    %v2738 = vsel %vm202, %v2735, 0
    %v2740 = vsel %vm202, %v2737, 0
    %2742 = vmatprep.subr.mxu0 0.0
    %2743 = vmatpush1.msra.mxu0 0.0
    %2744 = vmatprep.subr.mxu0 0.0
    %2745 = vmatpush1.msra.mxu0 0.0
    %2746 = vmatprep.subr.mxu0 0.0
    %2747 = vmatpush1.msra.mxu0 0.0
    %2748 = vmatprep.subr.mxu0 0.0
    %2749 = vmatpush1.msra.mxu0 0.0
    %2750 = vmatprep.subr.mxu0 0.0
    %2751 = vmatpush1.msra.mxu0 0.0
    %2752 = vmatprep.subr.mxu0 0.0
    %2753 = vmatpush1.msra.mxu0 0.0
    %2754 = vmatprep.subr.mxu0 0.0
    %2755 = vmatpush1.msra.mxu0 0.0
    %2756 = vmatprep.subr.mxu0 0.0
    %2757 = vmatpush1.msra.mxu0 0.0
    %2758 = vmatprep.subr.mxu0 0.0
    %2759 = vmatpush1.msra.mxu0 0.0
    %2760 = vmatprep.subr.mxu0 0.0
    %2761 = vmatpush1.msra.mxu0 0.0
    %2762 = vmatprep.subr.mxu0 0.0
    %2763 = vmatpush1.msra.mxu0 0.0
    %2764 = vmatprep.subr.mxu0 0.0
    %2765 = vmatpush1.msra.mxu0 0.0
    %2766 = vmatprep.subr.mxu0 0.0
    %2767 = vmatpush1.msra.mxu0 %v2724
    %2768 = vmatprep.subr.mxu0 0.0
    %2769 = vmatpush1.msra.mxu0 %v2723
    %2770 = vmatprep.subr.mxu0 0.0
    %2771 = vmatpush1.msra.mxu0 %v2722
    %2772 = vmatprep.subr.mxu0 0.0
    %2773 = vmatpush1.msra.mxu0 %v2721
    %2774 = vmatprep.subr.mxu0 0.0
    %2775 = vmatpush2.msra.mxu0 0.0
    %2776 = vmatprep.subr.mxu0 0.0
    %2777 = vmatpush2.msra.mxu0 0.0
    %2778 = vmatprep.subr.mxu0 0.0
    %2779 = vmatpush2.msra.mxu0 0.0
    %2780 = vmatprep.subr.mxu0 0.0
    %2781 = vmatpush2.msra.mxu0 0.0
    %2782 = vmatprep.subr.mxu0 0.0
    %2783 = vmatpush2.msra.mxu0 0.0
    %2784 = vmatprep.subr.mxu0 0.0
    %2785 = vmatpush2.msra.mxu0 0.0
    %2786 = vmatprep.subr.mxu0 0.0
    %2787 = vmatpush2.msra.mxu0 0.0
    %2788 = vmatprep.subr.mxu0 0.0
    %2789 = vmatpush2.msra.mxu0 0.0
    %2790 = vmatprep.subr.mxu0 0.0
    %2791 = vmatpush2.msra.mxu0 0.0
    %2792 = vmatprep.subr.mxu0 0.0
    %2793 = vmatpush2.msra.mxu0 0.0
    %2794 = vmatprep.subr.mxu0 0.0
    %2795 = vmatpush2.msra.mxu0 0.0
    %2796 = vmatprep.subr.mxu0 0.0
    %2797 = vmatpush2.msra.mxu0 0.0
    %2798 = vmatprep.subr.mxu0 0.0
    %2799 = vmatpush2.msra.mxu0 0.0
    %2800 = vmatprep.subr.mxu0 0.0
    %2801 = vmatpush2.msra.mxu0 0.0
    %2802 = vmatprep.subr.mxu0 0.0
    %2803 = vmatpush2.msra.mxu0 0.0
    %2804 = vmatprep.subr.mxu0 0.0
    %2805 = vmatpush2.msra.mxu0 0.0
    %2806 = vmatprep.mubr.f32.mxu0 0.0
    %2807 = vmatmul.mubr.f32.gmra.mxu0 %v2738
    %v2808 = vpop.f32.mrf.mxu0
    %v2809 = vadd.f32 %v2730, %v2808
    %v2810 = vpop.f32.mrf.mxu0
    %2811 = vmatprep.mubr.f32.mxu0 0.0
    %2812 = vmatmul.mubr.f32.gmra.mxu0 %v2740
    %v2813 = vpop.f32.mrf.mxu0
    %v2814 = vadd.f32 %v2730, %v2813
    %v2815 = vpop.f32.mrf.mxu0
    %2816 = vdwg.mxu0
    %vm2817 = vcmask 64512
    %2818 = vst.msk [vmem:[%s11] sm:$0xff] %vm2817, %v2809
    %2819 = vst.msk [vmem:[%s11 + $0x8] sm:$0xff] %vm2817, %v2814
    %2820 = vrot.lane.b32.xlu0 %v1143, 32
    %v2821 = vpop.permute.xlu0 %2820
    %vm2823 = vcmask 254976
    %2824 = vst.msk [vmem:[#allocation10] sm:$0x3] %vm2823, %v2821
    %2826 = vrot.lane.b32.xlu0 %v1137, 96
    %v2827 = vpop.permute.xlu0 %2826
    %2829 = vst.msk [vmem:[#allocation11] sm:$0x3] %vm2823, %v2827
    %2830 = vrot.lane.b32.xlu0 %v2457, 32
    %v2831 = vpop.permute.xlu0 %2830
    %s2833 = scalar_lea.vmem [#allocation10], 2
    %2834 = vst.msk [vmem:[%s2833] sm:$0x3] %vm2823, %v2831
    %2836 = vrot.lane.b32.xlu0 %v2451, 96
    %v2837 = vpop.permute.xlu0 %2836
    %s2839 = scalar_lea.vmem [#allocation11], 2
    %2840 = vst.msk [vmem:[%s2839] sm:$0x3] %vm2823, %v2837
    // Predicated region
    $region62: #{tpu_custom_call.1} parent=1 // pred_check
      _
    $region63: #{tpu_custom_call.1} parent=1 // pred_check_branch
      %2842 = sbr.rel (0) target = $region65
    $region64: #{tpu_custom_call.1} parent=1 // pred_region
      _
    $region65: #{tpu_custom_call.1} parent=1 // pred_fallthru
      _
    // Predicated region
    $region66: #{tpu_custom_call.1} parent=1 // pred_check
      _
    $region67: #{tpu_custom_call.1} parent=1 // pred_check_branch
      %2844 = sbr.rel (0) target = $region69
    $region68: #{tpu_custom_call.1} parent=1 // pred_region
      %s2846 = ssub.s32 64, 64
      %2847 = vsyncadd [#allocation4], %s2846
      %s2848 = sshll.u32 [#allocation10], 4
      %s2849 = int_to_ptr.vmem [resolvable:$true] %s2848
      %2854 = dma.vmem_to_hbm [thread:$0]  %s2849, 64, %s12, [#allocation4], 32, 32, 2
    $region69: #{tpu_custom_call.1} parent=1 // pred_fallthru
      _
    // Predicated region
    $region70: #{tpu_custom_call.1} parent=1 // pred_check
      _
    $region71: #{tpu_custom_call.1} parent=1 // pred_check_branch
      %2856 = sbr.rel (0) target = $region73
    $region72: #{tpu_custom_call.1} parent=1 // pred_region
      %s2858 = ssub.s32 64, 64
      %2859 = vsyncadd [#allocation12], %s2858
      %s2860 = sshll.u32 [#allocation11], 4
      %s2861 = int_to_ptr.vmem [resolvable:$true] %s2860
      %2866 = dma.vmem_to_hbm [thread:$0]  %s2861, 64, %s13, [#allocation12], 32, 32, 2
    $region73: #{tpu_custom_call.1} parent=1 // pred_fallthru
      _
    // Predicated region
    $region74: #{tpu_custom_call.1} parent=1 // pred_check
      _
    $region75: #{tpu_custom_call.1} parent=1 // pred_check_branch
      %2868 = sbr.rel (0) target = $region77
    $region76: #{tpu_custom_call.1} parent=1 // pred_region
      _
    $region77: #{tpu_custom_call.1} parent=1 // pred_fallthru
      _
    // Predicated region
    $region78: #{tpu_custom_call.1} parent=1 // pred_check
      _
    $region79: #{tpu_custom_call.1} parent=1 // pred_check_branch
      %2870 = sbr.rel (0) target = $region81
    $region80: #{tpu_custom_call.1} parent=1 // pred_region
      %2871 = dma.done [#allocation4], 64
    $region81: #{tpu_custom_call.1} parent=1 // pred_fallthru
      _
    // Predicated region
    $region82: #{tpu_custom_call.1} parent=1 // pred_check
      _
    $region83: #{tpu_custom_call.1} parent=1 // pred_check_branch
      %2873 = sbr.rel (0) target = $region85
    $region84: #{tpu_custom_call.1} parent=1 // pred_region
      %2874 = dma.done [#allocation12], 64
    $region85: #{tpu_custom_call.1} parent=1 // pred_fallthru
      _
    %2875 = vsyncpa [#allocation3], 1
    %2876 = vsyncpa [#allocation6], 1
    %2877 = vsyncpa [#allocation9], 1
    %2878 = vsyncpa [#allocation4], 1
    %2879 = vsyncpa [#allocation12], 1

</llo_original>
